<compile_context>
chip_gen: v5e
topology: v5e:2x2
jax: 0.10.0
libtpu: 0.0.40
codegen_flags: <defaults>
</compile_context>

<pallas_src>
import functools

import jax
import jax.numpy as jnp
from jax.experimental import pallas as pl
from jax.experimental.pallas import tpu as pltpu

_CHUNK = 128  # lane width of one bilinear chunk (one vreg lane group)


def _round_up(x, m):
    return ((x + m - 1) // m) * m


def _tensor_network_kernel(e12_ref, wr_ref, sel_ref, wbb_ref, out_ref, *,
                           n_chunks, chunk):
    e12 = e12_ref[...]                                            # (TB, Kp)
    # Fused block term + bias: wbb rows are [Wblock^T ; bias ; 0] and e12 rows
    # carry a trailing ones column, so a single MXU dot does block + bias.
    acc = jnp.dot(e12, wbb_ref[...], preferred_element_type=jnp.float32)
    # Chunked bilinear pipeline: per-chunk live intermediate is only
    # (TB, 2*chunk) f32 -- no full-width (TB, F*T) value ever exists.
    for c in range(n_chunks):
        mr = jnp.dot(e12, wr_ref[:, pl.ds(2 * c * chunk, 2 * chunk)],
                     preferred_element_type=jnp.float32)          # (TB, 2*chunk)
        prod = mr[:, :chunk] * mr[:, chunk:]                      # f32 VPU mul
        acc = acc + jnp.dot(prod, sel_ref[pl.ds(c * chunk, chunk), :],
                            preferred_element_type=jnp.float32)
    out_ref[...] = jnp.maximum(acc, 0.0).astype(out_ref.dtype)


def _build_operands(weight_matrix, weight_matrix_block, bias, *, k_pad, ft_pad,
                    tn_pad, param_dtype):
    """Wrapper-side (free) parameter relayouts."""
    f3, _, tn = weight_matrix.shape
    ft = f3 * tn
    n_chunks = ft_pad // _CHUNK

    # w2d[i, j*T + t] = W[i, j, t]; rows >= F (incl. the ones row) are zero.
    w2d = jnp.zeros((k_pad, ft_pad), jnp.float32)
    w2d = w2d.at[:f3, :ft].set(weight_matrix.astype(jnp.float32).reshape(f3, ft))
    # rexp[F + j, j*T + t] = 1  ->  (e12a @ rexp)[b, j*T + t] = e2[b, j]
    rexp = jnp.zeros((k_pad, ft_pad), jnp.float32)
    rexp = rexp.at[f3:2 * f3, :ft].set(
        jnp.repeat(jnp.eye(f3, dtype=jnp.float32), tn, axis=1))
    # Interleave the W columns and the expansion columns per 128-lane chunk so
    # stage 1 is a single resident RHS (one MXU weight-push per chunk).
    wr = jnp.concatenate(
        [w2d.reshape(k_pad, n_chunks, _CHUNK),
         rexp.reshape(k_pad, n_chunks, _CHUNK)], axis=2,
    ).reshape(k_pad, 2 * ft_pad)
    # sel[j*T + t', t] = delta(t', t): folds the j-sum of the chunk products
    # onto the T output lanes.  Kept f32 (0/1 exact, tiny) so the VPU product
    # and the accumulation stay f32 on every chip generation.
    sel = jnp.zeros((ft_pad, tn_pad), jnp.float32)
    sel = sel.at[:ft, :tn].set(jnp.tile(jnp.eye(tn, dtype=jnp.float32), (f3, 1)))
    # wbb rows: [Wblock^T ; bias ; 0] -- pairs with the ones column of e12a.
    wbb = jnp.zeros((k_pad, tn_pad), jnp.float32)
    wbb = wbb.at[:2 * f3, :tn].set(weight_matrix_block.T.astype(jnp.float32))
    wbb = wbb.at[2 * f3, :tn].set(bias.reshape(tn).astype(jnp.float32))
    return wr.astype(param_dtype), sel, wbb.astype(param_dtype)


def tensor_network_forward_batched(embedding_1, embedding_2, weight_matrix,
                                   weight_matrix_block, bias, *,
                                   block_b=512, param_dtype=jnp.float32):
    """Batched NTN forward: embedding_1/2 (B, F) rows -> (B, T) relu scores."""
    b, f3 = embedding_1.shape
    _, _, tn = weight_matrix.shape
    ft_pad = _round_up(f3 * tn, _CHUNK)
    tn_pad = _round_up(tn, 128)                # lane-dense output (unmasked vst)
    k_pad = _round_up(2 * f3 + 1, 128)         # [e1 | e2 | 1 | 0...] row width
    n_chunks = ft_pad // _CHUNK

    min_rows = 16 if param_dtype == jnp.bfloat16 else 8
    assert block_b % min_rows == 0, "batch tile must match the sublane tile"

    wr, sel, wbb = _build_operands(weight_matrix, weight_matrix_block, bias,
                                   k_pad=k_pad, ft_pad=ft_pad, tn_pad=tn_pad,
                                   param_dtype=param_dtype)

    # Single embedding input [e1 | e2 | 1 | 0...]: one DMA per tile; the ones
    # column turns the bias add into part of the block-term matmul.
    e12 = jnp.concatenate([embedding_1, embedding_2,
                           jnp.ones((b, 1), embedding_1.dtype)], axis=1)
    b_pad = _round_up(max(b, block_b), block_b)
    e12a = jnp.pad(e12, ((0, b_pad - b), (0, k_pad - (2 * f3 + 1))))
    e12a = e12a.astype(param_dtype)

    grid = (b_pad // block_b,)
    p_bytes = jnp.dtype(param_dtype).itemsize
    flops = b_pad * (2 * k_pad * tn_pad + 2 * k_pad * 2 * ft_pad
                     + ft_pad + 2 * ft_pad * tn_pad)
    bytes_accessed = (b_pad * k_pad * p_bytes
                      + k_pad * 2 * ft_pad * p_bytes
                      + ft_pad * tn_pad * 4
                      + k_pad * tn_pad * p_bytes
                      + b_pad * tn_pad * 4)

    kernel = functools.partial(_tensor_network_kernel,
                               n_chunks=n_chunks, chunk=_CHUNK)
    out = pl.pallas_call(
        kernel,
        out_shape=jax.ShapeDtypeStruct((b_pad, tn_pad), jnp.float32),
        grid=grid,
        in_specs=[
            pl.BlockSpec((block_b, k_pad), lambda i: (i, 0)),     # embeddings
            # Resident parameters (constant index_maps -> DMA'd once, ~1.5 MiB
            # at f32; pl.Buffered(1) would halve their buffering but is omitted
            # for portability since total VMEM use is already tiny).
            pl.BlockSpec((k_pad, 2 * ft_pad), lambda i: (0, 0)),  # WR (stage 1)
            pl.BlockSpec((ft_pad, tn_pad), lambda i: (0, 0)),     # SEL (stage 2)
            pl.BlockSpec((k_pad, tn_pad), lambda i: (0, 0)),      # Wblock^T+bias
        ],
        out_specs=pl.BlockSpec((block_b, tn_pad), lambda i: (i, 0)),
        compiler_params=pltpu.CompilerParams(
            dimension_semantics=("parallel",)),
        cost_estimate=pl.CostEstimate(flops=flops, transcendentals=0,
                                      bytes_accessed=bytes_accessed),
    )(e12a, wr, sel, wbb)
    return out[:b, :tn]


def tensor_network_forward(embedding_1, embedding_2, weight_matrix,
                           weight_matrix_block, bias):
    """PyTorch layout: embeddings (F, 1) columns; returns (T, 1) column.

    A single-pair launch is dispatch/DMA-overhead dominated; batch pairs
    through tensor_network_forward_batched for throughput."""
    f3 = embedding_1.shape[0]
    out = tensor_network_forward_batched(
        embedding_1.reshape(1, f3), embedding_2.reshape(1, f3),
        weight_matrix, weight_matrix_block, bias,
        block_b=8, param_dtype=jnp.float32)
    return out.T                                                    # (T, 1)


def tensor_network_reference(e1, e2, w, wb, b):
    """Pure-JAX transcription of the PyTorch forward (single pair)."""
    f3, _, tn = w.shape
    scoring = (e1.T @ w.reshape(f3, -1)).reshape(f3, tn)
    scoring = scoring.T @ e2
    combined = jnp.concatenate([e1, e2], axis=0)
    block = wb @ combined
    return jnp.maximum(scoring + block + b, 0.0)


def tensor_network_reference_batched(e1_b, e2_b, w, wb, b):
    """Pure-JAX batched reference: (B, F), (B, F) -> (B, T)."""
    hi = jax.lax.Precision.HIGHEST
    scoring = jnp.einsum('bi,ijt,bj->bt', e1_b, w, e2_b, precision=hi)
    block = jnp.einsum('tk,bk->bt', wb,
                       jnp.concatenate([e1_b, e2_b], axis=1), precision=hi)
    return jnp.maximum(scoring + block + b.reshape(1, -1), 0.0)


def _xavier_uniform(key, shape, fan_in, fan_out):
    bound = (6.0 / (fan_in + fan_out)) ** 0.5
    return jax.random.uniform(key, shape, jnp.float32, -bound, bound)


if __name__ == "__main__":
    F3 = 32     # args.filters_3
    TN = 16     # args.tensor_neurons
    B = 1024    # batch of graph pairs -> grid=(2,) at block_b=512 (even grid)

    key = jax.random.PRNGKey(0)
    k_w, k_wb, k_b, k_e1, k_e2 = jax.random.split(key, 5)

    # Deterministic xavier-uniform parameter init (shapes from setup_weights()).
    weight_matrix = _xavier_uniform(k_w, (F3, F3, TN), F3 * TN, F3 * TN)
    weight_matrix_block = _xavier_uniform(k_wb, (TN, 2 * F3), 2 * F3, TN)
    bias = _xavier_uniform(k_b, (TN, 1), 1, TN)

    # Batched embeddings (post-attention graph embeddings), row layout (B, F).
    e1_b = jax.random.normal(k_e1, (B, F3), jnp.float32)
    e2_b = jax.random.normal(k_e2, (B, F3), jnp.float32)

    # 1) Batched f32 path (exact verification).
    out_b = tensor_network_forward_batched(e1_b, e2_b, weight_matrix,
                                           weight_matrix_block, bias,
                                           block_b=512)
    out_b = jax.block_until_ready(out_b)
    ref_b = tensor_network_reference_batched(e1_b, e2_b, weight_matrix,
                                             weight_matrix_block, bias)
    assert out_b.shape == (B, TN)
    assert jnp.allclose(out_b, ref_b, atol=1e-4, rtol=1e-4)

    # 2) Batched bf16-parameter path (v6e/v7x fast path: halves DMA bytes,
    #    MXU-native rate).  Compared against the f32 reference evaluated on
    #    bf16-rounded inputs/params (f32 accumulation in both).
    out_bf = tensor_network_forward_batched(e1_b, e2_b, weight_matrix,
                                            weight_matrix_block, bias,
                                            block_b=512,
                                            param_dtype=jnp.bfloat16)
    out_bf = jax.block_until_ready(out_bf)
    r16 = lambda x: x.astype(jnp.bfloat16).astype(jnp.float32)
    ref_bf = tensor_network_reference_batched(r16(e1_b), r16(e2_b),
                                              r16(weight_matrix),
                                              r16(weight_matrix_block),
                                              r16(bias))
    assert jnp.allclose(out_bf, ref_bf, atol=1e-2, rtol=1e-2)

    # 3) Single-pair path matching the PyTorch module exactly: (F,1) -> (T,1).
    e1 = e1_b[0].reshape(F3, 1)
    e2 = e2_b[0].reshape(F3, 1)
    out1 = tensor_network_forward(e1, e2, weight_matrix,
                                  weight_matrix_block, bias)
    out1 = jax.block_until_ready(out1)
    ref1 = tensor_network_reference(e1, e2, weight_matrix,
                                    weight_matrix_block, bias)
    assert out1.shape == (TN, 1)
    assert jnp.allclose(out1, ref1, atol=1e-4, rtol=1e-4)

    print("KERNEL_OK")
</pallas_src>

<mosaic_0001>
module attributes {stable_mosaic.version = 11 : i64} {
  func.func @_tensor_network_kernel(%arg0: i32, %arg1: memref<512x128xf32, #tpu.memory_space<vmem>>, %arg2: memref<128x1024xf32, #tpu.memory_space<vmem>>, %arg3: memref<512x128xf32, #tpu.memory_space<vmem>>, %arg4: memref<128x128xf32, #tpu.memory_space<vmem>>, %arg5: memref<512x128xf32, #tpu.memory_space<vmem>>) attributes {dimension_semantics = [#tpu.dimension_semantics<parallel>], iteration_bounds = array<i64: 2>, scalar_prefetch = 0 : i64, scratch_operands = 0 : i64, tpu.core_type = #tpu.core_type<tc>, window_params = [{transform_indices = @transform_0, window_bounds = array<i64: 512, 128>}, {pipeline_mode = #tpu.pipeline_mode<synchronous>, transform_indices = @transform_1, window_bounds = array<i64: 128, 1024>}, {pipeline_mode = #tpu.pipeline_mode<synchronous>, transform_indices = @transform_2, window_bounds = array<i64: 512, 128>}, {pipeline_mode = #tpu.pipeline_mode<synchronous>, transform_indices = @transform_3, window_bounds = array<i64: 128, 128>}, {transform_indices = @transform_4, window_bounds = array<i64: 512, 128>}]} {
    %c0 = arith.constant 0 : index
    %c0_0 = arith.constant 0 : index
    %0 = vector.load %arg1[%c0, %c0_0] : memref<512x128xf32, #tpu.memory_space<vmem>>, vector<512x128xf32>
    %c0_1 = arith.constant 0 : index
    %c0_2 = arith.constant 0 : index
    %1 = vector.load %arg4[%c0_1, %c0_2] : memref<128x128xf32, #tpu.memory_space<vmem>>, vector<128x128xf32>
    %cst = arith.constant dense<0.000000e+00> : vector<512x128xf32>
    %2 = tpu.matmul %0, %1, %cst {dimension_numbers = #tpu.dot_dimension_numbers<[1], [0], [0], [1], [0, 0, 1, 1], [], []>} : vector<512x128xf32>, vector<128x128xf32>, vector<512x128xf32> -> vector<512x128xf32>
    %c0_3 = arith.constant 0 : index
    %c0_4 = arith.constant 0 : index
    %3 = vector.load %arg2[%c0_3, %c0_4] : memref<128x1024xf32, #tpu.memory_space<vmem>>, vector<128x256xf32>
    %cst_5 = arith.constant dense<0.000000e+00> : vector<512x256xf32>
    %4 = tpu.matmul %0, %3, %cst_5 {dimension_numbers = #tpu.dot_dimension_numbers<[1], [0], [0], [1], [0, 0, 1, 1], [], []>} : vector<512x128xf32>, vector<128x256xf32>, vector<512x256xf32> -> vector<512x256xf32>
    %5 = vector.extract_strided_slice %4 {offsets = [0, 0], sizes = [512, 128], strides = [1, 1]} : vector<512x256xf32> to vector<512x128xf32>
    %6 = vector.extract_strided_slice %4 {offsets = [0, 128], sizes = [512, 128], strides = [1, 1]} : vector<512x256xf32> to vector<512x128xf32>
    %7 = arith.mulf %5, %6 : vector<512x128xf32>
    %c0_6 = arith.constant 0 : index
    %c0_7 = arith.constant 0 : index
    %8 = vector.load %arg3[%c0_6, %c0_7] : memref<512x128xf32, #tpu.memory_space<vmem>>, vector<128x128xf32>
    %cst_8 = arith.constant dense<0.000000e+00> : vector<512x128xf32>
    %9 = tpu.matmul %7, %8, %cst_8 {dimension_numbers = #tpu.dot_dimension_numbers<[1], [0], [0], [1], [0, 0, 1, 1], [], []>} : vector<512x128xf32>, vector<128x128xf32>, vector<512x128xf32> -> vector<512x128xf32>
    %10 = arith.addf %2, %9 : vector<512x128xf32>
    %c0_9 = arith.constant 0 : index
    %c256 = arith.constant 256 : index
    %11 = vector.load %arg2[%c0_9, %c256] : memref<128x1024xf32, #tpu.memory_space<vmem>>, vector<128x256xf32>
    %cst_10 = arith.constant dense<0.000000e+00> : vector<512x256xf32>
    %12 = tpu.matmul %0, %11, %cst_10 {dimension_numbers = #tpu.dot_dimension_numbers<[1], [0], [0], [1], [0, 0, 1, 1], [], []>} : vector<512x128xf32>, vector<128x256xf32>, vector<512x256xf32> -> vector<512x256xf32>
    %13 = vector.extract_strided_slice %12 {offsets = [0, 0], sizes = [512, 128], strides = [1, 1]} : vector<512x256xf32> to vector<512x128xf32>
    %14 = vector.extract_strided_slice %12 {offsets = [0, 128], sizes = [512, 128], strides = [1, 1]} : vector<512x256xf32> to vector<512x128xf32>
    %15 = arith.mulf %13, %14 : vector<512x128xf32>
    %c128 = arith.constant 128 : index
    %c0_11 = arith.constant 0 : index
    %16 = vector.load %arg3[%c128, %c0_11] : memref<512x128xf32, #tpu.memory_space<vmem>>, vector<128x128xf32>
    %cst_12 = arith.constant dense<0.000000e+00> : vector<512x128xf32>
    %17 = tpu.matmul %15, %16, %cst_12 {dimension_numbers = #tpu.dot_dimension_numbers<[1], [0], [0], [1], [0, 0, 1, 1], [], []>} : vector<512x128xf32>, vector<128x128xf32>, vector<512x128xf32> -> vector<512x128xf32>
    %18 = arith.addf %10, %17 : vector<512x128xf32>
    %c0_13 = arith.constant 0 : index
    %c512 = arith.constant 512 : index
    %19 = vector.load %arg2[%c0_13, %c512] : memref<128x1024xf32, #tpu.memory_space<vmem>>, vector<128x256xf32>
    %cst_14 = arith.constant dense<0.000000e+00> : vector<512x256xf32>
    %20 = tpu.matmul %0, %19, %cst_14 {dimension_numbers = #tpu.dot_dimension_numbers<[1], [0], [0], [1], [0, 0, 1, 1], [], []>} : vector<512x128xf32>, vector<128x256xf32>, vector<512x256xf32> -> vector<512x256xf32>
    %21 = vector.extract_strided_slice %20 {offsets = [0, 0], sizes = [512, 128], strides = [1, 1]} : vector<512x256xf32> to vector<512x128xf32>
    %22 = vector.extract_strided_slice %20 {offsets = [0, 128], sizes = [512, 128], strides = [1, 1]} : vector<512x256xf32> to vector<512x128xf32>
    %23 = arith.mulf %21, %22 : vector<512x128xf32>
    %c256_15 = arith.constant 256 : index
    %c0_16 = arith.constant 0 : index
    %24 = vector.load %arg3[%c256_15, %c0_16] : memref<512x128xf32, #tpu.memory_space<vmem>>, vector<128x128xf32>
    %cst_17 = arith.constant dense<0.000000e+00> : vector<512x128xf32>
    %25 = tpu.matmul %23, %24, %cst_17 {dimension_numbers = #tpu.dot_dimension_numbers<[1], [0], [0], [1], [0, 0, 1, 1], [], []>} : vector<512x128xf32>, vector<128x128xf32>, vector<512x128xf32> -> vector<512x128xf32>
    %26 = arith.addf %18, %25 : vector<512x128xf32>
    %c0_18 = arith.constant 0 : index
    %c768 = arith.constant 768 : index
    %27 = vector.load %arg2[%c0_18, %c768] : memref<128x1024xf32, #tpu.memory_space<vmem>>, vector<128x256xf32>
    %cst_19 = arith.constant dense<0.000000e+00> : vector<512x256xf32>
    %28 = tpu.matmul %0, %27, %cst_19 {dimension_numbers = #tpu.dot_dimension_numbers<[1], [0], [0], [1], [0, 0, 1, 1], [], []>} : vector<512x128xf32>, vector<128x256xf32>, vector<512x256xf32> -> vector<512x256xf32>
    %29 = vector.extract_strided_slice %28 {offsets = [0, 0], sizes = [512, 128], strides = [1, 1]} : vector<512x256xf32> to vector<512x128xf32>
    %30 = vector.extract_strided_slice %28 {offsets = [0, 128], sizes = [512, 128], strides = [1, 1]} : vector<512x256xf32> to vector<512x128xf32>
    %31 = arith.mulf %29, %30 : vector<512x128xf32>
    %c384 = arith.constant 384 : index
    %c0_20 = arith.constant 0 : index
    %32 = vector.load %arg3[%c384, %c0_20] : memref<512x128xf32, #tpu.memory_space<vmem>>, vector<128x128xf32>
    %cst_21 = arith.constant dense<0.000000e+00> : vector<512x128xf32>
    %33 = tpu.matmul %31, %32, %cst_21 {dimension_numbers = #tpu.dot_dimension_numbers<[1], [0], [0], [1], [0, 0, 1, 1], [], []>} : vector<512x128xf32>, vector<128x128xf32>, vector<512x128xf32> -> vector<512x128xf32>
    %34 = arith.addf %26, %33 : vector<512x128xf32>
    %cst_22 = arith.constant 0.000000e+00 : f32
    %35 = vector.broadcast %cst_22 : f32 to vector<512x128xf32>
    %36 = arith.maximumf %34, %35 : vector<512x128xf32>
    %c0_23 = arith.constant 0 : index
    %c0_24 = arith.constant 0 : index
    %37 = vector.load %arg5[%c0_23, %c0_24] : memref<512x128xf32, #tpu.memory_space<vmem>>, vector<512x128xf32>
    tpu.vector_store %arg5[%c0_23, %c0_24], %36 {strides = array<i32>} : memref<512x128xf32, #tpu.memory_space<vmem>>, vector<512x128xf32>,
    return
  }
  func.func @transform_0(%arg0: i32) -> (i32, i32) {
    %c0_i32 = arith.constant 0 : i32
    %c0_i32_0 = arith.constant 0 : i32
    return %arg0, %c0_i32 : i32, i32
  }
  func.func @transform_1(%arg0: i32) -> (i32, i32) {
    %c0_i32 = arith.constant 0 : i32
    %c0_i32_0 = arith.constant 0 : i32
    %c0_i32_1 = arith.constant 0 : i32
    return %c0_i32, %c0_i32_0 : i32, i32
  }
  func.func @transform_2(%arg0: i32) -> (i32, i32) {
    %c0_i32 = arith.constant 0 : i32
    %c0_i32_0 = arith.constant 0 : i32
    %c0_i32_1 = arith.constant 0 : i32
    return %c0_i32, %c0_i32_0 : i32, i32
  }
  func.func @transform_3(%arg0: i32) -> (i32, i32) {
    %c0_i32 = arith.constant 0 : i32
    %c0_i32_0 = arith.constant 0 : i32
    %c0_i32_1 = arith.constant 0 : i32
    return %c0_i32, %c0_i32_0 : i32, i32
  }
  func.func @transform_4(%arg0: i32) -> (i32, i32) {
    %c0_i32 = arith.constant 0 : i32
    %c0_i32_0 = arith.constant 0 : i32
    return %arg0, %c0_i32 : i32, i32
  }
}

</mosaic_0001>

<llo_original>
// kernel: tpu_custom_call.1
$region0: #{tpu_custom_call.1}
  #allocation0 [shape = 'u32[]', space=smem, size = 0x4, offset = 0x4, fixed_abs, tag = 'smem constant byte address 0x4 - core index']
  #allocation1 [shape = 'u32[72,128]{1,0:T(1,128)}', space=vmem, size = 0x9000, scoped, tag = 'internal scratch']
  %s0 = inlined_call_operand.hbm [shape: f32[1024,128], index: 0, kind: input, shape index: {}]
  %s1 = inlined_call_operand.hbm [shape: f32[128,1024], index: 1, kind: input, shape index: {}]
  %s2 = inlined_call_operand.hbm [shape: f32[512,128], index: 2, kind: input, shape index: {}]
  %s3 = inlined_call_operand.hbm [shape: f32[128,128], index: 3, kind: input, shape index: {}]
  %s4 = inlined_call_operand.hbm [shape: f32[1024,128], index: 4, kind: output, shape index: {}]
  %s5 = sld [smem:[#allocation0]]
  $region65: #{tpu_custom_call.1} parent=0
    _
  %s7 = ssub.s32 1, %s5
  %s8 = scalar_select 0, %s7, %s5
  $region1: #{tpu_custom_call.1} parent=0
    #allocation2 [shape = 'u8[524288]{0}', space=vmem, size = 0x80000, scoped, tag = 'input window, operand 0']
    #allocation3 [shape = 's32[2]{0}', space=sflag, size = 0x8, scoped, tag = 'scoped memory for tpu_custom_call.1']
    #allocation4 [shape = 's32[2]{0}', space=sflag, size = 0x8, scoped, tag = 'scoped memory for tpu_custom_call.1']
    #allocation5 [shape = 'u8[524288]{0}', space=vmem, size = 0x80000, scoped, tag = 'input window, operand 1, single buffered']
    #allocation6 [shape = 's32[1]{0}', space=sflag, size = 0x4, scoped, tag = 'scoped memory for tpu_custom_call.1']
    #allocation7 [shape = 'u8[262144]{0}', space=vmem, size = 0x40000, scoped, tag = 'input window, operand 2, single buffered']
    #allocation8 [shape = 'u8[65536]{0}', space=vmem, size = 0x10000, scoped, tag = 'input window, operand 3, single buffered']
    #allocation9 [shape = 's32[1]{0}', space=sflag, size = 0x4, scoped, tag = 'scoped memory for tpu_custom_call.1']
    #allocation10 [shape = 'u8[524288]{0}', space=vmem, size = 0x80000, scoped, tag = 'output window, operand 0']
    %9 = vsyncpa [#allocation3], 0
    %s10 = scalar_lea.sflag [#allocation3], 1
    %11 = vsyncpa %s10, 0
    %12 = vsyncpa [#allocation6], 0
    %13 = vsyncpa [#allocation9], 0
    %14 = vsyncpa [#allocation4], 0
    %s15 = scalar_lea.sflag [#allocation4], 1
    %16 = vsyncpa %s15, 0
    loop: start=0, step=1, limit=4
    $region2: #{tpu_custom_call.1} parent=1 // loop_pre_header
      _
    $region3: #{tpu_custom_call.1} parent=1 // loop_header
      %s18 = sphi 0, %s22
      %p19 = scmp.ge.s32.totalorder %s18, 4
      %s28 = sphi 0, %s30
      %s31 = sphi 0, %s28
      %s32 = sphi 0, %s31
      %s48 = sphi 0, %s32
      %s52 = sphi 0, %s52
      %s54 = sphi 0, %s52
      %s55 = sphi 0, %s54
      %s69 = sphi 0, %s55
      %s73 = sphi 0, %s73
      %s75 = sphi 0, %s73
      %s76 = sphi 0, %s75
      %s90 = sphi 0, %s76
      %s94 = sphi 0, %s94
      %s96 = sphi 0, %s94
      %s97 = sphi 0, %s96
      %s111 = sphi 0, %s97
      %s117 = sphi 0, %s119
      %s120 = sphi 0, %s117
      %s121 = sphi 0, %s120
      %s137 = sphi 0, %s121
    $region4: #{tpu_custom_call.1} parent=1 // loop_header_branch
      %21 = sbr.rel (%p19) target = $region8
    $region5: #{tpu_custom_call.1} parent=1 // loop_body
      %s23 = ssub.s32 %s18, 1
      %s24 = ssub.s32 %s18, 2
      %s25 = sadd.s32 %s18, 1
      %s26 = ssub.s32 %s18, %s25
      %p27 = scmp.eq.s32.totalorder %s26, 0
      %s29 = sadd.s32 %s28, 1
      %s30 = scalar_select %p27, %s28, %s29
      %p33 = pneg %p27
      %p34 = scmp.eq.s32.totalorder %s18, 1
      %p35 = por %p33, %p34
      %p36 = scmp.ne.s32.totalorder %s28, %s31
      %p37 = scmp.eq.s32.totalorder %s18, 0
      %p38 = por %p36, %p37
      %p39 = scmp.ne.s32.totalorder %s28, %s31
      %p40 = scmp.eq.s32.totalorder %s23, 1
      %p41 = por %p39, %p40
      %p42 = scmp.ne.s32.totalorder %s31, %s32
      %p43 = scmp.eq.s32.totalorder %s23, 0
      %p44 = por %p42, %p43
      %p45 = scmp.ne.s32.totalorder %s31, %s32
      %p46 = scmp.eq.s32.totalorder %s24, 1
      %p47 = por %p45, %p46
      %p49 = scmp.ne.s32.totalorder %s32, %s48
      %p50 = scmp.eq.s32.totalorder %s24, 0
      %p51 = por %p49, %p50
      %s53 = sadd.s32 %s52, 1
      %p56 = scmp.eq.s32.totalorder %s18, 1
      %p57 = scmp.ne.s32.totalorder %s52, %s54
      %p58 = scmp.eq.s32.totalorder %s18, 0
      %p59 = por %p57, %p58
      %p60 = scmp.ne.s32.totalorder %s52, %s54
      %p61 = scmp.eq.s32.totalorder %s23, 1
      %p62 = por %p60, %p61
      %p63 = scmp.ne.s32.totalorder %s54, %s55
      %p64 = scmp.eq.s32.totalorder %s23, 0
      %p65 = por %p63, %p64
      %p66 = scmp.ne.s32.totalorder %s54, %s55
      %p67 = scmp.eq.s32.totalorder %s24, 1
      %p68 = por %p66, %p67
      %p70 = scmp.ne.s32.totalorder %s55, %s69
      %p71 = scmp.eq.s32.totalorder %s24, 0
      %p72 = por %p70, %p71
      %s74 = sadd.s32 %s73, 1
      %p77 = scmp.eq.s32.totalorder %s18, 1
      %p78 = scmp.ne.s32.totalorder %s73, %s75
      %p79 = scmp.eq.s32.totalorder %s18, 0
      %p80 = por %p78, %p79
      %p81 = scmp.ne.s32.totalorder %s73, %s75
      %p82 = scmp.eq.s32.totalorder %s23, 1
      %p83 = por %p81, %p82
      %p84 = scmp.ne.s32.totalorder %s75, %s76
      %p85 = scmp.eq.s32.totalorder %s23, 0
      %p86 = por %p84, %p85
      %p87 = scmp.ne.s32.totalorder %s75, %s76
      %p88 = scmp.eq.s32.totalorder %s24, 1
      %p89 = por %p87, %p88
      %p91 = scmp.ne.s32.totalorder %s76, %s90
      %p92 = scmp.eq.s32.totalorder %s24, 0
      %p93 = por %p91, %p92
      %s95 = sadd.s32 %s94, 1
      %p98 = scmp.eq.s32.totalorder %s18, 1
      %p99 = scmp.ne.s32.totalorder %s94, %s96
      %p100 = scmp.eq.s32.totalorder %s18, 0
      %p101 = por %p99, %p100
      %p102 = scmp.ne.s32.totalorder %s94, %s96
      %p103 = scmp.eq.s32.totalorder %s23, 1
      %p104 = por %p102, %p103
      %p105 = scmp.ne.s32.totalorder %s96, %s97
      %p106 = scmp.eq.s32.totalorder %s23, 0
      %p107 = por %p105, %p106
      %p108 = scmp.ne.s32.totalorder %s96, %s97
      %p109 = scmp.eq.s32.totalorder %s24, 1
      %p110 = por %p108, %p109
      %p112 = scmp.ne.s32.totalorder %s97, %s111
      %p113 = scmp.eq.s32.totalorder %s24, 0
      %p114 = por %p112, %p113
      %s115 = ssub.s32 %s18, %s25
      %p116 = scmp.eq.s32.totalorder %s115, 0
      %s118 = sadd.s32 %s117, 1
      %s119 = scalar_select %p116, %s117, %s118
      %p122 = pneg %p116
      %p123 = scmp.eq.s32.totalorder %s18, 1
      %p124 = por %p122, %p123
      %p125 = scmp.ne.s32.totalorder %s117, %s120
      %p126 = scmp.eq.s32.totalorder %s18, 0
      %p127 = por %p125, %p126
      %p128 = scmp.ne.s32.totalorder %s117, %s120
      %p129 = scmp.eq.s32.totalorder %s23, 1
      %p130 = por %p128, %p129
      %p131 = scmp.ne.s32.totalorder %s120, %s121
      %p132 = scmp.eq.s32.totalorder %s23, 0
      %p133 = por %p131, %p132
      %p134 = scmp.ne.s32.totalorder %s120, %s121
      %p135 = scmp.eq.s32.totalorder %s24, 1
      %p136 = por %p134, %p135
      %p138 = scmp.ne.s32.totalorder %s121, %s137
      %p139 = scmp.eq.s32.totalorder %s24, 0
      %p140 = por %p138, %p139
      %p141 = scmp.le.s32.totalorder 1, %s18
      %p142 = scmp.lt.s32.totalorder %s18, 3
      %p143 = pnand %p141, %p142
      %p144 = pneg %p143
      // Predicated region
      $region9: #{tpu_custom_call.1} parent=5 // pred_check
        _
      $region10: #{tpu_custom_call.1} parent=5 // pred_check_branch
        %146 = sbr.rel (%p143) target = $region12
      $region11: #{tpu_custom_call.1} parent=5 // pred_region
        %s147 = ssub.s32 %s18, 1
        // Predicated region
        $region13: #{tpu_custom_call.1} parent=11 // pred_check
          %p148 = pneg %p65
        $region14: #{tpu_custom_call.1} parent=11 // pred_check_branch
          %150 = sbr.rel (%p148) target = $region16
        $region15: #{tpu_custom_call.1} parent=11 // pred_region
          %152 = vsyncadd [#allocation6], 0
          %s153 = sshll.u32 %s1, 4
          %s154 = int_to_ptr.hbm [resolvable:$true] %s153
          %s155 = sshll.u32 [#allocation5], 4
          %s156 = int_to_ptr.vmem [resolvable:$true] %s155
          %161 = dma.hbm_to_vmem [thread:$0]  %s154, 16384, %s156, [#allocation6], 1024, 1024, 64
        $region16: #{tpu_custom_call.1} parent=11 // pred_fallthru
          _
        // Predicated region
        $region17: #{tpu_custom_call.1} parent=11 // pred_check
          %p162 = pneg %p86
        $region18: #{tpu_custom_call.1} parent=11 // pred_check_branch
          %164 = sbr.rel (%p162) target = $region20
        $region19: #{tpu_custom_call.1} parent=11 // pred_region
          %166 = vsyncadd [#allocation6], 0
          %s167 = sshll.u32 %s2, 4
          %s168 = int_to_ptr.hbm [resolvable:$true] %s167
          %s169 = sshll.u32 [#allocation7], 4
          %s170 = int_to_ptr.vmem [resolvable:$true] %s169
          %175 = dma.hbm_to_vmem [thread:$0]  %s168, 8192, %s170, [#allocation6], 128, 128, 8
        $region20: #{tpu_custom_call.1} parent=11 // pred_fallthru
          _
        // Predicated region
        $region21: #{tpu_custom_call.1} parent=11 // pred_check
          %p176 = pneg %p107
        $region22: #{tpu_custom_call.1} parent=11 // pred_check_branch
          %178 = sbr.rel (%p176) target = $region24
        $region23: #{tpu_custom_call.1} parent=11 // pred_region
          %180 = vsyncadd [#allocation9], 0
          %s181 = sshll.u32 %s3, 4
          %s182 = int_to_ptr.hbm [resolvable:$true] %s181
          %s183 = sshll.u32 [#allocation8], 4
          %s184 = int_to_ptr.vmem [resolvable:$true] %s183
          %189 = dma.hbm_to_vmem [thread:$0]  %s182, 2048, %s184, [#allocation9], 128, 128, 8
        $region24: #{tpu_custom_call.1} parent=11 // pred_fallthru
          _
      $region12: #{tpu_custom_call.1} parent=5 // pred_fallthru
        _
      %p190 = scmp.lt.s32.totalorder %s18, 2
      // Predicated region
      $region25: #{tpu_custom_call.1} parent=5 // pred_check
        %p191 = pneg %p190
      $region26: #{tpu_custom_call.1} parent=5 // pred_check_branch
        %193 = sbr.rel (%p191) target = $region28
      $region27: #{tpu_custom_call.1} parent=5 // pred_region
        // Predicated region
        $region29: #{tpu_custom_call.1} parent=27 // pred_check
          %p194 = pneg %p38
        $region30: #{tpu_custom_call.1} parent=27 // pred_check_branch
          %196 = sbr.rel (%p194) target = $region32
        $region31: #{tpu_custom_call.1} parent=27 // pred_region
          %s197 = sand.u32 %s28, 1
          %s198 = scalar_lea.sflag [#allocation3], %s197
          %s199 = sand.u32 %s28, 1
          %s200 = smul.addr %s199, 512
          %s201 = scalar_lea.vmem [#allocation2], %s200
          %s202 = smul.u32 64, %s18
          %204 = vsyncadd %s198, 0
          %s205 = smul.addr %s202, 8
          %s206 = scalar_lea.hbm %s0, %s205
          %s207 = sshll.u32 %s206, 4
          %s208 = int_to_ptr.hbm [resolvable:$true] %s207
          %s209 = sshll.u32 %s201, 4
          %s210 = int_to_ptr.vmem [resolvable:$true] %s209
          %215 = dma.hbm_to_vmem [thread:$0]  %s208, 8192, %s210, %s198, 128, 128, 8
        $region32: #{tpu_custom_call.1} parent=27 // pred_fallthru
          _
      $region28: #{tpu_custom_call.1} parent=5 // pred_fallthru
        _
      %p216 = scmp.le.s32.totalorder 1, %s18
      %p217 = scmp.lt.s32.totalorder %s18, 3
      %p218 = pnand %p216, %p217
      %p219 = pneg %p218
      // Predicated region
      $region33: #{tpu_custom_call.1} parent=5 // pred_check
        _
      $region34: #{tpu_custom_call.1} parent=5 // pred_check_branch
        %221 = sbr.rel (%p218) target = $region36
      $region35: #{tpu_custom_call.1} parent=5 // pred_region
        %s222 = ssub.s32 %s18, 1
        %s223 = sand.u32 %s31, 1
        %s224 = scalar_lea.sflag [#allocation3], %s223
        %s225 = sand.u32 %s31, 1
        %s226 = smul.addr %s225, 512
        %s227 = scalar_lea.vmem [#allocation2], %s226
        // Predicated region
        $region37: #{tpu_custom_call.1} parent=35 // pred_check
          %p228 = pneg %p44
        $region38: #{tpu_custom_call.1} parent=35 // pred_check_branch
          %230 = sbr.rel (%p228) target = $region40
        $region39: #{tpu_custom_call.1} parent=35 // pred_region
          %232 = dma.done %s224, 8192
        $region40: #{tpu_custom_call.1} parent=35 // pred_fallthru
          _
        // Predicated region
        $region41: #{tpu_custom_call.1} parent=35 // pred_check
          %p233 = pneg %p65
        $region42: #{tpu_custom_call.1} parent=35 // pred_check_branch
          %235 = sbr.rel (%p233) target = $region44
        $region43: #{tpu_custom_call.1} parent=35 // pred_region
          %237 = dma.done [#allocation6], 16384
        $region44: #{tpu_custom_call.1} parent=35 // pred_fallthru
          _
        // Predicated region
        $region45: #{tpu_custom_call.1} parent=35 // pred_check
          %p238 = pneg %p86
        $region46: #{tpu_custom_call.1} parent=35 // pred_check_branch
          %240 = sbr.rel (%p238) target = $region48
        $region47: #{tpu_custom_call.1} parent=35 // pred_region
          %242 = dma.done [#allocation6], 8192
        $region48: #{tpu_custom_call.1} parent=35 // pred_fallthru
          _
        // Predicated region
        $region49: #{tpu_custom_call.1} parent=35 // pred_check
          %p243 = pneg %p107
        $region50: #{tpu_custom_call.1} parent=35 // pred_check_branch
          %245 = sbr.rel (%p243) target = $region52
        $region51: #{tpu_custom_call.1} parent=35 // pred_region
          %247 = dma.done [#allocation9], 2048
        $region52: #{tpu_custom_call.1} parent=35 // pred_fallthru
          _
        %s248 = sand.u32 %s31, 1
        %s249 = scalar_lea.sflag [#allocation3], %s248
        %s250 = sand.u32 %s31, 1
        %s251 = smul.addr %s250, 512
        %s252 = scalar_lea.vmem [#allocation2], %s251
        %p253 = pneg %p44
        %p254 = pneg %p41
        %p255 = pneg %p65
        %p256 = pneg %p62
        %p257 = pneg %p86
        %p258 = pneg %p83
        %p259 = pneg %p107
        %p260 = pneg %p104
        %p261 = pneg %p133
        %p262 = pneg %p130
        %s263 = sand.u32 %s120, 1
        %s264 = scalar_lea.sflag [#allocation4], %s263
        %s265 = sand.u32 %s120, 1
        %s266 = smul.addr %s265, 512
        %s267 = scalar_lea.vmem [#allocation10], %s266
        %s268 = smul.u32 64, %s23
        %s269 = smul.u32 64, %s23
        %v270 = vld [vmem:[%s227] sm:$0xff]
        %v271 = vld [vmem:[%s227 + $0x8] sm:$0xff]
        %v272 = vld [vmem:[%s227 + $0x10] sm:$0xff]
        %v273 = vld [vmem:[%s227 + $0x18] sm:$0xff]
        %v274 = vld [vmem:[%s227 + $0x20] sm:$0xff]
        %v275 = vld [vmem:[%s227 + $0x28] sm:$0xff]
        %v276 = vld [vmem:[%s227 + $0x30] sm:$0xff]
        %v277 = vld [vmem:[%s227 + $0x38] sm:$0xff]
        %v278 = vld [vmem:[%s227 + $0x40] sm:$0xff]
        %v279 = vld [vmem:[%s227 + $0x48] sm:$0xff]
        %v280 = vld [vmem:[%s227 + $0x50] sm:$0xff]
        %v281 = vld [vmem:[%s227 + $0x58] sm:$0xff]
        %v282 = vld [vmem:[%s227 + $0x60] sm:$0xff]
        %v283 = vld [vmem:[%s227 + $0x68] sm:$0xff]
        %v284 = vld [vmem:[%s227 + $0x70] sm:$0xff]
        %v285 = vld [vmem:[%s227 + $0x78] sm:$0xff]
        %v286 = vld [vmem:[%s227 + $0x80] sm:$0xff]
        %v287 = vld [vmem:[%s227 + $0x88] sm:$0xff]
        %v288 = vld [vmem:[%s227 + $0x90] sm:$0xff]
        %v289 = vld [vmem:[%s227 + $0x98] sm:$0xff]
        %v290 = vld [vmem:[%s227 + $0xa0] sm:$0xff]
        %v291 = vld [vmem:[%s227 + $0xa8] sm:$0xff]
        %v292 = vld [vmem:[%s227 + $0xb0] sm:$0xff]
        %v293 = vld [vmem:[%s227 + $0xb8] sm:$0xff]
        %v294 = vld [vmem:[%s227 + $0xc0] sm:$0xff]
        %v295 = vld [vmem:[%s227 + $0xc8] sm:$0xff]
        %v296 = vld [vmem:[%s227 + $0xd0] sm:$0xff]
        %v297 = vld [vmem:[%s227 + $0xd8] sm:$0xff]
        %v298 = vld [vmem:[%s227 + $0xe0] sm:$0xff]
        %v299 = vld [vmem:[%s227 + $0xe8] sm:$0xff]
        %v300 = vld [vmem:[%s227 + $0xf0] sm:$0xff]
        %v301 = vld [vmem:[%s227 + $0xf8] sm:$0xff]
        %v302 = vld [vmem:[%s227 + $0x100] sm:$0xff]
        %v303 = vld [vmem:[%s227 + $0x108] sm:$0xff]
        %v304 = vld [vmem:[%s227 + $0x110] sm:$0xff]
        %v305 = vld [vmem:[%s227 + $0x118] sm:$0xff]
        %v306 = vld [vmem:[%s227 + $0x120] sm:$0xff]
        %v307 = vld [vmem:[%s227 + $0x128] sm:$0xff]
        %v308 = vld [vmem:[%s227 + $0x130] sm:$0xff]
        %v309 = vld [vmem:[%s227 + $0x138] sm:$0xff]
        %v310 = vld [vmem:[%s227 + $0x140] sm:$0xff]
        %v311 = vld [vmem:[%s227 + $0x148] sm:$0xff]
        %v312 = vld [vmem:[%s227 + $0x150] sm:$0xff]
        %v313 = vld [vmem:[%s227 + $0x158] sm:$0xff]
        %v314 = vld [vmem:[%s227 + $0x160] sm:$0xff]
        %v315 = vld [vmem:[%s227 + $0x168] sm:$0xff]
        %v316 = vld [vmem:[%s227 + $0x170] sm:$0xff]
        %v317 = vld [vmem:[%s227 + $0x178] sm:$0xff]
        %v318 = vld [vmem:[%s227 + $0x180] sm:$0xff]
        %v319 = vld [vmem:[%s227 + $0x188] sm:$0xff]
        %v320 = vld [vmem:[%s227 + $0x190] sm:$0xff]
        %v321 = vld [vmem:[%s227 + $0x198] sm:$0xff]
        %v322 = vld [vmem:[%s227 + $0x1a0] sm:$0xff]
        %v323 = vld [vmem:[%s227 + $0x1a8] sm:$0xff]
        %v324 = vld [vmem:[%s227 + $0x1b0] sm:$0xff]
        %v325 = vld [vmem:[%s227 + $0x1b8] sm:$0xff]
        %v326 = vld [vmem:[%s227 + $0x1c0] sm:$0xff]
        %v327 = vld [vmem:[%s227 + $0x1c8] sm:$0xff]
        %v328 = vld [vmem:[%s227 + $0x1d0] sm:$0xff]
        %v329 = vld [vmem:[%s227 + $0x1d8] sm:$0xff]
        %v330 = vld [vmem:[%s227 + $0x1e0] sm:$0xff]
        %v331 = vld [vmem:[%s227 + $0x1e8] sm:$0xff]
        %v332 = vld [vmem:[%s227 + $0x1f0] sm:$0xff]
        %v333 = vld [vmem:[%s227 + $0x1f8] sm:$0xff]
        %v334 = vld [vmem:[#allocation8] sm:$0xff]
        %v335 = vld [vmem:[#allocation8 + $0x8] sm:$0xff]
        %v336 = vld [vmem:[#allocation8 + $0x10] sm:$0xff]
        %v337 = vld [vmem:[#allocation8 + $0x18] sm:$0xff]
        %v338 = vld [vmem:[#allocation8 + $0x20] sm:$0xff]
        %v339 = vld [vmem:[#allocation8 + $0x28] sm:$0xff]
        %v340 = vld [vmem:[#allocation8 + $0x30] sm:$0xff]
        %v341 = vld [vmem:[#allocation8 + $0x38] sm:$0xff]
        %v342 = vld [vmem:[#allocation8 + $0x40] sm:$0xff]
        %v343 = vld [vmem:[#allocation8 + $0x48] sm:$0xff]
        %v344 = vld [vmem:[#allocation8 + $0x50] sm:$0xff]
        %v345 = vld [vmem:[#allocation8 + $0x58] sm:$0xff]
        %v346 = vld [vmem:[#allocation8 + $0x60] sm:$0xff]
        %v347 = vld [vmem:[#allocation8 + $0x68] sm:$0xff]
        %v348 = vld [vmem:[#allocation8 + $0x70] sm:$0xff]
        %v349 = vld [vmem:[#allocation8 + $0x78] sm:$0xff]
        %v350 = vld [vmem:[#allocation5] sm:$0xff]
        %v351 = vld [vmem:[#allocation5 + $0x8] sm:$0xff]
        %v352 = vld [vmem:[#allocation5 + $0x40] sm:$0xff]
        %v353 = vld [vmem:[#allocation5 + $0x48] sm:$0xff]
        %v354 = vld [vmem:[#allocation5 + $0x80] sm:$0xff]
        %v355 = vld [vmem:[#allocation5 + $0x88] sm:$0xff]
        %v356 = vld [vmem:[#allocation5 + $0xc0] sm:$0xff]
        %v357 = vld [vmem:[#allocation5 + $0xc8] sm:$0xff]
        %v358 = vld [vmem:[#allocation5 + $0x100] sm:$0xff]
        %v359 = vld [vmem:[#allocation5 + $0x108] sm:$0xff]
        %v360 = vld [vmem:[#allocation5 + $0x140] sm:$0xff]
        %v361 = vld [vmem:[#allocation5 + $0x148] sm:$0xff]
        %v362 = vld [vmem:[#allocation5 + $0x180] sm:$0xff]
        %v363 = vld [vmem:[#allocation5 + $0x188] sm:$0xff]
        %v364 = vld [vmem:[#allocation5 + $0x1c0] sm:$0xff]
        %v365 = vld [vmem:[#allocation5 + $0x1c8] sm:$0xff]
        %v366 = vld [vmem:[#allocation5 + $0x200] sm:$0xff]
        %v367 = vld [vmem:[#allocation5 + $0x208] sm:$0xff]
        %v368 = vld [vmem:[#allocation5 + $0x240] sm:$0xff]
        %v369 = vld [vmem:[#allocation5 + $0x248] sm:$0xff]
        %v370 = vld [vmem:[#allocation5 + $0x280] sm:$0xff]
        %v371 = vld [vmem:[#allocation5 + $0x288] sm:$0xff]
        %v372 = vld [vmem:[#allocation5 + $0x2c0] sm:$0xff]
        %v373 = vld [vmem:[#allocation5 + $0x2c8] sm:$0xff]
        %v374 = vld [vmem:[#allocation5 + $0x300] sm:$0xff]
        %v375 = vld [vmem:[#allocation5 + $0x308] sm:$0xff]
        %v376 = vld [vmem:[#allocation5 + $0x340] sm:$0xff]
        %v377 = vld [vmem:[#allocation5 + $0x348] sm:$0xff]
        %v378 = vld [vmem:[#allocation5 + $0x380] sm:$0xff]
        %v379 = vld [vmem:[#allocation5 + $0x388] sm:$0xff]
        %v380 = vld [vmem:[#allocation5 + $0x3c0] sm:$0xff]
        %v381 = vld [vmem:[#allocation5 + $0x3c8] sm:$0xff]
        %382 = vmatpush.msra.mxu0 %v380
        %383 = vmatpush.msra.mxu0 %v378
        %384 = vmatpush.msra.mxu0 %v376
        %385 = vmatpush.msra.mxu0 %v374
        %386 = vmatpush.msra.mxu0 %v372
        %387 = vmatpush.msra.mxu0 %v370
        %388 = vmatpush.msra.mxu0 %v368
        %389 = vmatpush.msra.mxu0 %v366
        %390 = vmatpush.msra.mxu0 %v364
        %391 = vmatpush.msra.mxu0 %v362
        %392 = vmatpush.msra.mxu0 %v360
        %393 = vmatpush.msra.mxu0 %v358
        %394 = vmatpush.msra.mxu0 %v356
        %395 = vmatpush.msra.mxu0 %v354
        %396 = vmatpush.msra.mxu0 %v352
        %397 = vmatpush.msra.mxu0 %v350
        %398 = vmatmul.f32.gmra.mxu0 %v270
        %v399 = vpop.f32.mrf.mxu0
        %v400 = vadd.f32 0.0, %v399
        %401 = vmatmul.f32.gmra.mxu0 %v271
        %v402 = vpop.f32.mrf.mxu0
        %v403 = vadd.f32 0.0, %v402
        %404 = vmatmul.f32.gmra.mxu0 %v272
        %v405 = vpop.f32.mrf.mxu0
        %v406 = vadd.f32 0.0, %v405
        %407 = vmatmul.f32.gmra.mxu0 %v273
        %v408 = vpop.f32.mrf.mxu0
        %v409 = vadd.f32 0.0, %v408
        %410 = vmatmul.f32.gmra.mxu0 %v274
        %v411 = vpop.f32.mrf.mxu0
        %v412 = vadd.f32 0.0, %v411
        %413 = vmatmul.f32.gmra.mxu0 %v275
        %v414 = vpop.f32.mrf.mxu0
        %v415 = vadd.f32 0.0, %v414
        %416 = vmatmul.f32.gmra.mxu0 %v276
        %v417 = vpop.f32.mrf.mxu0
        %v418 = vadd.f32 0.0, %v417
        %419 = vmatmul.f32.gmra.mxu0 %v277
        %v420 = vpop.f32.mrf.mxu0
        %v421 = vadd.f32 0.0, %v420
        %422 = vmatmul.f32.gmra.mxu0 %v278
        %v423 = vpop.f32.mrf.mxu0
        %v424 = vadd.f32 0.0, %v423
        %425 = vmatmul.f32.gmra.mxu0 %v279
        %v426 = vpop.f32.mrf.mxu0
        %v427 = vadd.f32 0.0, %v426
        %428 = vmatmul.f32.gmra.mxu0 %v280
        %v429 = vpop.f32.mrf.mxu0
        %v430 = vadd.f32 0.0, %v429
        %431 = vmatmul.f32.gmra.mxu0 %v281
        %v432 = vpop.f32.mrf.mxu0
        %v433 = vadd.f32 0.0, %v432
        %434 = vmatmul.f32.gmra.mxu0 %v282
        %v435 = vpop.f32.mrf.mxu0
        %v436 = vadd.f32 0.0, %v435
        %437 = vmatmul.f32.gmra.mxu0 %v283
        %v438 = vpop.f32.mrf.mxu0
        %v439 = vadd.f32 0.0, %v438
        %440 = vmatmul.f32.gmra.mxu0 %v284
        %v441 = vpop.f32.mrf.mxu0
        %v442 = vadd.f32 0.0, %v441
        %443 = vmatmul.f32.gmra.mxu0 %v285
        %v444 = vpop.f32.mrf.mxu0
        %v445 = vadd.f32 0.0, %v444
        %446 = vmatmul.f32.gmra.mxu0 %v286
        %v447 = vpop.f32.mrf.mxu0
        %v448 = vadd.f32 0.0, %v447
        %449 = vmatmul.f32.gmra.mxu0 %v287
        %v450 = vpop.f32.mrf.mxu0
        %v451 = vadd.f32 0.0, %v450
        %452 = vmatmul.f32.gmra.mxu0 %v288
        %v453 = vpop.f32.mrf.mxu0
        %v454 = vadd.f32 0.0, %v453
        %455 = vmatmul.f32.gmra.mxu0 %v289
        %v456 = vpop.f32.mrf.mxu0
        %v457 = vadd.f32 0.0, %v456
        %458 = vmatmul.f32.gmra.mxu0 %v290
        %v459 = vpop.f32.mrf.mxu0
        %v460 = vadd.f32 0.0, %v459
        %461 = vmatmul.f32.gmra.mxu0 %v291
        %v462 = vpop.f32.mrf.mxu0
        %v463 = vadd.f32 0.0, %v462
        %464 = vmatmul.f32.gmra.mxu0 %v292
        %v465 = vpop.f32.mrf.mxu0
        %v466 = vadd.f32 0.0, %v465
        %467 = vmatmul.f32.gmra.mxu0 %v293
        %v468 = vpop.f32.mrf.mxu0
        %v469 = vadd.f32 0.0, %v468
        %470 = vmatmul.f32.gmra.mxu0 %v294
        %v471 = vpop.f32.mrf.mxu0
        %v472 = vadd.f32 0.0, %v471
        %473 = vmatmul.f32.gmra.mxu0 %v295
        %v474 = vpop.f32.mrf.mxu0
        %v475 = vadd.f32 0.0, %v474
        %476 = vmatmul.f32.gmra.mxu0 %v296
        %v477 = vpop.f32.mrf.mxu0
        %v478 = vadd.f32 0.0, %v477
        %479 = vmatmul.f32.gmra.mxu0 %v297
        %v480 = vpop.f32.mrf.mxu0
        %v481 = vadd.f32 0.0, %v480
        %482 = vmatmul.f32.gmra.mxu0 %v298
        %v483 = vpop.f32.mrf.mxu0
        %v484 = vadd.f32 0.0, %v483
        %485 = vmatmul.f32.gmra.mxu0 %v299
        %v486 = vpop.f32.mrf.mxu0
        %v487 = vadd.f32 0.0, %v486
        %488 = vmatmul.f32.gmra.mxu0 %v300
        %v489 = vpop.f32.mrf.mxu0
        %v490 = vadd.f32 0.0, %v489
        %491 = vmatmul.f32.gmra.mxu0 %v301
        %v492 = vpop.f32.mrf.mxu0
        %v493 = vadd.f32 0.0, %v492
        %494 = vmatmul.f32.gmra.mxu0 %v302
        %v495 = vpop.f32.mrf.mxu0
        %v496 = vadd.f32 0.0, %v495
        %497 = vmatmul.f32.gmra.mxu0 %v303
        %v498 = vpop.f32.mrf.mxu0
        %v499 = vadd.f32 0.0, %v498
        %500 = vmatmul.f32.gmra.mxu0 %v304
        %v501 = vpop.f32.mrf.mxu0
        %v502 = vadd.f32 0.0, %v501
        %503 = vmatmul.f32.gmra.mxu0 %v305
        %v504 = vpop.f32.mrf.mxu0
        %v505 = vadd.f32 0.0, %v504
        %506 = vmatmul.f32.gmra.mxu0 %v306
        %v507 = vpop.f32.mrf.mxu0
        %v508 = vadd.f32 0.0, %v507
        %509 = vmatmul.f32.gmra.mxu0 %v307
        %v510 = vpop.f32.mrf.mxu0
        %v511 = vadd.f32 0.0, %v510
        %512 = vmatmul.f32.gmra.mxu0 %v308
        %v513 = vpop.f32.mrf.mxu0
        %v514 = vadd.f32 0.0, %v513
        %515 = vmatmul.f32.gmra.mxu0 %v309
        %v516 = vpop.f32.mrf.mxu0
        %v517 = vadd.f32 0.0, %v516
        %518 = vmatmul.f32.gmra.mxu0 %v310
        %v519 = vpop.f32.mrf.mxu0
        %v520 = vadd.f32 0.0, %v519
        %521 = vmatmul.f32.gmra.mxu0 %v311
        %v522 = vpop.f32.mrf.mxu0
        %v523 = vadd.f32 0.0, %v522
        %524 = vmatmul.f32.gmra.mxu0 %v312
        %v525 = vpop.f32.mrf.mxu0
        %v526 = vadd.f32 0.0, %v525
        %527 = vmatmul.f32.gmra.mxu0 %v313
        %v528 = vpop.f32.mrf.mxu0
        %v529 = vadd.f32 0.0, %v528
        %530 = vmatmul.f32.gmra.mxu0 %v314
        %v531 = vpop.f32.mrf.mxu0
        %v532 = vadd.f32 0.0, %v531
        %533 = vmatmul.f32.gmra.mxu0 %v315
        %v534 = vpop.f32.mrf.mxu0
        %v535 = vadd.f32 0.0, %v534
        %536 = vmatmul.f32.gmra.mxu0 %v316
        %v537 = vpop.f32.mrf.mxu0
        %v538 = vadd.f32 0.0, %v537
        %539 = vmatmul.f32.gmra.mxu0 %v317
        %v540 = vpop.f32.mrf.mxu0
        %v541 = vadd.f32 0.0, %v540
        %542 = vmatmul.f32.gmra.mxu0 %v318
        %v543 = vpop.f32.mrf.mxu0
        %v544 = vadd.f32 0.0, %v543
        %545 = vmatmul.f32.gmra.mxu0 %v319
        %v546 = vpop.f32.mrf.mxu0
        %v547 = vadd.f32 0.0, %v546
        %548 = vmatmul.f32.gmra.mxu0 %v320
        %v549 = vpop.f32.mrf.mxu0
        %v550 = vadd.f32 0.0, %v549
        %551 = vmatmul.f32.gmra.mxu0 %v321
        %v552 = vpop.f32.mrf.mxu0
        %v553 = vadd.f32 0.0, %v552
        %554 = vmatmul.f32.gmra.mxu0 %v322
        %v555 = vpop.f32.mrf.mxu0
        %v556 = vadd.f32 0.0, %v555
        %557 = vmatmul.f32.gmra.mxu0 %v323
        %v558 = vpop.f32.mrf.mxu0
        %v559 = vadd.f32 0.0, %v558
        %560 = vmatmul.f32.gmra.mxu0 %v324
        %v561 = vpop.f32.mrf.mxu0
        %v562 = vadd.f32 0.0, %v561
        %563 = vmatmul.f32.gmra.mxu0 %v325
        %v564 = vpop.f32.mrf.mxu0
        %v565 = vadd.f32 0.0, %v564
        %566 = vmatmul.f32.gmra.mxu0 %v326
        %v567 = vpop.f32.mrf.mxu0
        %v568 = vadd.f32 0.0, %v567
        %569 = vmatmul.f32.gmra.mxu0 %v327
        %v570 = vpop.f32.mrf.mxu0
        %v571 = vadd.f32 0.0, %v570
        %572 = vmatmul.f32.gmra.mxu0 %v328
        %v573 = vpop.f32.mrf.mxu0
        %v574 = vadd.f32 0.0, %v573
        %575 = vmatmul.f32.gmra.mxu0 %v329
        %v576 = vpop.f32.mrf.mxu0
        %v577 = vadd.f32 0.0, %v576
        %578 = vmatmul.f32.gmra.mxu0 %v330
        %v579 = vpop.f32.mrf.mxu0
        %v580 = vadd.f32 0.0, %v579
        %581 = vmatmul.f32.gmra.mxu0 %v331
        %v582 = vpop.f32.mrf.mxu0
        %v583 = vadd.f32 0.0, %v582
        %584 = vmatmul.f32.gmra.mxu0 %v332
        %v585 = vpop.f32.mrf.mxu0
        %v586 = vadd.f32 0.0, %v585
        %587 = vmatmul.f32.gmra.mxu0 %v333
        %v588 = vpop.f32.mrf.mxu0
        %v589 = vadd.f32 0.0, %v588
        %590 = vdwg.mxu0
        %591 = vmatpush.msra.mxu0 %v381
        %592 = vmatpush.msra.mxu0 %v379
        %593 = vmatpush.msra.mxu0 %v377
        %594 = vmatpush.msra.mxu0 %v375
        %595 = vmatpush.msra.mxu0 %v373
        %596 = vmatpush.msra.mxu0 %v371
        %597 = vmatpush.msra.mxu0 %v369
        %598 = vmatpush.msra.mxu0 %v367
        %599 = vmatpush.msra.mxu0 %v365
        %600 = vmatpush.msra.mxu0 %v363
        %601 = vmatpush.msra.mxu0 %v361
        %602 = vmatpush.msra.mxu0 %v359
        %603 = vmatpush.msra.mxu0 %v357
        %604 = vmatpush.msra.mxu0 %v355
        %605 = vmatpush.msra.mxu0 %v353
        %606 = vmatpush.msra.mxu0 %v351
        %607 = vmatmul.f32.gmra.mxu0 %v270
        %v608 = vpop.f32.mrf.mxu0
        %v609 = vadd.f32 0.0, %v608
        %610 = vmatmul.f32.gmra.mxu0 %v271
        %v611 = vpop.f32.mrf.mxu0
        %v612 = vadd.f32 0.0, %v611
        %613 = vmatmul.f32.gmra.mxu0 %v272
        %v614 = vpop.f32.mrf.mxu0
        %v615 = vadd.f32 0.0, %v614
        %616 = vmatmul.f32.gmra.mxu0 %v273
        %v617 = vpop.f32.mrf.mxu0
        %v618 = vadd.f32 0.0, %v617
        %619 = vmatmul.f32.gmra.mxu0 %v274
        %v620 = vpop.f32.mrf.mxu0
        %v621 = vadd.f32 0.0, %v620
        %622 = vmatmul.f32.gmra.mxu0 %v275
        %v623 = vpop.f32.mrf.mxu0
        %v624 = vadd.f32 0.0, %v623
        %625 = vmatmul.f32.gmra.mxu0 %v276
        %v626 = vpop.f32.mrf.mxu0
        %v627 = vadd.f32 0.0, %v626
        %628 = vmatmul.f32.gmra.mxu0 %v277
        %v629 = vpop.f32.mrf.mxu0
        %v630 = vadd.f32 0.0, %v629
        %631 = vmatmul.f32.gmra.mxu0 %v278
        %v632 = vpop.f32.mrf.mxu0
        %v633 = vadd.f32 0.0, %v632
        %634 = vmatmul.f32.gmra.mxu0 %v279
        %v635 = vpop.f32.mrf.mxu0
        %v636 = vadd.f32 0.0, %v635
        %637 = vmatmul.f32.gmra.mxu0 %v280
        %v638 = vpop.f32.mrf.mxu0
        %v639 = vadd.f32 0.0, %v638
        %640 = vmatmul.f32.gmra.mxu0 %v281
        %v641 = vpop.f32.mrf.mxu0
        %v642 = vadd.f32 0.0, %v641
        %643 = vmatmul.f32.gmra.mxu0 %v282
        %v644 = vpop.f32.mrf.mxu0
        %v645 = vadd.f32 0.0, %v644
        %646 = vmatmul.f32.gmra.mxu0 %v283
        %v647 = vpop.f32.mrf.mxu0
        %v648 = vadd.f32 0.0, %v647
        %649 = vmatmul.f32.gmra.mxu0 %v284
        %v650 = vpop.f32.mrf.mxu0
        %v651 = vadd.f32 0.0, %v650
        %652 = vmatmul.f32.gmra.mxu0 %v285
        %v653 = vpop.f32.mrf.mxu0
        %v654 = vadd.f32 0.0, %v653
        %655 = vmatmul.f32.gmra.mxu0 %v286
        %v656 = vpop.f32.mrf.mxu0
        %v657 = vadd.f32 0.0, %v656
        %658 = vmatmul.f32.gmra.mxu0 %v287
        %v659 = vpop.f32.mrf.mxu0
        %v660 = vadd.f32 0.0, %v659
        %661 = vmatmul.f32.gmra.mxu0 %v288
        %v662 = vpop.f32.mrf.mxu0
        %v663 = vadd.f32 0.0, %v662
        %664 = vmatmul.f32.gmra.mxu0 %v289
        %v665 = vpop.f32.mrf.mxu0
        %v666 = vadd.f32 0.0, %v665
        %667 = vmatmul.f32.gmra.mxu0 %v290
        %v668 = vpop.f32.mrf.mxu0
        %v669 = vadd.f32 0.0, %v668
        %670 = vmatmul.f32.gmra.mxu0 %v291
        %v671 = vpop.f32.mrf.mxu0
        %v672 = vadd.f32 0.0, %v671
        %673 = vmatmul.f32.gmra.mxu0 %v292
        %v674 = vpop.f32.mrf.mxu0
        %v675 = vadd.f32 0.0, %v674
        %676 = vmatmul.f32.gmra.mxu0 %v293
        %v677 = vpop.f32.mrf.mxu0
        %v678 = vadd.f32 0.0, %v677
        %679 = vmatmul.f32.gmra.mxu0 %v294
        %v680 = vpop.f32.mrf.mxu0
        %v681 = vadd.f32 0.0, %v680
        %682 = vmatmul.f32.gmra.mxu0 %v295
        %v683 = vpop.f32.mrf.mxu0
        %v684 = vadd.f32 0.0, %v683
        %685 = vmatmul.f32.gmra.mxu0 %v296
        %v686 = vpop.f32.mrf.mxu0
        %v687 = vadd.f32 0.0, %v686
        %688 = vmatmul.f32.gmra.mxu0 %v297
        %v689 = vpop.f32.mrf.mxu0
        %v690 = vadd.f32 0.0, %v689
        %691 = vmatmul.f32.gmra.mxu0 %v298
        %v692 = vpop.f32.mrf.mxu0
        %v693 = vadd.f32 0.0, %v692
        %694 = vmatmul.f32.gmra.mxu0 %v299
        %v695 = vpop.f32.mrf.mxu0
        %v696 = vadd.f32 0.0, %v695
        %697 = vmatmul.f32.gmra.mxu0 %v300
        %v698 = vpop.f32.mrf.mxu0
        %v699 = vadd.f32 0.0, %v698
        %700 = vmatmul.f32.gmra.mxu0 %v301
        %v701 = vpop.f32.mrf.mxu0
        %v702 = vadd.f32 0.0, %v701
        %703 = vmatmul.f32.gmra.mxu0 %v302
        %v704 = vpop.f32.mrf.mxu0
        %v705 = vadd.f32 0.0, %v704
        %706 = vmatmul.f32.gmra.mxu0 %v303
        %v707 = vpop.f32.mrf.mxu0
        %v708 = vadd.f32 0.0, %v707
        %709 = vmatmul.f32.gmra.mxu0 %v304
        %v710 = vpop.f32.mrf.mxu0
        %v711 = vadd.f32 0.0, %v710
        %712 = vmatmul.f32.gmra.mxu0 %v305
        %v713 = vpop.f32.mrf.mxu0
        %v714 = vadd.f32 0.0, %v713
        %715 = vmatmul.f32.gmra.mxu0 %v306
        %v716 = vpop.f32.mrf.mxu0
        %v717 = vadd.f32 0.0, %v716
        %718 = vmatmul.f32.gmra.mxu0 %v307
        %v719 = vpop.f32.mrf.mxu0
        %v720 = vadd.f32 0.0, %v719
        %721 = vmatmul.f32.gmra.mxu0 %v308
        %v722 = vpop.f32.mrf.mxu0
        %v723 = vadd.f32 0.0, %v722
        %724 = vmatmul.f32.gmra.mxu0 %v309
        %v725 = vpop.f32.mrf.mxu0
        %v726 = vadd.f32 0.0, %v725
        %727 = vmatmul.f32.gmra.mxu0 %v310
        %v728 = vpop.f32.mrf.mxu0
        %v729 = vadd.f32 0.0, %v728
        %730 = vmatmul.f32.gmra.mxu0 %v311
        %v731 = vpop.f32.mrf.mxu0
        %v732 = vadd.f32 0.0, %v731
        %733 = vmatmul.f32.gmra.mxu0 %v312
        %v734 = vpop.f32.mrf.mxu0
        %v735 = vadd.f32 0.0, %v734
        %736 = vmatmul.f32.gmra.mxu0 %v313
        %v737 = vpop.f32.mrf.mxu0
        %v738 = vadd.f32 0.0, %v737
        %739 = vmatmul.f32.gmra.mxu0 %v314
        %v740 = vpop.f32.mrf.mxu0
        %v741 = vadd.f32 0.0, %v740
        %742 = vmatmul.f32.gmra.mxu0 %v315
        %v743 = vpop.f32.mrf.mxu0
        %v744 = vadd.f32 0.0, %v743
        %745 = vmatmul.f32.gmra.mxu0 %v316
        %v746 = vpop.f32.mrf.mxu0
        %v747 = vadd.f32 0.0, %v746
        %748 = vmatmul.f32.gmra.mxu0 %v317
        %v749 = vpop.f32.mrf.mxu0
        %v750 = vadd.f32 0.0, %v749
        %751 = vmatmul.f32.gmra.mxu0 %v318
        %v752 = vpop.f32.mrf.mxu0
        %v753 = vadd.f32 0.0, %v752
        %754 = vmatmul.f32.gmra.mxu0 %v319
        %v755 = vpop.f32.mrf.mxu0
        %v756 = vadd.f32 0.0, %v755
        %757 = vmatmul.f32.gmra.mxu0 %v320
        %v758 = vpop.f32.mrf.mxu0
        %v759 = vadd.f32 0.0, %v758
        %760 = vmatmul.f32.gmra.mxu0 %v321
        %v761 = vpop.f32.mrf.mxu0
        %v762 = vadd.f32 0.0, %v761
        %763 = vmatmul.f32.gmra.mxu0 %v322
        %v764 = vpop.f32.mrf.mxu0
        %v765 = vadd.f32 0.0, %v764
        %766 = vmatmul.f32.gmra.mxu0 %v323
        %v767 = vpop.f32.mrf.mxu0
        %v768 = vadd.f32 0.0, %v767
        %769 = vmatmul.f32.gmra.mxu0 %v324
        %v770 = vpop.f32.mrf.mxu0
        %v771 = vadd.f32 0.0, %v770
        %772 = vmatmul.f32.gmra.mxu0 %v325
        %v773 = vpop.f32.mrf.mxu0
        %v774 = vadd.f32 0.0, %v773
        %775 = vmatmul.f32.gmra.mxu0 %v326
        %v776 = vpop.f32.mrf.mxu0
        %v777 = vadd.f32 0.0, %v776
        %778 = vmatmul.f32.gmra.mxu0 %v327
        %v779 = vpop.f32.mrf.mxu0
        %v780 = vadd.f32 0.0, %v779
        %781 = vmatmul.f32.gmra.mxu0 %v328
        %v782 = vpop.f32.mrf.mxu0
        %v783 = vadd.f32 0.0, %v782
        %784 = vmatmul.f32.gmra.mxu0 %v329
        %v785 = vpop.f32.mrf.mxu0
        %v786 = vadd.f32 0.0, %v785
        %787 = vmatmul.f32.gmra.mxu0 %v330
        %v788 = vpop.f32.mrf.mxu0
        %v789 = vadd.f32 0.0, %v788
        %790 = vmatmul.f32.gmra.mxu0 %v331
        %v791 = vpop.f32.mrf.mxu0
        %v792 = vadd.f32 0.0, %v791
        %793 = vmatmul.f32.gmra.mxu0 %v332
        %v794 = vpop.f32.mrf.mxu0
        %v795 = vadd.f32 0.0, %v794
        %796 = vmatmul.f32.gmra.mxu0 %v333
        %v797 = vpop.f32.mrf.mxu0
        %v798 = vadd.f32 0.0, %v797
        %799 = vdwg.mxu0
        %v800 = vmul.f32 %v400, %v609
        %v801 = vmul.f32 %v403, %v612
        %v802 = vmul.f32 %v406, %v615
        %v803 = vmul.f32 %v409, %v618
        %v804 = vmul.f32 %v412, %v621
        %v805 = vmul.f32 %v415, %v624
        %v806 = vmul.f32 %v418, %v627
        %v807 = vmul.f32 %v421, %v630
        %v808 = vmul.f32 %v424, %v633
        %v809 = vmul.f32 %v427, %v636
        %v810 = vmul.f32 %v430, %v639
        %v811 = vmul.f32 %v433, %v642
        %v812 = vmul.f32 %v436, %v645
        %v813 = vmul.f32 %v439, %v648
        %v814 = vmul.f32 %v442, %v651
        %v815 = vmul.f32 %v445, %v654
        %v816 = vmul.f32 %v448, %v657
        %v817 = vmul.f32 %v451, %v660
        %v818 = vmul.f32 %v454, %v663
        %v819 = vmul.f32 %v457, %v666
        %v820 = vmul.f32 %v460, %v669
        %v821 = vmul.f32 %v463, %v672
        %v822 = vmul.f32 %v466, %v675
        %v823 = vmul.f32 %v469, %v678
        %v824 = vmul.f32 %v472, %v681
        %v825 = vmul.f32 %v475, %v684
        %v826 = vmul.f32 %v478, %v687
        %v827 = vmul.f32 %v481, %v690
        %v828 = vmul.f32 %v484, %v693
        %v829 = vmul.f32 %v487, %v696
        %v830 = vmul.f32 %v490, %v699
        %v831 = vmul.f32 %v493, %v702
        %v832 = vmul.f32 %v496, %v705
        %v833 = vmul.f32 %v499, %v708
        %v834 = vmul.f32 %v502, %v711
        %v835 = vmul.f32 %v505, %v714
        %v836 = vmul.f32 %v508, %v717
        %v837 = vmul.f32 %v511, %v720
        %v838 = vmul.f32 %v514, %v723
        %v839 = vmul.f32 %v517, %v726
        %v840 = vmul.f32 %v520, %v729
        %v841 = vmul.f32 %v523, %v732
        %v842 = vmul.f32 %v526, %v735
        %v843 = vmul.f32 %v529, %v738
        %v844 = vmul.f32 %v532, %v741
        %v845 = vmul.f32 %v535, %v744
        %v846 = vmul.f32 %v538, %v747
        %v847 = vmul.f32 %v541, %v750
        %v848 = vmul.f32 %v544, %v753
        %v849 = vmul.f32 %v547, %v756
        %v850 = vmul.f32 %v550, %v759
        %v851 = vmul.f32 %v553, %v762
        %v852 = vmul.f32 %v556, %v765
        %v853 = vmul.f32 %v559, %v768
        %v854 = vmul.f32 %v562, %v771
        %v855 = vmul.f32 %v565, %v774
        %v856 = vmul.f32 %v568, %v777
        %v857 = vmul.f32 %v571, %v780
        %v858 = vmul.f32 %v574, %v783
        %v859 = vmul.f32 %v577, %v786
        %v860 = vmul.f32 %v580, %v789
        %v861 = vmul.f32 %v583, %v792
        %v862 = vmul.f32 %v586, %v795
        %v863 = vmul.f32 %v589, %v798
        %v864 = vld [vmem:[#allocation7] sm:$0xff]
        %v865 = vld [vmem:[#allocation7 + $0x8] sm:$0xff]
        %v866 = vld [vmem:[#allocation7 + $0x10] sm:$0xff]
        %v867 = vld [vmem:[#allocation7 + $0x18] sm:$0xff]
        %v868 = vld [vmem:[#allocation7 + $0x20] sm:$0xff]
        %v869 = vld [vmem:[#allocation7 + $0x28] sm:$0xff]
        %v870 = vld [vmem:[#allocation7 + $0x30] sm:$0xff]
        %v871 = vld [vmem:[#allocation7 + $0x38] sm:$0xff]
        %v872 = vld [vmem:[#allocation7 + $0x40] sm:$0xff]
        %v873 = vld [vmem:[#allocation7 + $0x48] sm:$0xff]
        %v874 = vld [vmem:[#allocation7 + $0x50] sm:$0xff]
        %v875 = vld [vmem:[#allocation7 + $0x58] sm:$0xff]
        %v876 = vld [vmem:[#allocation7 + $0x60] sm:$0xff]
        %v877 = vld [vmem:[#allocation7 + $0x68] sm:$0xff]
        %v878 = vld [vmem:[#allocation7 + $0x70] sm:$0xff]
        %v879 = vld [vmem:[#allocation7 + $0x78] sm:$0xff]
        %880 = vmatpush.msra.mxu0 %v879
        %881 = vmatpush.msra.mxu0 %v878
        %882 = vmatpush.msra.mxu0 %v877
        %883 = vmatpush.msra.mxu0 %v876
        %884 = vmatpush.msra.mxu0 %v875
        %885 = vmatpush.msra.mxu0 %v874
        %886 = vmatpush.msra.mxu0 %v873
        %887 = vmatpush.msra.mxu0 %v872
        %888 = vmatpush.msra.mxu0 %v871
        %889 = vmatpush.msra.mxu0 %v870
        %890 = vmatpush.msra.mxu0 %v869
        %891 = vmatpush.msra.mxu0 %v868
        %892 = vmatpush.msra.mxu0 %v867
        %893 = vmatpush.msra.mxu0 %v866
        %894 = vmatpush.msra.mxu0 %v865
        %895 = vmatpush.msra.mxu0 %v864
        %896 = vmatmul.f32.gmra.mxu0 %v800
        %v897 = vpop.f32.mrf.mxu0
        %v898 = vadd.f32 0.0, %v897
        %899 = vmatmul.f32.gmra.mxu0 %v801
        %v900 = vpop.f32.mrf.mxu0
        %v901 = vadd.f32 0.0, %v900
        %902 = vmatmul.f32.gmra.mxu0 %v802
        %v903 = vpop.f32.mrf.mxu0
        %v904 = vadd.f32 0.0, %v903
        %905 = vmatmul.f32.gmra.mxu0 %v803
        %v906 = vpop.f32.mrf.mxu0
        %v907 = vadd.f32 0.0, %v906
        %908 = vmatmul.f32.gmra.mxu0 %v804
        %v909 = vpop.f32.mrf.mxu0
        %v910 = vadd.f32 0.0, %v909
        %911 = vmatmul.f32.gmra.mxu0 %v805
        %v912 = vpop.f32.mrf.mxu0
        %v913 = vadd.f32 0.0, %v912
        %914 = vmatmul.f32.gmra.mxu0 %v806
        %v915 = vpop.f32.mrf.mxu0
        %v916 = vadd.f32 0.0, %v915
        %917 = vmatmul.f32.gmra.mxu0 %v807
        %v918 = vpop.f32.mrf.mxu0
        %v919 = vadd.f32 0.0, %v918
        %920 = vmatmul.f32.gmra.mxu0 %v808
        %v921 = vpop.f32.mrf.mxu0
        %v922 = vadd.f32 0.0, %v921
        %923 = vmatmul.f32.gmra.mxu0 %v809
        %v924 = vpop.f32.mrf.mxu0
        %v925 = vadd.f32 0.0, %v924
        %926 = vmatmul.f32.gmra.mxu0 %v810
        %v927 = vpop.f32.mrf.mxu0
        %v928 = vadd.f32 0.0, %v927
        %929 = vmatmul.f32.gmra.mxu0 %v811
        %v930 = vpop.f32.mrf.mxu0
        %v931 = vadd.f32 0.0, %v930
        %932 = vmatmul.f32.gmra.mxu0 %v812
        %v933 = vpop.f32.mrf.mxu0
        %v934 = vadd.f32 0.0, %v933
        %935 = vmatmul.f32.gmra.mxu0 %v813
        %v936 = vpop.f32.mrf.mxu0
        %v937 = vadd.f32 0.0, %v936
        %938 = vmatmul.f32.gmra.mxu0 %v814
        %v939 = vpop.f32.mrf.mxu0
        %v940 = vadd.f32 0.0, %v939
        %941 = vmatmul.f32.gmra.mxu0 %v815
        %v942 = vpop.f32.mrf.mxu0
        %v943 = vadd.f32 0.0, %v942
        %944 = vmatmul.f32.gmra.mxu0 %v816
        %v945 = vpop.f32.mrf.mxu0
        %v946 = vadd.f32 0.0, %v945
        %947 = vmatmul.f32.gmra.mxu0 %v817
        %v948 = vpop.f32.mrf.mxu0
        %v949 = vadd.f32 0.0, %v948
        %950 = vmatmul.f32.gmra.mxu0 %v818
        %v951 = vpop.f32.mrf.mxu0
        %v952 = vadd.f32 0.0, %v951
        %953 = vmatmul.f32.gmra.mxu0 %v819
        %v954 = vpop.f32.mrf.mxu0
        %v955 = vadd.f32 0.0, %v954
        %956 = vmatmul.f32.gmra.mxu0 %v820
        %v957 = vpop.f32.mrf.mxu0
        %v958 = vadd.f32 0.0, %v957
        %959 = vmatmul.f32.gmra.mxu0 %v821
        %v960 = vpop.f32.mrf.mxu0
        %v961 = vadd.f32 0.0, %v960
        %962 = vmatmul.f32.gmra.mxu0 %v822
        %v963 = vpop.f32.mrf.mxu0
        %v964 = vadd.f32 0.0, %v963
        %965 = vmatmul.f32.gmra.mxu0 %v823
        %v966 = vpop.f32.mrf.mxu0
        %v967 = vadd.f32 0.0, %v966
        %968 = vmatmul.f32.gmra.mxu0 %v824
        %v969 = vpop.f32.mrf.mxu0
        %v970 = vadd.f32 0.0, %v969
        %971 = vmatmul.f32.gmra.mxu0 %v825
        %v972 = vpop.f32.mrf.mxu0
        %v973 = vadd.f32 0.0, %v972
        %974 = vmatmul.f32.gmra.mxu0 %v826
        %v975 = vpop.f32.mrf.mxu0
        %v976 = vadd.f32 0.0, %v975
        %977 = vmatmul.f32.gmra.mxu0 %v827
        %v978 = vpop.f32.mrf.mxu0
        %v979 = vadd.f32 0.0, %v978
        %980 = vmatmul.f32.gmra.mxu0 %v828
        %v981 = vpop.f32.mrf.mxu0
        %v982 = vadd.f32 0.0, %v981
        %983 = vmatmul.f32.gmra.mxu0 %v829
        %v984 = vpop.f32.mrf.mxu0
        %v985 = vadd.f32 0.0, %v984
        %986 = vmatmul.f32.gmra.mxu0 %v830
        %v987 = vpop.f32.mrf.mxu0
        %v988 = vadd.f32 0.0, %v987
        %989 = vmatmul.f32.gmra.mxu0 %v831
        %v990 = vpop.f32.mrf.mxu0
        %v991 = vadd.f32 0.0, %v990
        %992 = vmatmul.f32.gmra.mxu0 %v832
        %v993 = vpop.f32.mrf.mxu0
        %v994 = vadd.f32 0.0, %v993
        %995 = vmatmul.f32.gmra.mxu0 %v833
        %v996 = vpop.f32.mrf.mxu0
        %v997 = vadd.f32 0.0, %v996
        %998 = vmatmul.f32.gmra.mxu0 %v834
        %v999 = vpop.f32.mrf.mxu0
        %v1000 = vadd.f32 0.0, %v999
        %1001 = vmatmul.f32.gmra.mxu0 %v835
        %v1002 = vpop.f32.mrf.mxu0
        %v1003 = vadd.f32 0.0, %v1002
        %1004 = vmatmul.f32.gmra.mxu0 %v836
        %v1005 = vpop.f32.mrf.mxu0
        %v1006 = vadd.f32 0.0, %v1005
        %1007 = vmatmul.f32.gmra.mxu0 %v837
        %v1008 = vpop.f32.mrf.mxu0
        %v1009 = vadd.f32 0.0, %v1008
        %1010 = vmatmul.f32.gmra.mxu0 %v838
        %v1011 = vpop.f32.mrf.mxu0
        %v1012 = vadd.f32 0.0, %v1011
        %1013 = vmatmul.f32.gmra.mxu0 %v839
        %v1014 = vpop.f32.mrf.mxu0
        %v1015 = vadd.f32 0.0, %v1014
        %1016 = vmatmul.f32.gmra.mxu0 %v840
        %v1017 = vpop.f32.mrf.mxu0
        %v1018 = vadd.f32 0.0, %v1017
        %1019 = vmatmul.f32.gmra.mxu0 %v841
        %v1020 = vpop.f32.mrf.mxu0
        %v1021 = vadd.f32 0.0, %v1020
        %1022 = vmatmul.f32.gmra.mxu0 %v842
        %v1023 = vpop.f32.mrf.mxu0
        %v1024 = vadd.f32 0.0, %v1023
        %1025 = vmatmul.f32.gmra.mxu0 %v843
        %v1026 = vpop.f32.mrf.mxu0
        %v1027 = vadd.f32 0.0, %v1026
        %1028 = vmatmul.f32.gmra.mxu0 %v844
        %v1029 = vpop.f32.mrf.mxu0
        %v1030 = vadd.f32 0.0, %v1029
        %1031 = vmatmul.f32.gmra.mxu0 %v845
        %v1032 = vpop.f32.mrf.mxu0
        %v1033 = vadd.f32 0.0, %v1032
        %1034 = vmatmul.f32.gmra.mxu0 %v846
        %v1035 = vpop.f32.mrf.mxu0
        %v1036 = vadd.f32 0.0, %v1035
        %1037 = vmatmul.f32.gmra.mxu0 %v847
        %v1038 = vpop.f32.mrf.mxu0
        %v1039 = vadd.f32 0.0, %v1038
        %1040 = vmatmul.f32.gmra.mxu0 %v848
        %v1041 = vpop.f32.mrf.mxu0
        %v1042 = vadd.f32 0.0, %v1041
        %1043 = vmatmul.f32.gmra.mxu0 %v849
        %v1044 = vpop.f32.mrf.mxu0
        %v1045 = vadd.f32 0.0, %v1044
        %1046 = vmatmul.f32.gmra.mxu0 %v850
        %v1047 = vpop.f32.mrf.mxu0
        %v1048 = vadd.f32 0.0, %v1047
        %1049 = vmatmul.f32.gmra.mxu0 %v851
        %v1050 = vpop.f32.mrf.mxu0
        %v1051 = vadd.f32 0.0, %v1050
        %1052 = vmatmul.f32.gmra.mxu0 %v852
        %v1053 = vpop.f32.mrf.mxu0
        %v1054 = vadd.f32 0.0, %v1053
        %1055 = vmatmul.f32.gmra.mxu0 %v853
        %v1056 = vpop.f32.mrf.mxu0
        %v1057 = vadd.f32 0.0, %v1056
        %1058 = vmatmul.f32.gmra.mxu0 %v854
        %v1059 = vpop.f32.mrf.mxu0
        %v1060 = vadd.f32 0.0, %v1059
        %1061 = vmatmul.f32.gmra.mxu0 %v855
        %v1062 = vpop.f32.mrf.mxu0
        %v1063 = vadd.f32 0.0, %v1062
        %1064 = vmatmul.f32.gmra.mxu0 %v856
        %v1065 = vpop.f32.mrf.mxu0
        %v1066 = vadd.f32 0.0, %v1065
        %1067 = vmatmul.f32.gmra.mxu0 %v857
        %v1068 = vpop.f32.mrf.mxu0
        %v1069 = vadd.f32 0.0, %v1068
        %1070 = vmatmul.f32.gmra.mxu0 %v858
        %v1071 = vpop.f32.mrf.mxu0
        %v1072 = vadd.f32 0.0, %v1071
        %1073 = vmatmul.f32.gmra.mxu0 %v859
        %v1074 = vpop.f32.mrf.mxu0
        %v1075 = vadd.f32 0.0, %v1074
        %1076 = vmatmul.f32.gmra.mxu0 %v860
        %v1077 = vpop.f32.mrf.mxu0
        %v1078 = vadd.f32 0.0, %v1077
        %1079 = vmatmul.f32.gmra.mxu0 %v861
        %v1080 = vpop.f32.mrf.mxu0
        %v1081 = vadd.f32 0.0, %v1080
        %1082 = vmatmul.f32.gmra.mxu0 %v862
        %v1083 = vpop.f32.mrf.mxu0
        %v1084 = vadd.f32 0.0, %v1083
        %1085 = vmatmul.f32.gmra.mxu0 %v863
        %v1086 = vpop.f32.mrf.mxu0
        %v1087 = vadd.f32 0.0, %v1086
        %1088 = vdwg.mxu0
        %1089 = vmatpush.msra.mxu0 %v349
        %1090 = vmatpush.msra.mxu0 %v348
        %1091 = vmatpush.msra.mxu0 %v347
        %1092 = vmatpush.msra.mxu0 %v346
        %1093 = vmatpush.msra.mxu0 %v345
        %1094 = vmatpush.msra.mxu0 %v344
        %1095 = vmatpush.msra.mxu0 %v343
        %1096 = vmatpush.msra.mxu0 %v342
        %1097 = vmatpush.msra.mxu0 %v341
        %1098 = vmatpush.msra.mxu0 %v340
        %1099 = vmatpush.msra.mxu0 %v339
        %1100 = vmatpush.msra.mxu0 %v338
        %1101 = vmatpush.msra.mxu0 %v337
        %1102 = vmatpush.msra.mxu0 %v336
        %1103 = vmatpush.msra.mxu0 %v335
        %1104 = vmatpush.msra.mxu0 %v334
        %1105 = vmatmul.f32.gmra.mxu0 %v270
        %v1106 = vpop.f32.mrf.mxu0
        %v1107 = vadd.f32 %v898, %v1106
        %1108 = vmatmul.f32.gmra.mxu0 %v271
        %v1109 = vpop.f32.mrf.mxu0
        %v1110 = vadd.f32 %v901, %v1109
        %1111 = vmatmul.f32.gmra.mxu0 %v272
        %v1112 = vpop.f32.mrf.mxu0
        %v1113 = vadd.f32 %v904, %v1112
        %1114 = vmatmul.f32.gmra.mxu0 %v273
        %v1115 = vpop.f32.mrf.mxu0
        %v1116 = vadd.f32 %v907, %v1115
        %1117 = vmatmul.f32.gmra.mxu0 %v274
        %v1118 = vpop.f32.mrf.mxu0
        %v1119 = vadd.f32 %v910, %v1118
        %1120 = vmatmul.f32.gmra.mxu0 %v275
        %v1121 = vpop.f32.mrf.mxu0
        %v1122 = vadd.f32 %v913, %v1121
        %1123 = vmatmul.f32.gmra.mxu0 %v276
        %v1124 = vpop.f32.mrf.mxu0
        %v1125 = vadd.f32 %v916, %v1124
        %1126 = vmatmul.f32.gmra.mxu0 %v277
        %v1127 = vpop.f32.mrf.mxu0
        %v1128 = vadd.f32 %v919, %v1127
        %1129 = vmatmul.f32.gmra.mxu0 %v278
        %v1130 = vpop.f32.mrf.mxu0
        %v1131 = vadd.f32 %v922, %v1130
        %1132 = vmatmul.f32.gmra.mxu0 %v279
        %v1133 = vpop.f32.mrf.mxu0
        %v1134 = vadd.f32 %v925, %v1133
        %1135 = vmatmul.f32.gmra.mxu0 %v280
        %v1136 = vpop.f32.mrf.mxu0
        %v1137 = vadd.f32 %v928, %v1136
        %1138 = vmatmul.f32.gmra.mxu0 %v281
        %v1139 = vpop.f32.mrf.mxu0
        %v1140 = vadd.f32 %v931, %v1139
        %1141 = vmatmul.f32.gmra.mxu0 %v282
        %v1142 = vpop.f32.mrf.mxu0
        %v1143 = vadd.f32 %v934, %v1142
        %1144 = vmatmul.f32.gmra.mxu0 %v283
        %v1145 = vpop.f32.mrf.mxu0
        %v1146 = vadd.f32 %v937, %v1145
        %1147 = vmatmul.f32.gmra.mxu0 %v284
        %v1148 = vpop.f32.mrf.mxu0
        %v1149 = vadd.f32 %v940, %v1148
        %1150 = vmatmul.f32.gmra.mxu0 %v285
        %v1151 = vpop.f32.mrf.mxu0
        %v1152 = vadd.f32 %v943, %v1151
        %1153 = vmatmul.f32.gmra.mxu0 %v286
        %v1154 = vpop.f32.mrf.mxu0
        %v1155 = vadd.f32 %v946, %v1154
        %1156 = vmatmul.f32.gmra.mxu0 %v287
        %v1157 = vpop.f32.mrf.mxu0
        %v1158 = vadd.f32 %v949, %v1157
        %1159 = vmatmul.f32.gmra.mxu0 %v288
        %v1160 = vpop.f32.mrf.mxu0
        %v1161 = vadd.f32 %v952, %v1160
        %1162 = vmatmul.f32.gmra.mxu0 %v289
        %v1163 = vpop.f32.mrf.mxu0
        %v1164 = vadd.f32 %v955, %v1163
        %1165 = vmatmul.f32.gmra.mxu0 %v290
        %v1166 = vpop.f32.mrf.mxu0
        %v1167 = vadd.f32 %v958, %v1166
        %1168 = vmatmul.f32.gmra.mxu0 %v291
        %v1169 = vpop.f32.mrf.mxu0
        %v1170 = vadd.f32 %v961, %v1169
        %1171 = vmatmul.f32.gmra.mxu0 %v292
        %v1172 = vpop.f32.mrf.mxu0
        %v1173 = vadd.f32 %v964, %v1172
        %1174 = vmatmul.f32.gmra.mxu0 %v293
        %v1175 = vpop.f32.mrf.mxu0
        %v1176 = vadd.f32 %v967, %v1175
        %1177 = vmatmul.f32.gmra.mxu0 %v294
        %v1178 = vpop.f32.mrf.mxu0
        %v1179 = vadd.f32 %v970, %v1178
        %1180 = vmatmul.f32.gmra.mxu0 %v295
        %v1181 = vpop.f32.mrf.mxu0
        %v1182 = vadd.f32 %v973, %v1181
        %1183 = vmatmul.f32.gmra.mxu0 %v296
        %v1184 = vpop.f32.mrf.mxu0
        %v1185 = vadd.f32 %v976, %v1184
        %1186 = vmatmul.f32.gmra.mxu0 %v297
        %v1187 = vpop.f32.mrf.mxu0
        %v1188 = vadd.f32 %v979, %v1187
        %1189 = vmatmul.f32.gmra.mxu0 %v298
        %v1190 = vpop.f32.mrf.mxu0
        %v1191 = vadd.f32 %v982, %v1190
        %1192 = vmatmul.f32.gmra.mxu0 %v299
        %v1193 = vpop.f32.mrf.mxu0
        %v1194 = vadd.f32 %v985, %v1193
        %1195 = vmatmul.f32.gmra.mxu0 %v300
        %v1196 = vpop.f32.mrf.mxu0
        %v1197 = vadd.f32 %v988, %v1196
        %1198 = vmatmul.f32.gmra.mxu0 %v301
        %v1199 = vpop.f32.mrf.mxu0
        %v1200 = vadd.f32 %v991, %v1199
        %1201 = vmatmul.f32.gmra.mxu0 %v302
        %v1202 = vpop.f32.mrf.mxu0
        %v1203 = vadd.f32 %v994, %v1202
        %1204 = vmatmul.f32.gmra.mxu0 %v303
        %v1205 = vpop.f32.mrf.mxu0
        %v1206 = vadd.f32 %v997, %v1205
        %1207 = vmatmul.f32.gmra.mxu0 %v304
        %v1208 = vpop.f32.mrf.mxu0
        %v1209 = vadd.f32 %v1000, %v1208
        %1210 = vmatmul.f32.gmra.mxu0 %v305
        %v1211 = vpop.f32.mrf.mxu0
        %v1212 = vadd.f32 %v1003, %v1211
        %1213 = vmatmul.f32.gmra.mxu0 %v306
        %v1214 = vpop.f32.mrf.mxu0
        %v1215 = vadd.f32 %v1006, %v1214
        %1216 = vmatmul.f32.gmra.mxu0 %v307
        %v1217 = vpop.f32.mrf.mxu0
        %v1218 = vadd.f32 %v1009, %v1217
        %1219 = vmatmul.f32.gmra.mxu0 %v308
        %v1220 = vpop.f32.mrf.mxu0
        %v1221 = vadd.f32 %v1012, %v1220
        %1222 = vmatmul.f32.gmra.mxu0 %v309
        %v1223 = vpop.f32.mrf.mxu0
        %v1224 = vadd.f32 %v1015, %v1223
        %1225 = vmatmul.f32.gmra.mxu0 %v310
        %v1226 = vpop.f32.mrf.mxu0
        %v1227 = vadd.f32 %v1018, %v1226
        %1228 = vmatmul.f32.gmra.mxu0 %v311
        %v1229 = vpop.f32.mrf.mxu0
        %v1230 = vadd.f32 %v1021, %v1229
        %1231 = vmatmul.f32.gmra.mxu0 %v312
        %v1232 = vpop.f32.mrf.mxu0
        %v1233 = vadd.f32 %v1024, %v1232
        %1234 = vmatmul.f32.gmra.mxu0 %v313
        %v1235 = vpop.f32.mrf.mxu0
        %v1236 = vadd.f32 %v1027, %v1235
        %1237 = vmatmul.f32.gmra.mxu0 %v314
        %v1238 = vpop.f32.mrf.mxu0
        %v1239 = vadd.f32 %v1030, %v1238
        %1240 = vmatmul.f32.gmra.mxu0 %v315
        %v1241 = vpop.f32.mrf.mxu0
        %v1242 = vadd.f32 %v1033, %v1241
        %1243 = vmatmul.f32.gmra.mxu0 %v316
        %v1244 = vpop.f32.mrf.mxu0
        %v1245 = vadd.f32 %v1036, %v1244
        %1246 = vmatmul.f32.gmra.mxu0 %v317
        %v1247 = vpop.f32.mrf.mxu0
        %v1248 = vadd.f32 %v1039, %v1247
        %1249 = vmatmul.f32.gmra.mxu0 %v318
        %v1250 = vpop.f32.mrf.mxu0
        %v1251 = vadd.f32 %v1042, %v1250
        %1252 = vmatmul.f32.gmra.mxu0 %v319
        %v1253 = vpop.f32.mrf.mxu0
        %v1254 = vadd.f32 %v1045, %v1253
        %1255 = vmatmul.f32.gmra.mxu0 %v320
        %v1256 = vpop.f32.mrf.mxu0
        %v1257 = vadd.f32 %v1048, %v1256
        %1258 = vmatmul.f32.gmra.mxu0 %v321
        %v1259 = vpop.f32.mrf.mxu0
        %v1260 = vadd.f32 %v1051, %v1259
        %1261 = vmatmul.f32.gmra.mxu0 %v322
        %v1262 = vpop.f32.mrf.mxu0
        %v1263 = vadd.f32 %v1054, %v1262
        %1264 = vmatmul.f32.gmra.mxu0 %v323
        %v1265 = vpop.f32.mrf.mxu0
        %v1266 = vadd.f32 %v1057, %v1265
        %1267 = vmatmul.f32.gmra.mxu0 %v324
        %v1268 = vpop.f32.mrf.mxu0
        %v1269 = vadd.f32 %v1060, %v1268
        %1270 = vmatmul.f32.gmra.mxu0 %v325
        %v1271 = vpop.f32.mrf.mxu0
        %v1272 = vadd.f32 %v1063, %v1271
        %1273 = vmatmul.f32.gmra.mxu0 %v326
        %v1274 = vpop.f32.mrf.mxu0
        %v1275 = vadd.f32 %v1066, %v1274
        %1276 = vmatmul.f32.gmra.mxu0 %v327
        %v1277 = vpop.f32.mrf.mxu0
        %v1278 = vadd.f32 %v1069, %v1277
        %1279 = vmatmul.f32.gmra.mxu0 %v328
        %v1280 = vpop.f32.mrf.mxu0
        %v1281 = vadd.f32 %v1072, %v1280
        %1282 = vmatmul.f32.gmra.mxu0 %v329
        %v1283 = vpop.f32.mrf.mxu0
        %v1284 = vadd.f32 %v1075, %v1283
        %1285 = vmatmul.f32.gmra.mxu0 %v330
        %v1286 = vpop.f32.mrf.mxu0
        %v1287 = vadd.f32 %v1078, %v1286
        %1288 = vmatmul.f32.gmra.mxu0 %v331
        %v1289 = vpop.f32.mrf.mxu0
        %v1290 = vadd.f32 %v1081, %v1289
        %1291 = vmatmul.f32.gmra.mxu0 %v332
        %v1292 = vpop.f32.mrf.mxu0
        %v1293 = vadd.f32 %v1084, %v1292
        %1294 = vmatmul.f32.gmra.mxu0 %v333
        %v1295 = vpop.f32.mrf.mxu0
        %v1296 = vadd.f32 %v1087, %v1295
        %1297 = vdwg.mxu0
        %v1298 = vld [vmem:[#allocation5 + $0x10] sm:$0xff]
        %v1299 = vld [vmem:[#allocation5 + $0x18] sm:$0xff]
        %v1300 = vld [vmem:[#allocation5 + $0x50] sm:$0xff]
        %v1301 = vld [vmem:[#allocation5 + $0x58] sm:$0xff]
        %v1302 = vld [vmem:[#allocation5 + $0x90] sm:$0xff]
        %v1303 = vld [vmem:[#allocation5 + $0x98] sm:$0xff]
        %v1304 = vld [vmem:[#allocation5 + $0xd0] sm:$0xff]
        %v1305 = vld [vmem:[#allocation5 + $0xd8] sm:$0xff]
        %v1306 = vld [vmem:[#allocation5 + $0x110] sm:$0xff]
        %v1307 = vld [vmem:[#allocation5 + $0x118] sm:$0xff]
        %v1308 = vld [vmem:[#allocation5 + $0x150] sm:$0xff]
        %v1309 = vld [vmem:[#allocation5 + $0x158] sm:$0xff]
        %v1310 = vld [vmem:[#allocation5 + $0x190] sm:$0xff]
        %v1311 = vld [vmem:[#allocation5 + $0x198] sm:$0xff]
        %v1312 = vld [vmem:[#allocation5 + $0x1d0] sm:$0xff]
        %v1313 = vld [vmem:[#allocation5 + $0x1d8] sm:$0xff]
        %v1314 = vld [vmem:[#allocation5 + $0x210] sm:$0xff]
        %v1315 = vld [vmem:[#allocation5 + $0x218] sm:$0xff]
        %v1316 = vld [vmem:[#allocation5 + $0x250] sm:$0xff]
        %v1317 = vld [vmem:[#allocation5 + $0x258] sm:$0xff]
        %v1318 = vld [vmem:[#allocation5 + $0x290] sm:$0xff]
        %v1319 = vld [vmem:[#allocation5 + $0x298] sm:$0xff]
        %v1320 = vld [vmem:[#allocation5 + $0x2d0] sm:$0xff]
        %v1321 = vld [vmem:[#allocation5 + $0x2d8] sm:$0xff]
        %v1322 = vld [vmem:[#allocation5 + $0x310] sm:$0xff]
        %v1323 = vld [vmem:[#allocation5 + $0x318] sm:$0xff]
        %v1324 = vld [vmem:[#allocation5 + $0x350] sm:$0xff]
        %v1325 = vld [vmem:[#allocation5 + $0x358] sm:$0xff]
        %v1326 = vld [vmem:[#allocation5 + $0x390] sm:$0xff]
        %v1327 = vld [vmem:[#allocation5 + $0x398] sm:$0xff]
        %v1328 = vld [vmem:[#allocation5 + $0x3d0] sm:$0xff]
        %v1329 = vld [vmem:[#allocation5 + $0x3d8] sm:$0xff]
        %1330 = vmatpush.msra.mxu0 %v1328
        %1331 = vmatpush.msra.mxu0 %v1326
        %1332 = vmatpush.msra.mxu0 %v1324
        %1333 = vmatpush.msra.mxu0 %v1322
        %1334 = vmatpush.msra.mxu0 %v1320
        %1335 = vmatpush.msra.mxu0 %v1318
        %1336 = vmatpush.msra.mxu0 %v1316
        %1337 = vmatpush.msra.mxu0 %v1314
        %1338 = vmatpush.msra.mxu0 %v1312
        %1339 = vmatpush.msra.mxu0 %v1310
        %1340 = vmatpush.msra.mxu0 %v1308
        %1341 = vmatpush.msra.mxu0 %v1306
        %1342 = vmatpush.msra.mxu0 %v1304
        %1343 = vmatpush.msra.mxu0 %v1302
        %1344 = vmatpush.msra.mxu0 %v1300
        %1345 = vmatpush.msra.mxu0 %v1298
        %1346 = vmatmul.f32.gmra.mxu0 %v270
        %v1347 = vpop.f32.mrf.mxu0
        %v1348 = vadd.f32 0.0, %v1347
        %1349 = vmatmul.f32.gmra.mxu0 %v271
        %v1350 = vpop.f32.mrf.mxu0
        %v1351 = vadd.f32 0.0, %v1350
        %1352 = vmatmul.f32.gmra.mxu0 %v272
        %v1353 = vpop.f32.mrf.mxu0
        %v1354 = vadd.f32 0.0, %v1353
        %1355 = vmatmul.f32.gmra.mxu0 %v273
        %v1356 = vpop.f32.mrf.mxu0
        %v1357 = vadd.f32 0.0, %v1356
        %1358 = vmatmul.f32.gmra.mxu0 %v274
        %v1359 = vpop.f32.mrf.mxu0
        %v1360 = vadd.f32 0.0, %v1359
        %1361 = vmatmul.f32.gmra.mxu0 %v275
        %v1362 = vpop.f32.mrf.mxu0
        %v1363 = vadd.f32 0.0, %v1362
        %1364 = vmatmul.f32.gmra.mxu0 %v276
        %v1365 = vpop.f32.mrf.mxu0
        %v1366 = vadd.f32 0.0, %v1365
        %1367 = vmatmul.f32.gmra.mxu0 %v277
        %v1368 = vpop.f32.mrf.mxu0
        %v1369 = vadd.f32 0.0, %v1368
        %1370 = vmatmul.f32.gmra.mxu0 %v278
        %v1371 = vpop.f32.mrf.mxu0
        %v1372 = vadd.f32 0.0, %v1371
        %1373 = vmatmul.f32.gmra.mxu0 %v279
        %v1374 = vpop.f32.mrf.mxu0
        %v1375 = vadd.f32 0.0, %v1374
        %1376 = vmatmul.f32.gmra.mxu0 %v280
        %v1377 = vpop.f32.mrf.mxu0
        %v1378 = vadd.f32 0.0, %v1377
        %1379 = vmatmul.f32.gmra.mxu0 %v281
        %v1380 = vpop.f32.mrf.mxu0
        %v1381 = vadd.f32 0.0, %v1380
        %1382 = vmatmul.f32.gmra.mxu0 %v282
        %v1383 = vpop.f32.mrf.mxu0
        %v1384 = vadd.f32 0.0, %v1383
        %1385 = vmatmul.f32.gmra.mxu0 %v283
        %v1386 = vpop.f32.mrf.mxu0
        %v1387 = vadd.f32 0.0, %v1386
        %1388 = vmatmul.f32.gmra.mxu0 %v284
        %v1389 = vpop.f32.mrf.mxu0
        %v1390 = vadd.f32 0.0, %v1389
        %1391 = vmatmul.f32.gmra.mxu0 %v285
        %v1392 = vpop.f32.mrf.mxu0
        %v1393 = vadd.f32 0.0, %v1392
        %1394 = vmatmul.f32.gmra.mxu0 %v286
        %v1395 = vpop.f32.mrf.mxu0
        %v1396 = vadd.f32 0.0, %v1395
        %1397 = vmatmul.f32.gmra.mxu0 %v287
        %v1398 = vpop.f32.mrf.mxu0
        %v1399 = vadd.f32 0.0, %v1398
        %1400 = vmatmul.f32.gmra.mxu0 %v288
        %v1401 = vpop.f32.mrf.mxu0
        %v1402 = vadd.f32 0.0, %v1401
        %1403 = vmatmul.f32.gmra.mxu0 %v289
        %v1404 = vpop.f32.mrf.mxu0
        %v1405 = vadd.f32 0.0, %v1404
        %1406 = vmatmul.f32.gmra.mxu0 %v290
        %v1407 = vpop.f32.mrf.mxu0
        %v1408 = vadd.f32 0.0, %v1407
        %1409 = vmatmul.f32.gmra.mxu0 %v291
        %v1410 = vpop.f32.mrf.mxu0
        %v1411 = vadd.f32 0.0, %v1410
        %1412 = vmatmul.f32.gmra.mxu0 %v292
        %v1413 = vpop.f32.mrf.mxu0
        %v1414 = vadd.f32 0.0, %v1413
        %1415 = vmatmul.f32.gmra.mxu0 %v293
        %v1416 = vpop.f32.mrf.mxu0
        %v1417 = vadd.f32 0.0, %v1416
        %1418 = vmatmul.f32.gmra.mxu0 %v294
        %v1419 = vpop.f32.mrf.mxu0
        %v1420 = vadd.f32 0.0, %v1419
        %1421 = vmatmul.f32.gmra.mxu0 %v295
        %v1422 = vpop.f32.mrf.mxu0
        %v1423 = vadd.f32 0.0, %v1422
        %1424 = vmatmul.f32.gmra.mxu0 %v296
        %v1425 = vpop.f32.mrf.mxu0
        %v1426 = vadd.f32 0.0, %v1425
        %1427 = vmatmul.f32.gmra.mxu0 %v297
        %v1428 = vpop.f32.mrf.mxu0
        %v1429 = vadd.f32 0.0, %v1428
        %1430 = vmatmul.f32.gmra.mxu0 %v298
        %v1431 = vpop.f32.mrf.mxu0
        %v1432 = vadd.f32 0.0, %v1431
        %1433 = vmatmul.f32.gmra.mxu0 %v299
        %v1434 = vpop.f32.mrf.mxu0
        %v1435 = vadd.f32 0.0, %v1434
        %1436 = vmatmul.f32.gmra.mxu0 %v300
        %v1437 = vpop.f32.mrf.mxu0
        %v1438 = vadd.f32 0.0, %v1437
        %1439 = vmatmul.f32.gmra.mxu0 %v301
        %v1440 = vpop.f32.mrf.mxu0
        %v1441 = vadd.f32 0.0, %v1440
        %1442 = vmatmul.f32.gmra.mxu0 %v302
        %v1443 = vpop.f32.mrf.mxu0
        %v1444 = vadd.f32 0.0, %v1443
        %1445 = vmatmul.f32.gmra.mxu0 %v303
        %v1446 = vpop.f32.mrf.mxu0
        %v1447 = vadd.f32 0.0, %v1446
        %1448 = vmatmul.f32.gmra.mxu0 %v304
        %v1449 = vpop.f32.mrf.mxu0
        %v1450 = vadd.f32 0.0, %v1449
        %1451 = vmatmul.f32.gmra.mxu0 %v305
        %v1452 = vpop.f32.mrf.mxu0
        %v1453 = vadd.f32 0.0, %v1452
        %1454 = vmatmul.f32.gmra.mxu0 %v306
        %v1455 = vpop.f32.mrf.mxu0
        %v1456 = vadd.f32 0.0, %v1455
        %1457 = vmatmul.f32.gmra.mxu0 %v307
        %v1458 = vpop.f32.mrf.mxu0
        %v1459 = vadd.f32 0.0, %v1458
        %1460 = vmatmul.f32.gmra.mxu0 %v308
        %v1461 = vpop.f32.mrf.mxu0
        %v1462 = vadd.f32 0.0, %v1461
        %1463 = vmatmul.f32.gmra.mxu0 %v309
        %v1464 = vpop.f32.mrf.mxu0
        %v1465 = vadd.f32 0.0, %v1464
        %1466 = vmatmul.f32.gmra.mxu0 %v310
        %v1467 = vpop.f32.mrf.mxu0
        %v1468 = vadd.f32 0.0, %v1467
        %1469 = vmatmul.f32.gmra.mxu0 %v311
        %v1470 = vpop.f32.mrf.mxu0
        %v1471 = vadd.f32 0.0, %v1470
        %1472 = vmatmul.f32.gmra.mxu0 %v312
        %v1473 = vpop.f32.mrf.mxu0
        %v1474 = vadd.f32 0.0, %v1473
        %1475 = vmatmul.f32.gmra.mxu0 %v313
        %v1476 = vpop.f32.mrf.mxu0
        %v1477 = vadd.f32 0.0, %v1476
        %1478 = vmatmul.f32.gmra.mxu0 %v314
        %v1479 = vpop.f32.mrf.mxu0
        %v1480 = vadd.f32 0.0, %v1479
        %1481 = vmatmul.f32.gmra.mxu0 %v315
        %v1482 = vpop.f32.mrf.mxu0
        %v1483 = vadd.f32 0.0, %v1482
        %1484 = vmatmul.f32.gmra.mxu0 %v316
        %v1485 = vpop.f32.mrf.mxu0
        %v1486 = vadd.f32 0.0, %v1485
        %1487 = vmatmul.f32.gmra.mxu0 %v317
        %v1488 = vpop.f32.mrf.mxu0
        %v1489 = vadd.f32 0.0, %v1488
        %1490 = vmatmul.f32.gmra.mxu0 %v318
        %v1491 = vpop.f32.mrf.mxu0
        %v1492 = vadd.f32 0.0, %v1491
        %1493 = vmatmul.f32.gmra.mxu0 %v319
        %v1494 = vpop.f32.mrf.mxu0
        %v1495 = vadd.f32 0.0, %v1494
        %1496 = vmatmul.f32.gmra.mxu0 %v320
        %v1497 = vpop.f32.mrf.mxu0
        %v1498 = vadd.f32 0.0, %v1497
        %1499 = vmatmul.f32.gmra.mxu0 %v321
        %v1500 = vpop.f32.mrf.mxu0
        %v1501 = vadd.f32 0.0, %v1500
        %1502 = vmatmul.f32.gmra.mxu0 %v322
        %v1503 = vpop.f32.mrf.mxu0
        %v1504 = vadd.f32 0.0, %v1503
        %1505 = vmatmul.f32.gmra.mxu0 %v323
        %v1506 = vpop.f32.mrf.mxu0
        %v1507 = vadd.f32 0.0, %v1506
        %1508 = vmatmul.f32.gmra.mxu0 %v324
        %v1509 = vpop.f32.mrf.mxu0
        %v1510 = vadd.f32 0.0, %v1509
        %1511 = vmatmul.f32.gmra.mxu0 %v325
        %v1512 = vpop.f32.mrf.mxu0
        %v1513 = vadd.f32 0.0, %v1512
        %1514 = vmatmul.f32.gmra.mxu0 %v326
        %v1515 = vpop.f32.mrf.mxu0
        %v1516 = vadd.f32 0.0, %v1515
        %1517 = vmatmul.f32.gmra.mxu0 %v327
        %v1518 = vpop.f32.mrf.mxu0
        %v1519 = vadd.f32 0.0, %v1518
        %1520 = vmatmul.f32.gmra.mxu0 %v328
        %v1521 = vpop.f32.mrf.mxu0
        %v1522 = vadd.f32 0.0, %v1521
        %1523 = vmatmul.f32.gmra.mxu0 %v329
        %v1524 = vpop.f32.mrf.mxu0
        %v1525 = vadd.f32 0.0, %v1524
        %1526 = vmatmul.f32.gmra.mxu0 %v330
        %v1527 = vpop.f32.mrf.mxu0
        %v1528 = vadd.f32 0.0, %v1527
        %1529 = vmatmul.f32.gmra.mxu0 %v331
        %v1530 = vpop.f32.mrf.mxu0
        %v1531 = vadd.f32 0.0, %v1530
        %1532 = vmatmul.f32.gmra.mxu0 %v332
        %v1533 = vpop.f32.mrf.mxu0
        %v1534 = vadd.f32 0.0, %v1533
        %1535 = vmatmul.f32.gmra.mxu0 %v333
        %v1536 = vpop.f32.mrf.mxu0
        %v1537 = vadd.f32 0.0, %v1536
        %1538 = vdwg.mxu0
        %1539 = vmatpush.msra.mxu0 %v1329
        %1540 = vmatpush.msra.mxu0 %v1327
        %1541 = vmatpush.msra.mxu0 %v1325
        %1542 = vmatpush.msra.mxu0 %v1323
        %1543 = vmatpush.msra.mxu0 %v1321
        %1544 = vmatpush.msra.mxu0 %v1319
        %1545 = vmatpush.msra.mxu0 %v1317
        %1546 = vmatpush.msra.mxu0 %v1315
        %1547 = vmatpush.msra.mxu0 %v1313
        %1548 = vmatpush.msra.mxu0 %v1311
        %1549 = vmatpush.msra.mxu0 %v1309
        %1550 = vmatpush.msra.mxu0 %v1307
        %1551 = vmatpush.msra.mxu0 %v1305
        %1552 = vmatpush.msra.mxu0 %v1303
        %1553 = vmatpush.msra.mxu0 %v1301
        %1554 = vmatpush.msra.mxu0 %v1299
        %1555 = vmatmul.f32.gmra.mxu0 %v270
        %v1556 = vpop.f32.mrf.mxu0
        %v1557 = vadd.f32 0.0, %v1556
        %1558 = vmatmul.f32.gmra.mxu0 %v271
        %v1559 = vpop.f32.mrf.mxu0
        %v1560 = vadd.f32 0.0, %v1559
        %1561 = vmatmul.f32.gmra.mxu0 %v272
        %v1562 = vpop.f32.mrf.mxu0
        %v1563 = vadd.f32 0.0, %v1562
        %1564 = vmatmul.f32.gmra.mxu0 %v273
        %v1565 = vpop.f32.mrf.mxu0
        %v1566 = vadd.f32 0.0, %v1565
        %1567 = vmatmul.f32.gmra.mxu0 %v274
        %v1568 = vpop.f32.mrf.mxu0
        %v1569 = vadd.f32 0.0, %v1568
        %1570 = vmatmul.f32.gmra.mxu0 %v275
        %v1571 = vpop.f32.mrf.mxu0
        %v1572 = vadd.f32 0.0, %v1571
        %1573 = vmatmul.f32.gmra.mxu0 %v276
        %v1574 = vpop.f32.mrf.mxu0
        %v1575 = vadd.f32 0.0, %v1574
        %1576 = vmatmul.f32.gmra.mxu0 %v277
        %v1577 = vpop.f32.mrf.mxu0
        %v1578 = vadd.f32 0.0, %v1577
        %1579 = vmatmul.f32.gmra.mxu0 %v278
        %v1580 = vpop.f32.mrf.mxu0
        %v1581 = vadd.f32 0.0, %v1580
        %1582 = vmatmul.f32.gmra.mxu0 %v279
        %v1583 = vpop.f32.mrf.mxu0
        %v1584 = vadd.f32 0.0, %v1583
        %1585 = vmatmul.f32.gmra.mxu0 %v280
        %v1586 = vpop.f32.mrf.mxu0
        %v1587 = vadd.f32 0.0, %v1586
        %1588 = vmatmul.f32.gmra.mxu0 %v281
        %v1589 = vpop.f32.mrf.mxu0
        %v1590 = vadd.f32 0.0, %v1589
        %1591 = vmatmul.f32.gmra.mxu0 %v282
        %v1592 = vpop.f32.mrf.mxu0
        %v1593 = vadd.f32 0.0, %v1592
        %1594 = vmatmul.f32.gmra.mxu0 %v283
        %v1595 = vpop.f32.mrf.mxu0
        %v1596 = vadd.f32 0.0, %v1595
        %1597 = vmatmul.f32.gmra.mxu0 %v284
        %v1598 = vpop.f32.mrf.mxu0
        %v1599 = vadd.f32 0.0, %v1598
        %1600 = vmatmul.f32.gmra.mxu0 %v285
        %v1601 = vpop.f32.mrf.mxu0
        %v1602 = vadd.f32 0.0, %v1601
        %1603 = vmatmul.f32.gmra.mxu0 %v286
        %v1604 = vpop.f32.mrf.mxu0
        %v1605 = vadd.f32 0.0, %v1604
        %1606 = vmatmul.f32.gmra.mxu0 %v287
        %v1607 = vpop.f32.mrf.mxu0
        %v1608 = vadd.f32 0.0, %v1607
        %1609 = vmatmul.f32.gmra.mxu0 %v288
        %v1610 = vpop.f32.mrf.mxu0
        %v1611 = vadd.f32 0.0, %v1610
        %1612 = vmatmul.f32.gmra.mxu0 %v289
        %v1613 = vpop.f32.mrf.mxu0
        %v1614 = vadd.f32 0.0, %v1613
        %1615 = vmatmul.f32.gmra.mxu0 %v290
        %v1616 = vpop.f32.mrf.mxu0
        %v1617 = vadd.f32 0.0, %v1616
        %1618 = vmatmul.f32.gmra.mxu0 %v291
        %v1619 = vpop.f32.mrf.mxu0
        %v1620 = vadd.f32 0.0, %v1619
        %1621 = vmatmul.f32.gmra.mxu0 %v292
        %v1622 = vpop.f32.mrf.mxu0
        %v1623 = vadd.f32 0.0, %v1622
        %1624 = vmatmul.f32.gmra.mxu0 %v293
        %v1625 = vpop.f32.mrf.mxu0
        %v1626 = vadd.f32 0.0, %v1625
        %1627 = vmatmul.f32.gmra.mxu0 %v294
        %v1628 = vpop.f32.mrf.mxu0
        %v1629 = vadd.f32 0.0, %v1628
        %1630 = vmatmul.f32.gmra.mxu0 %v295
        %v1631 = vpop.f32.mrf.mxu0
        %v1632 = vadd.f32 0.0, %v1631
        %1633 = vmatmul.f32.gmra.mxu0 %v296
        %v1634 = vpop.f32.mrf.mxu0
        %v1635 = vadd.f32 0.0, %v1634
        %1636 = vmatmul.f32.gmra.mxu0 %v297
        %v1637 = vpop.f32.mrf.mxu0
        %v1638 = vadd.f32 0.0, %v1637
        %1639 = vmatmul.f32.gmra.mxu0 %v298
        %v1640 = vpop.f32.mrf.mxu0
        %v1641 = vadd.f32 0.0, %v1640
        %1642 = vmatmul.f32.gmra.mxu0 %v299
        %v1643 = vpop.f32.mrf.mxu0
        %v1644 = vadd.f32 0.0, %v1643
        %1645 = vmatmul.f32.gmra.mxu0 %v300
        %v1646 = vpop.f32.mrf.mxu0
        %v1647 = vadd.f32 0.0, %v1646
        %1648 = vmatmul.f32.gmra.mxu0 %v301
        %v1649 = vpop.f32.mrf.mxu0
        %v1650 = vadd.f32 0.0, %v1649
        %1651 = vmatmul.f32.gmra.mxu0 %v302
        %v1652 = vpop.f32.mrf.mxu0
        %v1653 = vadd.f32 0.0, %v1652
        %1654 = vmatmul.f32.gmra.mxu0 %v303
        %v1655 = vpop.f32.mrf.mxu0
        %v1656 = vadd.f32 0.0, %v1655
        %1657 = vmatmul.f32.gmra.mxu0 %v304
        %v1658 = vpop.f32.mrf.mxu0
        %v1659 = vadd.f32 0.0, %v1658
        %1660 = vmatmul.f32.gmra.mxu0 %v305
        %v1661 = vpop.f32.mrf.mxu0
        %v1662 = vadd.f32 0.0, %v1661
        %1663 = vmatmul.f32.gmra.mxu0 %v306
        %v1664 = vpop.f32.mrf.mxu0
        %v1665 = vadd.f32 0.0, %v1664
        %1666 = vmatmul.f32.gmra.mxu0 %v307
        %v1667 = vpop.f32.mrf.mxu0
        %v1668 = vadd.f32 0.0, %v1667
        %1669 = vmatmul.f32.gmra.mxu0 %v308
        %v1670 = vpop.f32.mrf.mxu0
        %v1671 = vadd.f32 0.0, %v1670
        %1672 = vmatmul.f32.gmra.mxu0 %v309
        %v1673 = vpop.f32.mrf.mxu0
        %v1674 = vadd.f32 0.0, %v1673
        %1675 = vmatmul.f32.gmra.mxu0 %v310
        %v1676 = vpop.f32.mrf.mxu0
        %v1677 = vadd.f32 0.0, %v1676
        %1678 = vmatmul.f32.gmra.mxu0 %v311
        %v1679 = vpop.f32.mrf.mxu0
        %v1680 = vadd.f32 0.0, %v1679
        %1681 = vmatmul.f32.gmra.mxu0 %v312
        %v1682 = vpop.f32.mrf.mxu0
        %v1683 = vadd.f32 0.0, %v1682
        %1684 = vmatmul.f32.gmra.mxu0 %v313
        %v1685 = vpop.f32.mrf.mxu0
        %v1686 = vadd.f32 0.0, %v1685
        %1687 = vmatmul.f32.gmra.mxu0 %v314
        %v1688 = vpop.f32.mrf.mxu0
        %v1689 = vadd.f32 0.0, %v1688
        %1690 = vmatmul.f32.gmra.mxu0 %v315
        %v1691 = vpop.f32.mrf.mxu0
        %v1692 = vadd.f32 0.0, %v1691
        %1693 = vmatmul.f32.gmra.mxu0 %v316
        %v1694 = vpop.f32.mrf.mxu0
        %v1695 = vadd.f32 0.0, %v1694
        %1696 = vmatmul.f32.gmra.mxu0 %v317
        %v1697 = vpop.f32.mrf.mxu0
        %v1698 = vadd.f32 0.0, %v1697
        %1699 = vmatmul.f32.gmra.mxu0 %v318
        %v1700 = vpop.f32.mrf.mxu0
        %v1701 = vadd.f32 0.0, %v1700
        %1702 = vmatmul.f32.gmra.mxu0 %v319
        %v1703 = vpop.f32.mrf.mxu0
        %v1704 = vadd.f32 0.0, %v1703
        %1705 = vmatmul.f32.gmra.mxu0 %v320
        %v1706 = vpop.f32.mrf.mxu0
        %v1707 = vadd.f32 0.0, %v1706
        %1708 = vmatmul.f32.gmra.mxu0 %v321
        %v1709 = vpop.f32.mrf.mxu0
        %v1710 = vadd.f32 0.0, %v1709
        %1711 = vmatmul.f32.gmra.mxu0 %v322
        %v1712 = vpop.f32.mrf.mxu0
        %v1713 = vadd.f32 0.0, %v1712
        %1714 = vmatmul.f32.gmra.mxu0 %v323
        %v1715 = vpop.f32.mrf.mxu0
        %v1716 = vadd.f32 0.0, %v1715
        %1717 = vmatmul.f32.gmra.mxu0 %v324
        %v1718 = vpop.f32.mrf.mxu0
        %v1719 = vadd.f32 0.0, %v1718
        %1720 = vmatmul.f32.gmra.mxu0 %v325
        %v1721 = vpop.f32.mrf.mxu0
        %v1722 = vadd.f32 0.0, %v1721
        %1723 = vmatmul.f32.gmra.mxu0 %v326
        %v1724 = vpop.f32.mrf.mxu0
        %v1725 = vadd.f32 0.0, %v1724
        %1726 = vmatmul.f32.gmra.mxu0 %v327
        %v1727 = vpop.f32.mrf.mxu0
        %v1728 = vadd.f32 0.0, %v1727
        %1729 = vmatmul.f32.gmra.mxu0 %v328
        %v1730 = vpop.f32.mrf.mxu0
        %v1731 = vadd.f32 0.0, %v1730
        %1732 = vmatmul.f32.gmra.mxu0 %v329
        %v1733 = vpop.f32.mrf.mxu0
        %v1734 = vadd.f32 0.0, %v1733
        %1735 = vmatmul.f32.gmra.mxu0 %v330
        %v1736 = vpop.f32.mrf.mxu0
        %v1737 = vadd.f32 0.0, %v1736
        %1738 = vmatmul.f32.gmra.mxu0 %v331
        %v1739 = vpop.f32.mrf.mxu0
        %v1740 = vadd.f32 0.0, %v1739
        %1741 = vmatmul.f32.gmra.mxu0 %v332
        %v1742 = vpop.f32.mrf.mxu0
        %v1743 = vadd.f32 0.0, %v1742
        %1744 = vmatmul.f32.gmra.mxu0 %v333
        %v1745 = vpop.f32.mrf.mxu0
        %v1746 = vadd.f32 0.0, %v1745
        %1747 = vdwg.mxu0
        %v1748 = vmul.f32 %v1348, %v1557
        %v1749 = vmul.f32 %v1351, %v1560
        %v1750 = vmul.f32 %v1354, %v1563
        %v1751 = vmul.f32 %v1357, %v1566
        %v1752 = vmul.f32 %v1360, %v1569
        %v1753 = vmul.f32 %v1363, %v1572
        %v1754 = vmul.f32 %v1366, %v1575
        %v1755 = vmul.f32 %v1369, %v1578
        %v1756 = vmul.f32 %v1372, %v1581
        %v1757 = vmul.f32 %v1375, %v1584
        %v1758 = vmul.f32 %v1378, %v1587
        %v1759 = vmul.f32 %v1381, %v1590
        %v1760 = vmul.f32 %v1384, %v1593
        %v1761 = vmul.f32 %v1387, %v1596
        %v1762 = vmul.f32 %v1390, %v1599
        %v1763 = vmul.f32 %v1393, %v1602
        %v1764 = vmul.f32 %v1396, %v1605
        %v1765 = vmul.f32 %v1399, %v1608
        %v1766 = vmul.f32 %v1402, %v1611
        %v1767 = vmul.f32 %v1405, %v1614
        %v1768 = vmul.f32 %v1408, %v1617
        %v1769 = vmul.f32 %v1411, %v1620
        %v1770 = vmul.f32 %v1414, %v1623
        %v1771 = vmul.f32 %v1417, %v1626
        %v1772 = vmul.f32 %v1420, %v1629
        %v1773 = vmul.f32 %v1423, %v1632
        %v1774 = vmul.f32 %v1426, %v1635
        %v1775 = vmul.f32 %v1429, %v1638
        %v1776 = vmul.f32 %v1432, %v1641
        %v1777 = vmul.f32 %v1435, %v1644
        %v1778 = vmul.f32 %v1438, %v1647
        %v1779 = vmul.f32 %v1441, %v1650
        %v1780 = vmul.f32 %v1444, %v1653
        %v1781 = vmul.f32 %v1447, %v1656
        %v1782 = vmul.f32 %v1450, %v1659
        %v1783 = vmul.f32 %v1453, %v1662
        %v1784 = vmul.f32 %v1456, %v1665
        %v1785 = vmul.f32 %v1459, %v1668
        %v1786 = vmul.f32 %v1462, %v1671
        %v1787 = vmul.f32 %v1465, %v1674
        %v1788 = vmul.f32 %v1468, %v1677
        %v1789 = vmul.f32 %v1471, %v1680
        %v1790 = vmul.f32 %v1474, %v1683
        %v1791 = vmul.f32 %v1477, %v1686
        %v1792 = vmul.f32 %v1480, %v1689
        %v1793 = vmul.f32 %v1483, %v1692
        %v1794 = vmul.f32 %v1486, %v1695
        %v1795 = vmul.f32 %v1489, %v1698
        %v1796 = vmul.f32 %v1492, %v1701
        %v1797 = vmul.f32 %v1495, %v1704
        %v1798 = vmul.f32 %v1498, %v1707
        %v1799 = vmul.f32 %v1501, %v1710
        %v1800 = vmul.f32 %v1504, %v1713
        %v1801 = vmul.f32 %v1507, %v1716
        %v1802 = vmul.f32 %v1510, %v1719
        %v1803 = vmul.f32 %v1513, %v1722
        %v1804 = vmul.f32 %v1516, %v1725
        %v1805 = vmul.f32 %v1519, %v1728
        %v1806 = vmul.f32 %v1522, %v1731
        %v1807 = vmul.f32 %v1525, %v1734
        %v1808 = vmul.f32 %v1528, %v1737
        %v1809 = vmul.f32 %v1531, %v1740
        %v1810 = vmul.f32 %v1534, %v1743
        %v1811 = vmul.f32 %v1537, %v1746
        %v1812 = vld [vmem:[#allocation7 + $0x80] sm:$0xff]
        %v1813 = vld [vmem:[#allocation7 + $0x88] sm:$0xff]
        %v1814 = vld [vmem:[#allocation7 + $0x90] sm:$0xff]
        %v1815 = vld [vmem:[#allocation7 + $0x98] sm:$0xff]
        %v1816 = vld [vmem:[#allocation7 + $0xa0] sm:$0xff]
        %v1817 = vld [vmem:[#allocation7 + $0xa8] sm:$0xff]
        %v1818 = vld [vmem:[#allocation7 + $0xb0] sm:$0xff]
        %v1819 = vld [vmem:[#allocation7 + $0xb8] sm:$0xff]
        %v1820 = vld [vmem:[#allocation7 + $0xc0] sm:$0xff]
        %v1821 = vld [vmem:[#allocation7 + $0xc8] sm:$0xff]
        %v1822 = vld [vmem:[#allocation7 + $0xd0] sm:$0xff]
        %v1823 = vld [vmem:[#allocation7 + $0xd8] sm:$0xff]
        %v1824 = vld [vmem:[#allocation7 + $0xe0] sm:$0xff]
        %v1825 = vld [vmem:[#allocation7 + $0xe8] sm:$0xff]
        %v1826 = vld [vmem:[#allocation7 + $0xf0] sm:$0xff]
        %v1827 = vld [vmem:[#allocation7 + $0xf8] sm:$0xff]
        %1828 = vmatpush.msra.mxu0 %v1827
        %1829 = vmatpush.msra.mxu0 %v1826
        %1830 = vmatpush.msra.mxu0 %v1825
        %1831 = vmatpush.msra.mxu0 %v1824
        %1832 = vmatpush.msra.mxu0 %v1823
        %1833 = vmatpush.msra.mxu0 %v1822
        %1834 = vmatpush.msra.mxu0 %v1821
        %1835 = vmatpush.msra.mxu0 %v1820
        %1836 = vmatpush.msra.mxu0 %v1819
        %1837 = vmatpush.msra.mxu0 %v1818
        %1838 = vmatpush.msra.mxu0 %v1817
        %1839 = vmatpush.msra.mxu0 %v1816
        %1840 = vmatpush.msra.mxu0 %v1815
        %1841 = vmatpush.msra.mxu0 %v1814
        %1842 = vmatpush.msra.mxu0 %v1813
        %1843 = vmatpush.msra.mxu0 %v1812
        %1844 = vmatmul.f32.gmra.mxu0 %v1748
        %v1845 = vpop.f32.mrf.mxu0
        %v1846 = vadd.f32 0.0, %v1845
        %1847 = vmatmul.f32.gmra.mxu0 %v1749
        %v1848 = vpop.f32.mrf.mxu0
        %v1849 = vadd.f32 0.0, %v1848
        %1850 = vmatmul.f32.gmra.mxu0 %v1750
        %v1851 = vpop.f32.mrf.mxu0
        %v1852 = vadd.f32 0.0, %v1851
        %1853 = vmatmul.f32.gmra.mxu0 %v1751
        %v1854 = vpop.f32.mrf.mxu0
        %v1855 = vadd.f32 0.0, %v1854
        %1856 = vmatmul.f32.gmra.mxu0 %v1752
        %v1857 = vpop.f32.mrf.mxu0
        %v1858 = vadd.f32 0.0, %v1857
        %1859 = vmatmul.f32.gmra.mxu0 %v1753
        %v1860 = vpop.f32.mrf.mxu0
        %v1861 = vadd.f32 0.0, %v1860
        %1862 = vmatmul.f32.gmra.mxu0 %v1754
        %v1863 = vpop.f32.mrf.mxu0
        %v1864 = vadd.f32 0.0, %v1863
        %1865 = vmatmul.f32.gmra.mxu0 %v1755
        %v1866 = vpop.f32.mrf.mxu0
        %v1867 = vadd.f32 0.0, %v1866
        %1868 = vmatmul.f32.gmra.mxu0 %v1756
        %v1869 = vpop.f32.mrf.mxu0
        %v1870 = vadd.f32 0.0, %v1869
        %1871 = vmatmul.f32.gmra.mxu0 %v1757
        %v1872 = vpop.f32.mrf.mxu0
        %v1873 = vadd.f32 0.0, %v1872
        %1874 = vmatmul.f32.gmra.mxu0 %v1758
        %v1875 = vpop.f32.mrf.mxu0
        %v1876 = vadd.f32 0.0, %v1875
        %1877 = vmatmul.f32.gmra.mxu0 %v1759
        %v1878 = vpop.f32.mrf.mxu0
        %v1879 = vadd.f32 0.0, %v1878
        %1880 = vmatmul.f32.gmra.mxu0 %v1760
        %v1881 = vpop.f32.mrf.mxu0
        %v1882 = vadd.f32 0.0, %v1881
        %1883 = vmatmul.f32.gmra.mxu0 %v1761
        %v1884 = vpop.f32.mrf.mxu0
        %v1885 = vadd.f32 0.0, %v1884
        %1886 = vmatmul.f32.gmra.mxu0 %v1762
        %v1887 = vpop.f32.mrf.mxu0
        %v1888 = vadd.f32 0.0, %v1887
        %1889 = vmatmul.f32.gmra.mxu0 %v1763
        %v1890 = vpop.f32.mrf.mxu0
        %v1891 = vadd.f32 0.0, %v1890
        %1892 = vmatmul.f32.gmra.mxu0 %v1764
        %v1893 = vpop.f32.mrf.mxu0
        %v1894 = vadd.f32 0.0, %v1893
        %1895 = vmatmul.f32.gmra.mxu0 %v1765
        %v1896 = vpop.f32.mrf.mxu0
        %v1897 = vadd.f32 0.0, %v1896
        %1898 = vmatmul.f32.gmra.mxu0 %v1766
        %v1899 = vpop.f32.mrf.mxu0
        %v1900 = vadd.f32 0.0, %v1899
        %1901 = vmatmul.f32.gmra.mxu0 %v1767
        %v1902 = vpop.f32.mrf.mxu0
        %v1903 = vadd.f32 0.0, %v1902
        %1904 = vmatmul.f32.gmra.mxu0 %v1768
        %v1905 = vpop.f32.mrf.mxu0
        %v1906 = vadd.f32 0.0, %v1905
        %1907 = vmatmul.f32.gmra.mxu0 %v1769
        %v1908 = vpop.f32.mrf.mxu0
        %v1909 = vadd.f32 0.0, %v1908
        %1910 = vmatmul.f32.gmra.mxu0 %v1770
        %v1911 = vpop.f32.mrf.mxu0
        %v1912 = vadd.f32 0.0, %v1911
        %1913 = vmatmul.f32.gmra.mxu0 %v1771
        %v1914 = vpop.f32.mrf.mxu0
        %v1915 = vadd.f32 0.0, %v1914
        %1916 = vmatmul.f32.gmra.mxu0 %v1772
        %v1917 = vpop.f32.mrf.mxu0
        %v1918 = vadd.f32 0.0, %v1917
        %1919 = vmatmul.f32.gmra.mxu0 %v1773
        %v1920 = vpop.f32.mrf.mxu0
        %v1921 = vadd.f32 0.0, %v1920
        %1922 = vmatmul.f32.gmra.mxu0 %v1774
        %v1923 = vpop.f32.mrf.mxu0
        %v1924 = vadd.f32 0.0, %v1923
        %1925 = vmatmul.f32.gmra.mxu0 %v1775
        %v1926 = vpop.f32.mrf.mxu0
        %v1927 = vadd.f32 0.0, %v1926
        %1928 = vmatmul.f32.gmra.mxu0 %v1776
        %v1929 = vpop.f32.mrf.mxu0
        %v1930 = vadd.f32 0.0, %v1929
        %1931 = vmatmul.f32.gmra.mxu0 %v1777
        %v1932 = vpop.f32.mrf.mxu0
        %v1933 = vadd.f32 0.0, %v1932
        %1934 = vmatmul.f32.gmra.mxu0 %v1778
        %v1935 = vpop.f32.mrf.mxu0
        %v1936 = vadd.f32 0.0, %v1935
        %1937 = vmatmul.f32.gmra.mxu0 %v1779
        %v1938 = vpop.f32.mrf.mxu0
        %v1939 = vadd.f32 0.0, %v1938
        %1940 = vmatmul.f32.gmra.mxu0 %v1780
        %v1941 = vpop.f32.mrf.mxu0
        %v1942 = vadd.f32 0.0, %v1941
        %1943 = vmatmul.f32.gmra.mxu0 %v1781
        %v1944 = vpop.f32.mrf.mxu0
        %v1945 = vadd.f32 0.0, %v1944
        %1946 = vmatmul.f32.gmra.mxu0 %v1782
        %v1947 = vpop.f32.mrf.mxu0
        %v1948 = vadd.f32 0.0, %v1947
        %1949 = vmatmul.f32.gmra.mxu0 %v1783
        %v1950 = vpop.f32.mrf.mxu0
        %v1951 = vadd.f32 0.0, %v1950
        %1952 = vmatmul.f32.gmra.mxu0 %v1784
        %v1953 = vpop.f32.mrf.mxu0
        %v1954 = vadd.f32 0.0, %v1953
        %1955 = vmatmul.f32.gmra.mxu0 %v1785
        %v1956 = vpop.f32.mrf.mxu0
        %v1957 = vadd.f32 0.0, %v1956
        %1958 = vmatmul.f32.gmra.mxu0 %v1786
        %v1959 = vpop.f32.mrf.mxu0
        %v1960 = vadd.f32 0.0, %v1959
        %1961 = vmatmul.f32.gmra.mxu0 %v1787
        %v1962 = vpop.f32.mrf.mxu0
        %v1963 = vadd.f32 0.0, %v1962
        %1964 = vmatmul.f32.gmra.mxu0 %v1788
        %v1965 = vpop.f32.mrf.mxu0
        %v1966 = vadd.f32 0.0, %v1965
        %1967 = vmatmul.f32.gmra.mxu0 %v1789
        %v1968 = vpop.f32.mrf.mxu0
        %v1969 = vadd.f32 0.0, %v1968
        %1970 = vmatmul.f32.gmra.mxu0 %v1790
        %v1971 = vpop.f32.mrf.mxu0
        %v1972 = vadd.f32 0.0, %v1971
        %1973 = vmatmul.f32.gmra.mxu0 %v1791
        %v1974 = vpop.f32.mrf.mxu0
        %v1975 = vadd.f32 0.0, %v1974
        %1976 = vmatmul.f32.gmra.mxu0 %v1792
        %v1977 = vpop.f32.mrf.mxu0
        %v1978 = vadd.f32 0.0, %v1977
        %1979 = vmatmul.f32.gmra.mxu0 %v1793
        %v1980 = vpop.f32.mrf.mxu0
        %v1981 = vadd.f32 0.0, %v1980
        %1982 = vmatmul.f32.gmra.mxu0 %v1794
        %v1983 = vpop.f32.mrf.mxu0
        %v1984 = vadd.f32 0.0, %v1983
        %1985 = vmatmul.f32.gmra.mxu0 %v1795
        %v1986 = vpop.f32.mrf.mxu0
        %v1987 = vadd.f32 0.0, %v1986
        %1988 = vmatmul.f32.gmra.mxu0 %v1796
        %v1989 = vpop.f32.mrf.mxu0
        %v1990 = vadd.f32 0.0, %v1989
        %1991 = vmatmul.f32.gmra.mxu0 %v1797
        %v1992 = vpop.f32.mrf.mxu0
        %v1993 = vadd.f32 0.0, %v1992
        %1994 = vmatmul.f32.gmra.mxu0 %v1798
        %v1995 = vpop.f32.mrf.mxu0
        %v1996 = vadd.f32 0.0, %v1995
        %1997 = vmatmul.f32.gmra.mxu0 %v1799
        %v1998 = vpop.f32.mrf.mxu0
        %v1999 = vadd.f32 0.0, %v1998
        %2000 = vmatmul.f32.gmra.mxu0 %v1800
        %v2001 = vpop.f32.mrf.mxu0
        %v2002 = vadd.f32 0.0, %v2001
        %2003 = vmatmul.f32.gmra.mxu0 %v1801
        %v2004 = vpop.f32.mrf.mxu0
        %v2005 = vadd.f32 0.0, %v2004
        %2006 = vmatmul.f32.gmra.mxu0 %v1802
        %v2007 = vpop.f32.mrf.mxu0
        %v2008 = vadd.f32 0.0, %v2007
        %2009 = vmatmul.f32.gmra.mxu0 %v1803
        %v2010 = vpop.f32.mrf.mxu0
        %v2011 = vadd.f32 0.0, %v2010
        %2012 = vmatmul.f32.gmra.mxu0 %v1804
        %v2013 = vpop.f32.mrf.mxu0
        %v2014 = vadd.f32 0.0, %v2013
        %2015 = vmatmul.f32.gmra.mxu0 %v1805
        %v2016 = vpop.f32.mrf.mxu0
        %v2017 = vadd.f32 0.0, %v2016
        %2018 = vmatmul.f32.gmra.mxu0 %v1806
        %v2019 = vpop.f32.mrf.mxu0
        %v2020 = vadd.f32 0.0, %v2019
        %2021 = vmatmul.f32.gmra.mxu0 %v1807
        %v2022 = vpop.f32.mrf.mxu0
        %v2023 = vadd.f32 0.0, %v2022
        %2024 = vmatmul.f32.gmra.mxu0 %v1808
        %v2025 = vpop.f32.mrf.mxu0
        %v2026 = vadd.f32 0.0, %v2025
        %2027 = vmatmul.f32.gmra.mxu0 %v1809
        %v2028 = vpop.f32.mrf.mxu0
        %v2029 = vadd.f32 0.0, %v2028
        %2030 = vmatmul.f32.gmra.mxu0 %v1810
        %v2031 = vpop.f32.mrf.mxu0
        %v2032 = vadd.f32 0.0, %v2031
        %2033 = vmatmul.f32.gmra.mxu0 %v1811
        %v2034 = vpop.f32.mrf.mxu0
        %v2035 = vadd.f32 0.0, %v2034
        %2036 = vdwg.mxu0
        %v2037 = vadd.f32 %v1107, %v1846
        %v2038 = vadd.f32 %v1110, %v1849
        %v2039 = vadd.f32 %v1113, %v1852
        %v2040 = vadd.f32 %v1116, %v1855
        %v2041 = vadd.f32 %v1119, %v1858
        %v2042 = vadd.f32 %v1122, %v1861
        %v2043 = vadd.f32 %v1125, %v1864
        %v2044 = vadd.f32 %v1128, %v1867
        %v2045 = vadd.f32 %v1131, %v1870
        %v2046 = vadd.f32 %v1134, %v1873
        %v2047 = vadd.f32 %v1137, %v1876
        %v2048 = vadd.f32 %v1140, %v1879
        %v2049 = vadd.f32 %v1143, %v1882
        %v2050 = vadd.f32 %v1146, %v1885
        %v2051 = vadd.f32 %v1149, %v1888
        %v2052 = vadd.f32 %v1152, %v1891
        %v2053 = vadd.f32 %v1155, %v1894
        %v2054 = vadd.f32 %v1158, %v1897
        %v2055 = vadd.f32 %v1161, %v1900
        %v2056 = vadd.f32 %v1164, %v1903
        %v2057 = vadd.f32 %v1167, %v1906
        %v2058 = vadd.f32 %v1170, %v1909
        %v2059 = vadd.f32 %v1173, %v1912
        %v2060 = vadd.f32 %v1176, %v1915
        %v2061 = vadd.f32 %v1179, %v1918
        %v2062 = vadd.f32 %v1182, %v1921
        %v2063 = vadd.f32 %v1185, %v1924
        %v2064 = vadd.f32 %v1188, %v1927
        %v2065 = vadd.f32 %v1191, %v1930
        %v2066 = vadd.f32 %v1194, %v1933
        %v2067 = vadd.f32 %v1197, %v1936
        %v2068 = vadd.f32 %v1200, %v1939
        %v2069 = vadd.f32 %v1203, %v1942
        %v2070 = vadd.f32 %v1206, %v1945
        %v2071 = vadd.f32 %v1209, %v1948
        %v2072 = vadd.f32 %v1212, %v1951
        %v2073 = vadd.f32 %v1215, %v1954
        %v2074 = vadd.f32 %v1218, %v1957
        %v2075 = vadd.f32 %v1221, %v1960
        %v2076 = vadd.f32 %v1224, %v1963
        %v2077 = vadd.f32 %v1227, %v1966
        %v2078 = vadd.f32 %v1230, %v1969
        %v2079 = vadd.f32 %v1233, %v1972
        %v2080 = vadd.f32 %v1236, %v1975
        %v2081 = vadd.f32 %v1239, %v1978
        %v2082 = vadd.f32 %v1242, %v1981
        %v2083 = vadd.f32 %v1245, %v1984
        %v2084 = vadd.f32 %v1248, %v1987
        %v2085 = vadd.f32 %v1251, %v1990
        %v2086 = vadd.f32 %v1254, %v1993
        %v2087 = vadd.f32 %v1257, %v1996
        %v2088 = vadd.f32 %v1260, %v1999
        %v2089 = vadd.f32 %v1263, %v2002
        %v2090 = vadd.f32 %v1266, %v2005
        %v2091 = vadd.f32 %v1269, %v2008
        %v2092 = vadd.f32 %v1272, %v2011
        %v2093 = vadd.f32 %v1275, %v2014
        %v2094 = vadd.f32 %v1278, %v2017
        %v2095 = vadd.f32 %v1281, %v2020
        %v2096 = vadd.f32 %v1284, %v2023
        %v2097 = vadd.f32 %v1287, %v2026
        %v2098 = vadd.f32 %v1290, %v2029
        %v2099 = vadd.f32 %v1293, %v2032
        %v2100 = vadd.f32 %v1296, %v2035
        %v2101 = vld [vmem:[#allocation5 + $0x20] sm:$0xff]
        %v2102 = vld [vmem:[#allocation5 + $0x28] sm:$0xff]
        %v2103 = vld [vmem:[#allocation5 + $0x60] sm:$0xff]
        %v2104 = vld [vmem:[#allocation5 + $0x68] sm:$0xff]
        %v2105 = vld [vmem:[#allocation5 + $0xa0] sm:$0xff]
        %v2106 = vld [vmem:[#allocation5 + $0xa8] sm:$0xff]
        %v2107 = vld [vmem:[#allocation5 + $0xe0] sm:$0xff]
        %v2108 = vld [vmem:[#allocation5 + $0xe8] sm:$0xff]
        %v2109 = vld [vmem:[#allocation5 + $0x120] sm:$0xff]
        %v2110 = vld [vmem:[#allocation5 + $0x128] sm:$0xff]
        %v2111 = vld [vmem:[#allocation5 + $0x160] sm:$0xff]
        %v2112 = vld [vmem:[#allocation5 + $0x168] sm:$0xff]
        %v2113 = vld [vmem:[#allocation5 + $0x1a0] sm:$0xff]
        %v2114 = vld [vmem:[#allocation5 + $0x1a8] sm:$0xff]
        %v2115 = vld [vmem:[#allocation5 + $0x1e0] sm:$0xff]
        %v2116 = vld [vmem:[#allocation5 + $0x1e8] sm:$0xff]
        %v2117 = vld [vmem:[#allocation5 + $0x220] sm:$0xff]
        %v2118 = vld [vmem:[#allocation5 + $0x228] sm:$0xff]
        %v2119 = vld [vmem:[#allocation5 + $0x260] sm:$0xff]
        %v2120 = vld [vmem:[#allocation5 + $0x268] sm:$0xff]
        %v2121 = vld [vmem:[#allocation5 + $0x2a0] sm:$0xff]
        %v2122 = vld [vmem:[#allocation5 + $0x2a8] sm:$0xff]
        %v2123 = vld [vmem:[#allocation5 + $0x2e0] sm:$0xff]
        %v2124 = vld [vmem:[#allocation5 + $0x2e8] sm:$0xff]
        %v2125 = vld [vmem:[#allocation5 + $0x320] sm:$0xff]
        %v2126 = vld [vmem:[#allocation5 + $0x328] sm:$0xff]
        %v2127 = vld [vmem:[#allocation5 + $0x360] sm:$0xff]
        %v2128 = vld [vmem:[#allocation5 + $0x368] sm:$0xff]
        %v2129 = vld [vmem:[#allocation5 + $0x3a0] sm:$0xff]
        %v2130 = vld [vmem:[#allocation5 + $0x3a8] sm:$0xff]
        %v2131 = vld [vmem:[#allocation5 + $0x3e0] sm:$0xff]
        %v2132 = vld [vmem:[#allocation5 + $0x3e8] sm:$0xff]
        %2133 = vmatpush.msra.mxu0 %v2131
        %2134 = vmatpush.msra.mxu0 %v2129
        %2135 = vmatpush.msra.mxu0 %v2127
        %2136 = vmatpush.msra.mxu0 %v2125
        %2137 = vmatpush.msra.mxu0 %v2123
        %2138 = vmatpush.msra.mxu0 %v2121
        %2139 = vmatpush.msra.mxu0 %v2119
        %2140 = vmatpush.msra.mxu0 %v2117
        %2141 = vmatpush.msra.mxu0 %v2115
        %2142 = vmatpush.msra.mxu0 %v2113
        %2143 = vmatpush.msra.mxu0 %v2111
        %2144 = vmatpush.msra.mxu0 %v2109
        %2145 = vmatpush.msra.mxu0 %v2107
        %2146 = vmatpush.msra.mxu0 %v2105
        %2147 = vmatpush.msra.mxu0 %v2103
        %2148 = vmatpush.msra.mxu0 %v2101
        %2149 = vmatmul.f32.gmra.mxu0 %v270
        %v2150 = vpop.f32.mrf.mxu0
        %v2151 = vadd.f32 0.0, %v2150
        %2152 = vmatmul.f32.gmra.mxu0 %v271
        %v2153 = vpop.f32.mrf.mxu0
        %v2154 = vadd.f32 0.0, %v2153
        %2155 = vmatmul.f32.gmra.mxu0 %v272
        %v2156 = vpop.f32.mrf.mxu0
        %v2157 = vadd.f32 0.0, %v2156
        %2158 = vmatmul.f32.gmra.mxu0 %v273
        %v2159 = vpop.f32.mrf.mxu0
        %v2160 = vadd.f32 0.0, %v2159
        %2161 = vmatmul.f32.gmra.mxu0 %v274
        %v2162 = vpop.f32.mrf.mxu0
        %v2163 = vadd.f32 0.0, %v2162
        %2164 = vmatmul.f32.gmra.mxu0 %v275
        %v2165 = vpop.f32.mrf.mxu0
        %v2166 = vadd.f32 0.0, %v2165
        %2167 = vmatmul.f32.gmra.mxu0 %v276
        %v2168 = vpop.f32.mrf.mxu0
        %v2169 = vadd.f32 0.0, %v2168
        %2170 = vmatmul.f32.gmra.mxu0 %v277
        %v2171 = vpop.f32.mrf.mxu0
        %v2172 = vadd.f32 0.0, %v2171
        %2173 = vmatmul.f32.gmra.mxu0 %v278
        %v2174 = vpop.f32.mrf.mxu0
        %v2175 = vadd.f32 0.0, %v2174
        %2176 = vmatmul.f32.gmra.mxu0 %v279
        %v2177 = vpop.f32.mrf.mxu0
        %v2178 = vadd.f32 0.0, %v2177
        %2179 = vmatmul.f32.gmra.mxu0 %v280
        %v2180 = vpop.f32.mrf.mxu0
        %v2181 = vadd.f32 0.0, %v2180
        %2182 = vmatmul.f32.gmra.mxu0 %v281
        %v2183 = vpop.f32.mrf.mxu0
        %v2184 = vadd.f32 0.0, %v2183
        %2185 = vmatmul.f32.gmra.mxu0 %v282
        %v2186 = vpop.f32.mrf.mxu0
        %v2187 = vadd.f32 0.0, %v2186
        %2188 = vmatmul.f32.gmra.mxu0 %v283
        %v2189 = vpop.f32.mrf.mxu0
        %v2190 = vadd.f32 0.0, %v2189
        %2191 = vmatmul.f32.gmra.mxu0 %v284
        %v2192 = vpop.f32.mrf.mxu0
        %v2193 = vadd.f32 0.0, %v2192
        %2194 = vmatmul.f32.gmra.mxu0 %v285
        %v2195 = vpop.f32.mrf.mxu0
        %v2196 = vadd.f32 0.0, %v2195
        %2197 = vmatmul.f32.gmra.mxu0 %v286
        %v2198 = vpop.f32.mrf.mxu0
        %v2199 = vadd.f32 0.0, %v2198
        %2200 = vmatmul.f32.gmra.mxu0 %v287
        %v2201 = vpop.f32.mrf.mxu0
        %v2202 = vadd.f32 0.0, %v2201
        %2203 = vmatmul.f32.gmra.mxu0 %v288
        %v2204 = vpop.f32.mrf.mxu0
        %v2205 = vadd.f32 0.0, %v2204
        %2206 = vmatmul.f32.gmra.mxu0 %v289
        %v2207 = vpop.f32.mrf.mxu0
        %v2208 = vadd.f32 0.0, %v2207
        %2209 = vmatmul.f32.gmra.mxu0 %v290
        %v2210 = vpop.f32.mrf.mxu0
        %v2211 = vadd.f32 0.0, %v2210
        %2212 = vmatmul.f32.gmra.mxu0 %v291
        %v2213 = vpop.f32.mrf.mxu0
        %v2214 = vadd.f32 0.0, %v2213
        %2215 = vmatmul.f32.gmra.mxu0 %v292
        %v2216 = vpop.f32.mrf.mxu0
        %v2217 = vadd.f32 0.0, %v2216
        %2218 = vmatmul.f32.gmra.mxu0 %v293
        %v2219 = vpop.f32.mrf.mxu0
        %v2220 = vadd.f32 0.0, %v2219
        %2221 = vmatmul.f32.gmra.mxu0 %v294
        %v2222 = vpop.f32.mrf.mxu0
        %v2223 = vadd.f32 0.0, %v2222
        %2224 = vmatmul.f32.gmra.mxu0 %v295
        %v2225 = vpop.f32.mrf.mxu0
        %v2226 = vadd.f32 0.0, %v2225
        %2227 = vmatmul.f32.gmra.mxu0 %v296
        %v2228 = vpop.f32.mrf.mxu0
        %v2229 = vadd.f32 0.0, %v2228
        %2230 = vmatmul.f32.gmra.mxu0 %v297
        %v2231 = vpop.f32.mrf.mxu0
        %v2232 = vadd.f32 0.0, %v2231
        %2233 = vmatmul.f32.gmra.mxu0 %v298
        %v2234 = vpop.f32.mrf.mxu0
        %v2235 = vadd.f32 0.0, %v2234
        %2236 = vmatmul.f32.gmra.mxu0 %v299
        %v2237 = vpop.f32.mrf.mxu0
        %v2238 = vadd.f32 0.0, %v2237
        %2239 = vmatmul.f32.gmra.mxu0 %v300
        %v2240 = vpop.f32.mrf.mxu0
        %v2241 = vadd.f32 0.0, %v2240
        %2242 = vmatmul.f32.gmra.mxu0 %v301
        %v2243 = vpop.f32.mrf.mxu0
        %v2244 = vadd.f32 0.0, %v2243
        %2245 = vmatmul.f32.gmra.mxu0 %v302
        %v2246 = vpop.f32.mrf.mxu0
        %v2247 = vadd.f32 0.0, %v2246
        %2248 = vmatmul.f32.gmra.mxu0 %v303
        %v2249 = vpop.f32.mrf.mxu0
        %v2250 = vadd.f32 0.0, %v2249
        %2251 = vmatmul.f32.gmra.mxu0 %v304
        %v2252 = vpop.f32.mrf.mxu0
        %v2253 = vadd.f32 0.0, %v2252
        %2254 = vmatmul.f32.gmra.mxu0 %v305
        %v2255 = vpop.f32.mrf.mxu0
        %v2256 = vadd.f32 0.0, %v2255
        %2257 = vmatmul.f32.gmra.mxu0 %v306
        %v2258 = vpop.f32.mrf.mxu0
        %v2259 = vadd.f32 0.0, %v2258
        %2260 = vmatmul.f32.gmra.mxu0 %v307
        %v2261 = vpop.f32.mrf.mxu0
        %v2262 = vadd.f32 0.0, %v2261
        %2263 = vmatmul.f32.gmra.mxu0 %v308
        %v2264 = vpop.f32.mrf.mxu0
        %v2265 = vadd.f32 0.0, %v2264
        %2266 = vmatmul.f32.gmra.mxu0 %v309
        %v2267 = vpop.f32.mrf.mxu0
        %v2268 = vadd.f32 0.0, %v2267
        %2269 = vmatmul.f32.gmra.mxu0 %v310
        %v2270 = vpop.f32.mrf.mxu0
        %v2271 = vadd.f32 0.0, %v2270
        %2272 = vmatmul.f32.gmra.mxu0 %v311
        %v2273 = vpop.f32.mrf.mxu0
        %v2274 = vadd.f32 0.0, %v2273
        %2275 = vmatmul.f32.gmra.mxu0 %v312
        %v2276 = vpop.f32.mrf.mxu0
        %v2277 = vadd.f32 0.0, %v2276
        %2278 = vmatmul.f32.gmra.mxu0 %v313
        %v2279 = vpop.f32.mrf.mxu0
        %v2280 = vadd.f32 0.0, %v2279
        %2281 = vmatmul.f32.gmra.mxu0 %v314
        %v2282 = vpop.f32.mrf.mxu0
        %v2283 = vadd.f32 0.0, %v2282
        %2284 = vmatmul.f32.gmra.mxu0 %v315
        %v2285 = vpop.f32.mrf.mxu0
        %v2286 = vadd.f32 0.0, %v2285
        %2287 = vmatmul.f32.gmra.mxu0 %v316
        %v2288 = vpop.f32.mrf.mxu0
        %v2289 = vadd.f32 0.0, %v2288
        %2290 = vmatmul.f32.gmra.mxu0 %v317
        %v2291 = vpop.f32.mrf.mxu0
        %v2292 = vadd.f32 0.0, %v2291
        %2293 = vmatmul.f32.gmra.mxu0 %v318
        %v2294 = vpop.f32.mrf.mxu0
        %v2295 = vadd.f32 0.0, %v2294
        %2296 = vmatmul.f32.gmra.mxu0 %v319
        %v2297 = vpop.f32.mrf.mxu0
        %v2298 = vadd.f32 0.0, %v2297
        %2299 = vmatmul.f32.gmra.mxu0 %v320
        %v2300 = vpop.f32.mrf.mxu0
        %v2301 = vadd.f32 0.0, %v2300
        %2302 = vmatmul.f32.gmra.mxu0 %v321
        %v2303 = vpop.f32.mrf.mxu0
        %v2304 = vadd.f32 0.0, %v2303
        %2305 = vmatmul.f32.gmra.mxu0 %v322
        %v2306 = vpop.f32.mrf.mxu0
        %v2307 = vadd.f32 0.0, %v2306
        %2308 = vmatmul.f32.gmra.mxu0 %v323
        %v2309 = vpop.f32.mrf.mxu0
        %v2310 = vadd.f32 0.0, %v2309
        %2311 = vmatmul.f32.gmra.mxu0 %v324
        %v2312 = vpop.f32.mrf.mxu0
        %v2313 = vadd.f32 0.0, %v2312
        %2314 = vmatmul.f32.gmra.mxu0 %v325
        %v2315 = vpop.f32.mrf.mxu0
        %v2316 = vadd.f32 0.0, %v2315
        %2317 = vmatmul.f32.gmra.mxu0 %v326
        %v2318 = vpop.f32.mrf.mxu0
        %v2319 = vadd.f32 0.0, %v2318
        %2320 = vmatmul.f32.gmra.mxu0 %v327
        %v2321 = vpop.f32.mrf.mxu0
        %v2322 = vadd.f32 0.0, %v2321
        %2323 = vmatmul.f32.gmra.mxu0 %v328
        %v2324 = vpop.f32.mrf.mxu0
        %v2325 = vadd.f32 0.0, %v2324
        %2326 = vmatmul.f32.gmra.mxu0 %v329
        %v2327 = vpop.f32.mrf.mxu0
        %v2328 = vadd.f32 0.0, %v2327
        %2329 = vmatmul.f32.gmra.mxu0 %v330
        %v2330 = vpop.f32.mrf.mxu0
        %v2331 = vadd.f32 0.0, %v2330
        %2332 = vmatmul.f32.gmra.mxu0 %v331
        %v2333 = vpop.f32.mrf.mxu0
        %v2334 = vadd.f32 0.0, %v2333
        %2335 = vmatmul.f32.gmra.mxu0 %v332
        %v2336 = vpop.f32.mrf.mxu0
        %v2337 = vadd.f32 0.0, %v2336
        %2338 = vmatmul.f32.gmra.mxu0 %v333
        %v2339 = vpop.f32.mrf.mxu0
        %v2340 = vadd.f32 0.0, %v2339
        %2341 = vdwg.mxu0
        %2342 = vmatpush.msra.mxu0 %v2132
        %2343 = vmatpush.msra.mxu0 %v2130
        %2344 = vmatpush.msra.mxu0 %v2128
        %2345 = vmatpush.msra.mxu0 %v2126
        %2346 = vmatpush.msra.mxu0 %v2124
        %2347 = vmatpush.msra.mxu0 %v2122
        %2348 = vmatpush.msra.mxu0 %v2120
        %2349 = vmatpush.msra.mxu0 %v2118
        %2350 = vmatpush.msra.mxu0 %v2116
        %2351 = vmatpush.msra.mxu0 %v2114
        %2352 = vmatpush.msra.mxu0 %v2112
        %2353 = vmatpush.msra.mxu0 %v2110
        %2354 = vmatpush.msra.mxu0 %v2108
        %2355 = vmatpush.msra.mxu0 %v2106
        %2356 = vmatpush.msra.mxu0 %v2104
        %2357 = vmatpush.msra.mxu0 %v2102
        %2358 = vmatmul.f32.gmra.mxu0 %v270
        %v2359 = vpop.f32.mrf.mxu0
        %v2360 = vadd.f32 0.0, %v2359
        %2361 = vmatmul.f32.gmra.mxu0 %v271
        %v2362 = vpop.f32.mrf.mxu0
        %v2363 = vadd.f32 0.0, %v2362
        %2364 = vmatmul.f32.gmra.mxu0 %v272
        %v2365 = vpop.f32.mrf.mxu0
        %v2366 = vadd.f32 0.0, %v2365
        %2367 = vmatmul.f32.gmra.mxu0 %v273
        %v2368 = vpop.f32.mrf.mxu0
        %v2369 = vadd.f32 0.0, %v2368
        %2370 = vmatmul.f32.gmra.mxu0 %v274
        %v2371 = vpop.f32.mrf.mxu0
        %v2372 = vadd.f32 0.0, %v2371
        %2373 = vmatmul.f32.gmra.mxu0 %v275
        %v2374 = vpop.f32.mrf.mxu0
        %v2375 = vadd.f32 0.0, %v2374
        %2376 = vmatmul.f32.gmra.mxu0 %v276
        %v2377 = vpop.f32.mrf.mxu0
        %v2378 = vadd.f32 0.0, %v2377
        %2379 = vmatmul.f32.gmra.mxu0 %v277
        %v2380 = vpop.f32.mrf.mxu0
        %v2381 = vadd.f32 0.0, %v2380
        %2382 = vmatmul.f32.gmra.mxu0 %v278
        %v2383 = vpop.f32.mrf.mxu0
        %v2384 = vadd.f32 0.0, %v2383
        %2385 = vmatmul.f32.gmra.mxu0 %v279
        %v2386 = vpop.f32.mrf.mxu0
        %v2387 = vadd.f32 0.0, %v2386
        %2388 = vmatmul.f32.gmra.mxu0 %v280
        %v2389 = vpop.f32.mrf.mxu0
        %v2390 = vadd.f32 0.0, %v2389
        %2391 = vmatmul.f32.gmra.mxu0 %v281
        %v2392 = vpop.f32.mrf.mxu0
        %v2393 = vadd.f32 0.0, %v2392
        %2394 = vmatmul.f32.gmra.mxu0 %v282
        %v2395 = vpop.f32.mrf.mxu0
        %v2396 = vadd.f32 0.0, %v2395
        %2397 = vmatmul.f32.gmra.mxu0 %v283
        %v2398 = vpop.f32.mrf.mxu0
        %v2399 = vadd.f32 0.0, %v2398
        %2400 = vmatmul.f32.gmra.mxu0 %v284
        %v2401 = vpop.f32.mrf.mxu0
        %v2402 = vadd.f32 0.0, %v2401
        %2403 = vmatmul.f32.gmra.mxu0 %v285
        %v2404 = vpop.f32.mrf.mxu0
        %v2405 = vadd.f32 0.0, %v2404
        %2406 = vmatmul.f32.gmra.mxu0 %v286
        %v2407 = vpop.f32.mrf.mxu0
        %v2408 = vadd.f32 0.0, %v2407
        %2409 = vmatmul.f32.gmra.mxu0 %v287
        %v2410 = vpop.f32.mrf.mxu0
        %v2411 = vadd.f32 0.0, %v2410
        %2412 = vmatmul.f32.gmra.mxu0 %v288
        %v2413 = vpop.f32.mrf.mxu0
        %v2414 = vadd.f32 0.0, %v2413
        %2415 = vmatmul.f32.gmra.mxu0 %v289
        %v2416 = vpop.f32.mrf.mxu0
        %v2417 = vadd.f32 0.0, %v2416
        %2418 = vmatmul.f32.gmra.mxu0 %v290
        %v2419 = vpop.f32.mrf.mxu0
        %v2420 = vadd.f32 0.0, %v2419
        %2421 = vmatmul.f32.gmra.mxu0 %v291
        %v2422 = vpop.f32.mrf.mxu0
        %v2423 = vadd.f32 0.0, %v2422
        %2424 = vmatmul.f32.gmra.mxu0 %v292
        %v2425 = vpop.f32.mrf.mxu0
        %v2426 = vadd.f32 0.0, %v2425
        %2427 = vmatmul.f32.gmra.mxu0 %v293
        %v2428 = vpop.f32.mrf.mxu0
        %v2429 = vadd.f32 0.0, %v2428
        %2430 = vmatmul.f32.gmra.mxu0 %v294
        %v2431 = vpop.f32.mrf.mxu0
        %v2432 = vadd.f32 0.0, %v2431
        %2433 = vmatmul.f32.gmra.mxu0 %v295
        %v2434 = vpop.f32.mrf.mxu0
        %v2435 = vadd.f32 0.0, %v2434
        %2436 = vmatmul.f32.gmra.mxu0 %v296
        %v2437 = vpop.f32.mrf.mxu0
        %v2438 = vadd.f32 0.0, %v2437
        %2439 = vmatmul.f32.gmra.mxu0 %v297
        %v2440 = vpop.f32.mrf.mxu0
        %v2441 = vadd.f32 0.0, %v2440
        %2442 = vmatmul.f32.gmra.mxu0 %v298
        %v2443 = vpop.f32.mrf.mxu0
        %v2444 = vadd.f32 0.0, %v2443
        %2445 = vmatmul.f32.gmra.mxu0 %v299
        %v2446 = vpop.f32.mrf.mxu0
        %v2447 = vadd.f32 0.0, %v2446
        %2448 = vmatmul.f32.gmra.mxu0 %v300
        %v2449 = vpop.f32.mrf.mxu0
        %v2450 = vadd.f32 0.0, %v2449
        %2451 = vmatmul.f32.gmra.mxu0 %v301
        %v2452 = vpop.f32.mrf.mxu0
        %v2453 = vadd.f32 0.0, %v2452
        %2454 = vmatmul.f32.gmra.mxu0 %v302
        %v2455 = vpop.f32.mrf.mxu0
        %v2456 = vadd.f32 0.0, %v2455
        %2457 = vmatmul.f32.gmra.mxu0 %v303
        %v2458 = vpop.f32.mrf.mxu0
        %v2459 = vadd.f32 0.0, %v2458
        %2460 = vmatmul.f32.gmra.mxu0 %v304
        %v2461 = vpop.f32.mrf.mxu0
        %v2462 = vadd.f32 0.0, %v2461
        %2463 = vmatmul.f32.gmra.mxu0 %v305
        %v2464 = vpop.f32.mrf.mxu0
        %v2465 = vadd.f32 0.0, %v2464
        %2466 = vmatmul.f32.gmra.mxu0 %v306
        %v2467 = vpop.f32.mrf.mxu0
        %v2468 = vadd.f32 0.0, %v2467
        %2469 = vmatmul.f32.gmra.mxu0 %v307
        %v2470 = vpop.f32.mrf.mxu0
        %v2471 = vadd.f32 0.0, %v2470
        %2472 = vmatmul.f32.gmra.mxu0 %v308
        %v2473 = vpop.f32.mrf.mxu0
        %v2474 = vadd.f32 0.0, %v2473
        %2475 = vmatmul.f32.gmra.mxu0 %v309
        %v2476 = vpop.f32.mrf.mxu0
        %v2477 = vadd.f32 0.0, %v2476
        %2478 = vmatmul.f32.gmra.mxu0 %v310
        %v2479 = vpop.f32.mrf.mxu0
        %v2480 = vadd.f32 0.0, %v2479
        %2481 = vmatmul.f32.gmra.mxu0 %v311
        %v2482 = vpop.f32.mrf.mxu0
        %v2483 = vadd.f32 0.0, %v2482
        %2484 = vmatmul.f32.gmra.mxu0 %v312
        %v2485 = vpop.f32.mrf.mxu0
        %v2486 = vadd.f32 0.0, %v2485
        %2487 = vmatmul.f32.gmra.mxu0 %v313
        %v2488 = vpop.f32.mrf.mxu0
        %v2489 = vadd.f32 0.0, %v2488
        %2490 = vmatmul.f32.gmra.mxu0 %v314
        %v2491 = vpop.f32.mrf.mxu0
        %v2492 = vadd.f32 0.0, %v2491
        %2493 = vmatmul.f32.gmra.mxu0 %v315
        %v2494 = vpop.f32.mrf.mxu0
        %v2495 = vadd.f32 0.0, %v2494
        %2496 = vmatmul.f32.gmra.mxu0 %v316
        %v2497 = vpop.f32.mrf.mxu0
        %v2498 = vadd.f32 0.0, %v2497
        %2499 = vmatmul.f32.gmra.mxu0 %v317
        %v2500 = vpop.f32.mrf.mxu0
        %v2501 = vadd.f32 0.0, %v2500
        %2502 = vmatmul.f32.gmra.mxu0 %v318
        %v2503 = vpop.f32.mrf.mxu0
        %v2504 = vadd.f32 0.0, %v2503
        %2505 = vmatmul.f32.gmra.mxu0 %v319
        %v2506 = vpop.f32.mrf.mxu0
        %v2507 = vadd.f32 0.0, %v2506
        %2508 = vmatmul.f32.gmra.mxu0 %v320
        %v2509 = vpop.f32.mrf.mxu0
        %v2510 = vadd.f32 0.0, %v2509
        %2511 = vmatmul.f32.gmra.mxu0 %v321
        %v2512 = vpop.f32.mrf.mxu0
        %v2513 = vadd.f32 0.0, %v2512
        %2514 = vmatmul.f32.gmra.mxu0 %v322
        %v2515 = vpop.f32.mrf.mxu0
        %v2516 = vadd.f32 0.0, %v2515
        %2517 = vmatmul.f32.gmra.mxu0 %v323
        %v2518 = vpop.f32.mrf.mxu0
        %v2519 = vadd.f32 0.0, %v2518
        %2520 = vmatmul.f32.gmra.mxu0 %v324
        %v2521 = vpop.f32.mrf.mxu0
        %v2522 = vadd.f32 0.0, %v2521
        %2523 = vmatmul.f32.gmra.mxu0 %v325
        %v2524 = vpop.f32.mrf.mxu0
        %v2525 = vadd.f32 0.0, %v2524
        %2526 = vmatmul.f32.gmra.mxu0 %v326
        %v2527 = vpop.f32.mrf.mxu0
        %v2528 = vadd.f32 0.0, %v2527
        %2529 = vmatmul.f32.gmra.mxu0 %v327
        %v2530 = vpop.f32.mrf.mxu0
        %v2531 = vadd.f32 0.0, %v2530
        %2532 = vmatmul.f32.gmra.mxu0 %v328
        %v2533 = vpop.f32.mrf.mxu0
        %v2534 = vadd.f32 0.0, %v2533
        %2535 = vmatmul.f32.gmra.mxu0 %v329
        %v2536 = vpop.f32.mrf.mxu0
        %v2537 = vadd.f32 0.0, %v2536
        %2538 = vmatmul.f32.gmra.mxu0 %v330
        %v2539 = vpop.f32.mrf.mxu0
        %v2540 = vadd.f32 0.0, %v2539
        %2541 = vmatmul.f32.gmra.mxu0 %v331
        %v2542 = vpop.f32.mrf.mxu0
        %v2543 = vadd.f32 0.0, %v2542
        %2544 = vmatmul.f32.gmra.mxu0 %v332
        %v2545 = vpop.f32.mrf.mxu0
        %v2546 = vadd.f32 0.0, %v2545
        %2547 = vmatmul.f32.gmra.mxu0 %v333
        %v2548 = vpop.f32.mrf.mxu0
        %v2549 = vadd.f32 0.0, %v2548
        %2550 = vdwg.mxu0
        %v2551 = vmul.f32 %v2151, %v2360
        %v2552 = vmul.f32 %v2154, %v2363
        %v2553 = vmul.f32 %v2157, %v2366
        %v2554 = vmul.f32 %v2160, %v2369
        %v2555 = vmul.f32 %v2163, %v2372
        %v2556 = vmul.f32 %v2166, %v2375
        %v2557 = vmul.f32 %v2169, %v2378
        %v2558 = vmul.f32 %v2172, %v2381
        %v2559 = vmul.f32 %v2175, %v2384
        %v2560 = vmul.f32 %v2178, %v2387
        %v2561 = vmul.f32 %v2181, %v2390
        %v2562 = vmul.f32 %v2184, %v2393
        %v2563 = vmul.f32 %v2187, %v2396
        %v2564 = vmul.f32 %v2190, %v2399
        %v2565 = vmul.f32 %v2193, %v2402
        %v2566 = vmul.f32 %v2196, %v2405
        %v2567 = vmul.f32 %v2199, %v2408
        %v2568 = vmul.f32 %v2202, %v2411
        %v2569 = vmul.f32 %v2205, %v2414
        %v2570 = vmul.f32 %v2208, %v2417
        %v2571 = vmul.f32 %v2211, %v2420
        %v2572 = vmul.f32 %v2214, %v2423
        %v2573 = vmul.f32 %v2217, %v2426
        %v2574 = vmul.f32 %v2220, %v2429
        %v2575 = vmul.f32 %v2223, %v2432
        %v2576 = vmul.f32 %v2226, %v2435
        %v2577 = vmul.f32 %v2229, %v2438
        %v2578 = vmul.f32 %v2232, %v2441
        %v2579 = vmul.f32 %v2235, %v2444
        %v2580 = vmul.f32 %v2238, %v2447
        %v2581 = vmul.f32 %v2241, %v2450
        %v2582 = vmul.f32 %v2244, %v2453
        %v2583 = vmul.f32 %v2247, %v2456
        %v2584 = vmul.f32 %v2250, %v2459
        %v2585 = vmul.f32 %v2253, %v2462
        %v2586 = vmul.f32 %v2256, %v2465
        %v2587 = vmul.f32 %v2259, %v2468
        %v2588 = vmul.f32 %v2262, %v2471
        %v2589 = vmul.f32 %v2265, %v2474
        %v2590 = vmul.f32 %v2268, %v2477
        %v2591 = vmul.f32 %v2271, %v2480
        %v2592 = vmul.f32 %v2274, %v2483
        %v2593 = vmul.f32 %v2277, %v2486
        %v2594 = vmul.f32 %v2280, %v2489
        %v2595 = vmul.f32 %v2283, %v2492
        %v2596 = vmul.f32 %v2286, %v2495
        %v2597 = vmul.f32 %v2289, %v2498
        %v2598 = vmul.f32 %v2292, %v2501
        %v2599 = vmul.f32 %v2295, %v2504
        %v2600 = vmul.f32 %v2298, %v2507
        %v2601 = vmul.f32 %v2301, %v2510
        %v2602 = vmul.f32 %v2304, %v2513
        %v2603 = vmul.f32 %v2307, %v2516
        %v2604 = vmul.f32 %v2310, %v2519
        %v2605 = vmul.f32 %v2313, %v2522
        %v2606 = vmul.f32 %v2316, %v2525
        %v2607 = vmul.f32 %v2319, %v2528
        %v2608 = vmul.f32 %v2322, %v2531
        %v2609 = vmul.f32 %v2325, %v2534
        %v2610 = vmul.f32 %v2328, %v2537
        %v2611 = vmul.f32 %v2331, %v2540
        %v2612 = vmul.f32 %v2334, %v2543
        %v2613 = vmul.f32 %v2337, %v2546
        %v2614 = vmul.f32 %v2340, %v2549
        %v2615 = vld [vmem:[#allocation7 + $0x100] sm:$0xff]
        %v2616 = vld [vmem:[#allocation7 + $0x108] sm:$0xff]
        %v2617 = vld [vmem:[#allocation7 + $0x110] sm:$0xff]
        %v2618 = vld [vmem:[#allocation7 + $0x118] sm:$0xff]
        %v2619 = vld [vmem:[#allocation7 + $0x120] sm:$0xff]
        %v2620 = vld [vmem:[#allocation7 + $0x128] sm:$0xff]
        %v2621 = vld [vmem:[#allocation7 + $0x130] sm:$0xff]
        %v2622 = vld [vmem:[#allocation7 + $0x138] sm:$0xff]
        %v2623 = vld [vmem:[#allocation7 + $0x140] sm:$0xff]
        %v2624 = vld [vmem:[#allocation7 + $0x148] sm:$0xff]
        %v2625 = vld [vmem:[#allocation7 + $0x150] sm:$0xff]
        %v2626 = vld [vmem:[#allocation7 + $0x158] sm:$0xff]
        %v2627 = vld [vmem:[#allocation7 + $0x160] sm:$0xff]
        %v2628 = vld [vmem:[#allocation7 + $0x168] sm:$0xff]
        %v2629 = vld [vmem:[#allocation7 + $0x170] sm:$0xff]
        %v2630 = vld [vmem:[#allocation7 + $0x178] sm:$0xff]
        %2631 = vmatpush.msra.mxu0 %v2630
        %2632 = vmatpush.msra.mxu0 %v2629
        %2633 = vmatpush.msra.mxu0 %v2628
        %2634 = vmatpush.msra.mxu0 %v2627
        %2635 = vmatpush.msra.mxu0 %v2626
        %2636 = vmatpush.msra.mxu0 %v2625
        %2637 = vmatpush.msra.mxu0 %v2624
        %2638 = vmatpush.msra.mxu0 %v2623
        %2639 = vmatpush.msra.mxu0 %v2622
        %2640 = vmatpush.msra.mxu0 %v2621
        %2641 = vmatpush.msra.mxu0 %v2620
        %2642 = vmatpush.msra.mxu0 %v2619
        %2643 = vmatpush.msra.mxu0 %v2618
        %2644 = vmatpush.msra.mxu0 %v2617
        %2645 = vmatpush.msra.mxu0 %v2616
        %2646 = vmatpush.msra.mxu0 %v2615
        %2647 = vmatmul.f32.gmra.mxu0 %v2551
        %v2648 = vpop.f32.mrf.mxu0
        %v2649 = vadd.f32 0.0, %v2648
        %2650 = vmatmul.f32.gmra.mxu0 %v2552
        %v2651 = vpop.f32.mrf.mxu0
        %v2652 = vadd.f32 0.0, %v2651
        %2653 = vmatmul.f32.gmra.mxu0 %v2553
        %v2654 = vpop.f32.mrf.mxu0
        %v2655 = vadd.f32 0.0, %v2654
        %2656 = vmatmul.f32.gmra.mxu0 %v2554
        %v2657 = vpop.f32.mrf.mxu0
        %v2658 = vadd.f32 0.0, %v2657
        %2659 = vmatmul.f32.gmra.mxu0 %v2555
        %v2660 = vpop.f32.mrf.mxu0
        %v2661 = vadd.f32 0.0, %v2660
        %2662 = vmatmul.f32.gmra.mxu0 %v2556
        %v2663 = vpop.f32.mrf.mxu0
        %v2664 = vadd.f32 0.0, %v2663
        %2665 = vmatmul.f32.gmra.mxu0 %v2557
        %v2666 = vpop.f32.mrf.mxu0
        %v2667 = vadd.f32 0.0, %v2666
        %2668 = vmatmul.f32.gmra.mxu0 %v2558
        %v2669 = vpop.f32.mrf.mxu0
        %v2670 = vadd.f32 0.0, %v2669
        %2671 = vmatmul.f32.gmra.mxu0 %v2559
        %v2672 = vpop.f32.mrf.mxu0
        %v2673 = vadd.f32 0.0, %v2672
        %2674 = vmatmul.f32.gmra.mxu0 %v2560
        %v2675 = vpop.f32.mrf.mxu0
        %v2676 = vadd.f32 0.0, %v2675
        %2677 = vmatmul.f32.gmra.mxu0 %v2561
        %v2678 = vpop.f32.mrf.mxu0
        %v2679 = vadd.f32 0.0, %v2678
        %2680 = vmatmul.f32.gmra.mxu0 %v2562
        %v2681 = vpop.f32.mrf.mxu0
        %v2682 = vadd.f32 0.0, %v2681
        %2683 = vmatmul.f32.gmra.mxu0 %v2563
        %v2684 = vpop.f32.mrf.mxu0
        %v2685 = vadd.f32 0.0, %v2684
        %2686 = vmatmul.f32.gmra.mxu0 %v2564
        %v2687 = vpop.f32.mrf.mxu0
        %v2688 = vadd.f32 0.0, %v2687
        %2689 = vmatmul.f32.gmra.mxu0 %v2565
        %v2690 = vpop.f32.mrf.mxu0
        %v2691 = vadd.f32 0.0, %v2690
        %2692 = vmatmul.f32.gmra.mxu0 %v2566
        %v2693 = vpop.f32.mrf.mxu0
        %v2694 = vadd.f32 0.0, %v2693
        %2695 = vmatmul.f32.gmra.mxu0 %v2567
        %v2696 = vpop.f32.mrf.mxu0
        %v2697 = vadd.f32 0.0, %v2696
        %2698 = vmatmul.f32.gmra.mxu0 %v2568
        %v2699 = vpop.f32.mrf.mxu0
        %v2700 = vadd.f32 0.0, %v2699
        %2701 = vmatmul.f32.gmra.mxu0 %v2569
        %v2702 = vpop.f32.mrf.mxu0
        %v2703 = vadd.f32 0.0, %v2702
        %2704 = vmatmul.f32.gmra.mxu0 %v2570
        %v2705 = vpop.f32.mrf.mxu0
        %v2706 = vadd.f32 0.0, %v2705
        %2707 = vmatmul.f32.gmra.mxu0 %v2571
        %v2708 = vpop.f32.mrf.mxu0
        %v2709 = vadd.f32 0.0, %v2708
        %2710 = vmatmul.f32.gmra.mxu0 %v2572
        %v2711 = vpop.f32.mrf.mxu0
        %v2712 = vadd.f32 0.0, %v2711
        %2713 = vmatmul.f32.gmra.mxu0 %v2573
        %v2714 = vpop.f32.mrf.mxu0
        %v2715 = vadd.f32 0.0, %v2714
        %2716 = vmatmul.f32.gmra.mxu0 %v2574
        %v2717 = vpop.f32.mrf.mxu0
        %v2718 = vadd.f32 0.0, %v2717
        %2719 = vmatmul.f32.gmra.mxu0 %v2575
        %v2720 = vpop.f32.mrf.mxu0
        %v2721 = vadd.f32 0.0, %v2720
        %2722 = vmatmul.f32.gmra.mxu0 %v2576
        %v2723 = vpop.f32.mrf.mxu0
        %v2724 = vadd.f32 0.0, %v2723
        %2725 = vmatmul.f32.gmra.mxu0 %v2577
        %v2726 = vpop.f32.mrf.mxu0
        %v2727 = vadd.f32 0.0, %v2726
        %2728 = vmatmul.f32.gmra.mxu0 %v2578
        %v2729 = vpop.f32.mrf.mxu0
        %v2730 = vadd.f32 0.0, %v2729
        %2731 = vmatmul.f32.gmra.mxu0 %v2579
        %v2732 = vpop.f32.mrf.mxu0
        %v2733 = vadd.f32 0.0, %v2732
        %2734 = vmatmul.f32.gmra.mxu0 %v2580
        %v2735 = vpop.f32.mrf.mxu0
        %v2736 = vadd.f32 0.0, %v2735
        %2737 = vmatmul.f32.gmra.mxu0 %v2581
        %v2738 = vpop.f32.mrf.mxu0
        %v2739 = vadd.f32 0.0, %v2738
        %2740 = vmatmul.f32.gmra.mxu0 %v2582
        %v2741 = vpop.f32.mrf.mxu0
        %v2742 = vadd.f32 0.0, %v2741
        %2743 = vmatmul.f32.gmra.mxu0 %v2583
        %v2744 = vpop.f32.mrf.mxu0
        %v2745 = vadd.f32 0.0, %v2744
        %2746 = vmatmul.f32.gmra.mxu0 %v2584
        %v2747 = vpop.f32.mrf.mxu0
        %v2748 = vadd.f32 0.0, %v2747
        %2749 = vmatmul.f32.gmra.mxu0 %v2585
        %v2750 = vpop.f32.mrf.mxu0
        %v2751 = vadd.f32 0.0, %v2750
        %2752 = vmatmul.f32.gmra.mxu0 %v2586
        %v2753 = vpop.f32.mrf.mxu0
        %v2754 = vadd.f32 0.0, %v2753
        %2755 = vmatmul.f32.gmra.mxu0 %v2587
        %v2756 = vpop.f32.mrf.mxu0
        %v2757 = vadd.f32 0.0, %v2756
        %2758 = vmatmul.f32.gmra.mxu0 %v2588
        %v2759 = vpop.f32.mrf.mxu0
        %v2760 = vadd.f32 0.0, %v2759
        %2761 = vmatmul.f32.gmra.mxu0 %v2589
        %v2762 = vpop.f32.mrf.mxu0
        %v2763 = vadd.f32 0.0, %v2762
        %2764 = vmatmul.f32.gmra.mxu0 %v2590
        %v2765 = vpop.f32.mrf.mxu0
        %v2766 = vadd.f32 0.0, %v2765
        %2767 = vmatmul.f32.gmra.mxu0 %v2591
        %v2768 = vpop.f32.mrf.mxu0
        %v2769 = vadd.f32 0.0, %v2768
        %2770 = vmatmul.f32.gmra.mxu0 %v2592
        %v2771 = vpop.f32.mrf.mxu0
        %v2772 = vadd.f32 0.0, %v2771
        %2773 = vmatmul.f32.gmra.mxu0 %v2593
        %v2774 = vpop.f32.mrf.mxu0
        %v2775 = vadd.f32 0.0, %v2774
        %2776 = vmatmul.f32.gmra.mxu0 %v2594
        %v2777 = vpop.f32.mrf.mxu0
        %v2778 = vadd.f32 0.0, %v2777
        %2779 = vmatmul.f32.gmra.mxu0 %v2595
        %v2780 = vpop.f32.mrf.mxu0
        %v2781 = vadd.f32 0.0, %v2780
        %2782 = vmatmul.f32.gmra.mxu0 %v2596
        %v2783 = vpop.f32.mrf.mxu0
        %v2784 = vadd.f32 0.0, %v2783
        %2785 = vmatmul.f32.gmra.mxu0 %v2597
        %v2786 = vpop.f32.mrf.mxu0
        %v2787 = vadd.f32 0.0, %v2786
        %2788 = vmatmul.f32.gmra.mxu0 %v2598
        %v2789 = vpop.f32.mrf.mxu0
        %v2790 = vadd.f32 0.0, %v2789
        %2791 = vmatmul.f32.gmra.mxu0 %v2599
        %v2792 = vpop.f32.mrf.mxu0
        %v2793 = vadd.f32 0.0, %v2792
        %2794 = vmatmul.f32.gmra.mxu0 %v2600
        %v2795 = vpop.f32.mrf.mxu0
        %v2796 = vadd.f32 0.0, %v2795
        %2797 = vmatmul.f32.gmra.mxu0 %v2601
        %v2798 = vpop.f32.mrf.mxu0
        %v2799 = vadd.f32 0.0, %v2798
        %2800 = vmatmul.f32.gmra.mxu0 %v2602
        %v2801 = vpop.f32.mrf.mxu0
        %v2802 = vadd.f32 0.0, %v2801
        %2803 = vmatmul.f32.gmra.mxu0 %v2603
        %v2804 = vpop.f32.mrf.mxu0
        %v2805 = vadd.f32 0.0, %v2804
        %2806 = vmatmul.f32.gmra.mxu0 %v2604
        %v2807 = vpop.f32.mrf.mxu0
        %v2808 = vadd.f32 0.0, %v2807
        %2809 = vmatmul.f32.gmra.mxu0 %v2605
        %v2810 = vpop.f32.mrf.mxu0
        %v2811 = vadd.f32 0.0, %v2810
        %2812 = vmatmul.f32.gmra.mxu0 %v2606
        %v2813 = vpop.f32.mrf.mxu0
        %v2814 = vadd.f32 0.0, %v2813
        %2815 = vmatmul.f32.gmra.mxu0 %v2607
        %v2816 = vpop.f32.mrf.mxu0
        %v2817 = vadd.f32 0.0, %v2816
        %2818 = vmatmul.f32.gmra.mxu0 %v2608
        %v2819 = vpop.f32.mrf.mxu0
        %v2820 = vadd.f32 0.0, %v2819
        %2821 = vmatmul.f32.gmra.mxu0 %v2609
        %v2822 = vpop.f32.mrf.mxu0
        %v2823 = vadd.f32 0.0, %v2822
        %2824 = vmatmul.f32.gmra.mxu0 %v2610
        %v2825 = vpop.f32.mrf.mxu0
        %v2826 = vadd.f32 0.0, %v2825
        %2827 = vmatmul.f32.gmra.mxu0 %v2611
        %v2828 = vpop.f32.mrf.mxu0
        %v2829 = vadd.f32 0.0, %v2828
        %2830 = vmatmul.f32.gmra.mxu0 %v2612
        %v2831 = vpop.f32.mrf.mxu0
        %v2832 = vadd.f32 0.0, %v2831
        %2833 = vmatmul.f32.gmra.mxu0 %v2613
        %v2834 = vpop.f32.mrf.mxu0
        %v2835 = vadd.f32 0.0, %v2834
        %2836 = vmatmul.f32.gmra.mxu0 %v2614
        %v2837 = vpop.f32.mrf.mxu0
        %v2838 = vadd.f32 0.0, %v2837
        %2839 = vdwg.mxu0
        %v2840 = vadd.f32 %v2037, %v2649
        %v2841 = vadd.f32 %v2038, %v2652
        %v2842 = vadd.f32 %v2039, %v2655
        %v2843 = vadd.f32 %v2040, %v2658
        %v2844 = vadd.f32 %v2041, %v2661
        %v2845 = vadd.f32 %v2042, %v2664
        %v2846 = vadd.f32 %v2043, %v2667
        %v2847 = vadd.f32 %v2044, %v2670
        %v2848 = vadd.f32 %v2045, %v2673
        %v2849 = vadd.f32 %v2046, %v2676
        %v2850 = vadd.f32 %v2047, %v2679
        %v2851 = vadd.f32 %v2048, %v2682
        %v2852 = vadd.f32 %v2049, %v2685
        %v2853 = vadd.f32 %v2050, %v2688
        %v2854 = vadd.f32 %v2051, %v2691
        %v2855 = vadd.f32 %v2052, %v2694
        %v2856 = vadd.f32 %v2053, %v2697
        %v2857 = vadd.f32 %v2054, %v2700
        %v2858 = vadd.f32 %v2055, %v2703
        %v2859 = vadd.f32 %v2056, %v2706
        %v2860 = vadd.f32 %v2057, %v2709
        %v2861 = vadd.f32 %v2058, %v2712
        %v2862 = vadd.f32 %v2059, %v2715
        %v2863 = vadd.f32 %v2060, %v2718
        %v2864 = vadd.f32 %v2061, %v2721
        %v2865 = vadd.f32 %v2062, %v2724
        %v2866 = vadd.f32 %v2063, %v2727
        %v2867 = vadd.f32 %v2064, %v2730
        %v2868 = vadd.f32 %v2065, %v2733
        %v2869 = vadd.f32 %v2066, %v2736
        %v2870 = vadd.f32 %v2067, %v2739
        %v2871 = vadd.f32 %v2068, %v2742
        %v2872 = vadd.f32 %v2069, %v2745
        %v2873 = vadd.f32 %v2070, %v2748
        %v2874 = vadd.f32 %v2071, %v2751
        %v2875 = vadd.f32 %v2072, %v2754
        %v2876 = vadd.f32 %v2073, %v2757
        %v2877 = vadd.f32 %v2074, %v2760
        %v2878 = vadd.f32 %v2075, %v2763
        %v2879 = vadd.f32 %v2076, %v2766
        %v2880 = vadd.f32 %v2077, %v2769
        %v2881 = vadd.f32 %v2078, %v2772
        %v2882 = vadd.f32 %v2079, %v2775
        %v2883 = vadd.f32 %v2080, %v2778
        %v2884 = vadd.f32 %v2081, %v2781
        %v2885 = vadd.f32 %v2082, %v2784
        %v2886 = vadd.f32 %v2083, %v2787
        %v2887 = vadd.f32 %v2084, %v2790
        %v2888 = vadd.f32 %v2085, %v2793
        %v2889 = vadd.f32 %v2086, %v2796
        %v2890 = vadd.f32 %v2087, %v2799
        %v2891 = vadd.f32 %v2088, %v2802
        %v2892 = vadd.f32 %v2089, %v2805
        %v2893 = vadd.f32 %v2090, %v2808
        %v2894 = vadd.f32 %v2091, %v2811
        %v2895 = vadd.f32 %v2092, %v2814
        %v2896 = vadd.f32 %v2093, %v2817
        %v2897 = vadd.f32 %v2094, %v2820
        %v2898 = vadd.f32 %v2095, %v2823
        %v2899 = vadd.f32 %v2096, %v2826
        %v2900 = vadd.f32 %v2097, %v2829
        %v2901 = vadd.f32 %v2098, %v2832
        %v2902 = vadd.f32 %v2099, %v2835
        %v2903 = vadd.f32 %v2100, %v2838
        %v2904 = vld [vmem:[#allocation5 + $0x30] sm:$0xff]
        %v2905 = vld [vmem:[#allocation5 + $0x38] sm:$0xff]
        %v2906 = vld [vmem:[#allocation5 + $0x70] sm:$0xff]
        %v2907 = vld [vmem:[#allocation5 + $0x78] sm:$0xff]
        %v2908 = vld [vmem:[#allocation5 + $0xb0] sm:$0xff]
        %v2909 = vld [vmem:[#allocation5 + $0xb8] sm:$0xff]
        %v2910 = vld [vmem:[#allocation5 + $0xf0] sm:$0xff]
        %v2911 = vld [vmem:[#allocation5 + $0xf8] sm:$0xff]
        %v2912 = vld [vmem:[#allocation5 + $0x130] sm:$0xff]
        %v2913 = vld [vmem:[#allocation5 + $0x138] sm:$0xff]
        %v2914 = vld [vmem:[#allocation5 + $0x170] sm:$0xff]
        %v2915 = vld [vmem:[#allocation5 + $0x178] sm:$0xff]
        %v2916 = vld [vmem:[#allocation5 + $0x1b0] sm:$0xff]
        %v2917 = vld [vmem:[#allocation5 + $0x1b8] sm:$0xff]
        %v2918 = vld [vmem:[#allocation5 + $0x1f0] sm:$0xff]
        %v2919 = vld [vmem:[#allocation5 + $0x1f8] sm:$0xff]
        %v2920 = vld [vmem:[#allocation5 + $0x230] sm:$0xff]
        %v2921 = vld [vmem:[#allocation5 + $0x238] sm:$0xff]
        %v2922 = vld [vmem:[#allocation5 + $0x270] sm:$0xff]
        %v2923 = vld [vmem:[#allocation5 + $0x278] sm:$0xff]
        %v2924 = vld [vmem:[#allocation5 + $0x2b0] sm:$0xff]
        %v2925 = vld [vmem:[#allocation5 + $0x2b8] sm:$0xff]
        %v2926 = vld [vmem:[#allocation5 + $0x2f0] sm:$0xff]
        %v2927 = vld [vmem:[#allocation5 + $0x2f8] sm:$0xff]
        %v2928 = vld [vmem:[#allocation5 + $0x330] sm:$0xff]
        %v2929 = vld [vmem:[#allocation5 + $0x338] sm:$0xff]
        %v2930 = vld [vmem:[#allocation5 + $0x370] sm:$0xff]
        %v2931 = vld [vmem:[#allocation5 + $0x378] sm:$0xff]
        %v2932 = vld [vmem:[#allocation5 + $0x3b0] sm:$0xff]
        %v2933 = vld [vmem:[#allocation5 + $0x3b8] sm:$0xff]
        %v2934 = vld [vmem:[#allocation5 + $0x3f0] sm:$0xff]
        %v2935 = vld [vmem:[#allocation5 + $0x3f8] sm:$0xff]
        %2936 = vmatpush.msra.mxu0 %v2934
        %2937 = vmatpush.msra.mxu0 %v2932
        %2938 = vmatpush.msra.mxu0 %v2930
        %2939 = vmatpush.msra.mxu0 %v2928
        %2940 = vmatpush.msra.mxu0 %v2926
        %2941 = vmatpush.msra.mxu0 %v2924
        %2942 = vmatpush.msra.mxu0 %v2922
        %2943 = vmatpush.msra.mxu0 %v2920
        %2944 = vmatpush.msra.mxu0 %v2918
        %2945 = vmatpush.msra.mxu0 %v2916
        %2946 = vmatpush.msra.mxu0 %v2914
        %2947 = vmatpush.msra.mxu0 %v2912
        %2948 = vmatpush.msra.mxu0 %v2910
        %2949 = vmatpush.msra.mxu0 %v2908
        %2950 = vmatpush.msra.mxu0 %v2906
        %2951 = vmatpush.msra.mxu0 %v2904
        %2952 = vmatmul.f32.gmra.mxu0 %v270
        %v2953 = vpop.f32.mrf.mxu0
        %v2954 = vadd.f32 0.0, %v2953
        %2955 = vmatmul.f32.gmra.mxu0 %v271
        %v2956 = vpop.f32.mrf.mxu0
        %v2957 = vadd.f32 0.0, %v2956
        %2958 = vmatmul.f32.gmra.mxu0 %v272
        %v2959 = vpop.f32.mrf.mxu0
        %v2960 = vadd.f32 0.0, %v2959
        %2961 = vmatmul.f32.gmra.mxu0 %v273
        %v2962 = vpop.f32.mrf.mxu0
        %v2963 = vadd.f32 0.0, %v2962
        %2964 = vmatmul.f32.gmra.mxu0 %v274
        %v2965 = vpop.f32.mrf.mxu0
        %v2966 = vadd.f32 0.0, %v2965
        %2967 = vmatmul.f32.gmra.mxu0 %v275
        %v2968 = vpop.f32.mrf.mxu0
        %v2969 = vadd.f32 0.0, %v2968
        %2970 = vmatmul.f32.gmra.mxu0 %v276
        %v2971 = vpop.f32.mrf.mxu0
        %v2972 = vadd.f32 0.0, %v2971
        %2973 = vmatmul.f32.gmra.mxu0 %v277
        %v2974 = vpop.f32.mrf.mxu0
        %v2975 = vadd.f32 0.0, %v2974
        %2976 = vmatmul.f32.gmra.mxu0 %v278
        %v2977 = vpop.f32.mrf.mxu0
        %v2978 = vadd.f32 0.0, %v2977
        %2979 = vmatmul.f32.gmra.mxu0 %v279
        %v2980 = vpop.f32.mrf.mxu0
        %v2981 = vadd.f32 0.0, %v2980
        %2982 = vmatmul.f32.gmra.mxu0 %v280
        %v2983 = vpop.f32.mrf.mxu0
        %v2984 = vadd.f32 0.0, %v2983
        %2985 = vmatmul.f32.gmra.mxu0 %v281
        %v2986 = vpop.f32.mrf.mxu0
        %v2987 = vadd.f32 0.0, %v2986
        %2988 = vmatmul.f32.gmra.mxu0 %v282
        %v2989 = vpop.f32.mrf.mxu0
        %v2990 = vadd.f32 0.0, %v2989
        %2991 = vmatmul.f32.gmra.mxu0 %v283
        %v2992 = vpop.f32.mrf.mxu0
        %v2993 = vadd.f32 0.0, %v2992
        %2994 = vmatmul.f32.gmra.mxu0 %v284
        %v2995 = vpop.f32.mrf.mxu0
        %v2996 = vadd.f32 0.0, %v2995
        %2997 = vmatmul.f32.gmra.mxu0 %v285
        %v2998 = vpop.f32.mrf.mxu0
        %v2999 = vadd.f32 0.0, %v2998
        %3000 = vmatmul.f32.gmra.mxu0 %v286
        %v3001 = vpop.f32.mrf.mxu0
        %v3002 = vadd.f32 0.0, %v3001
        %3003 = vmatmul.f32.gmra.mxu0 %v287
        %v3004 = vpop.f32.mrf.mxu0
        %v3005 = vadd.f32 0.0, %v3004
        %3006 = vmatmul.f32.gmra.mxu0 %v288
        %v3007 = vpop.f32.mrf.mxu0
        %v3008 = vadd.f32 0.0, %v3007
        %3009 = vmatmul.f32.gmra.mxu0 %v289
        %v3010 = vpop.f32.mrf.mxu0
        %v3011 = vadd.f32 0.0, %v3010
        %3012 = vmatmul.f32.gmra.mxu0 %v290
        %v3013 = vpop.f32.mrf.mxu0
        %v3014 = vadd.f32 0.0, %v3013
        %3015 = vmatmul.f32.gmra.mxu0 %v291
        %v3016 = vpop.f32.mrf.mxu0
        %v3017 = vadd.f32 0.0, %v3016
        %3018 = vmatmul.f32.gmra.mxu0 %v292
        %v3019 = vpop.f32.mrf.mxu0
        %v3020 = vadd.f32 0.0, %v3019
        %3021 = vmatmul.f32.gmra.mxu0 %v293
        %v3022 = vpop.f32.mrf.mxu0
        %v3023 = vadd.f32 0.0, %v3022
        %3024 = vmatmul.f32.gmra.mxu0 %v294
        %v3025 = vpop.f32.mrf.mxu0
        %v3026 = vadd.f32 0.0, %v3025
        %3027 = vmatmul.f32.gmra.mxu0 %v295
        %v3028 = vpop.f32.mrf.mxu0
        %v3029 = vadd.f32 0.0, %v3028
        %3030 = vmatmul.f32.gmra.mxu0 %v296
        %v3031 = vpop.f32.mrf.mxu0
        %v3032 = vadd.f32 0.0, %v3031
        %3033 = vmatmul.f32.gmra.mxu0 %v297
        %v3034 = vpop.f32.mrf.mxu0
        %v3035 = vadd.f32 0.0, %v3034
        %3036 = vmatmul.f32.gmra.mxu0 %v298
        %v3037 = vpop.f32.mrf.mxu0
        %v3038 = vadd.f32 0.0, %v3037
        %3039 = vmatmul.f32.gmra.mxu0 %v299
        %v3040 = vpop.f32.mrf.mxu0
        %v3041 = vadd.f32 0.0, %v3040
        %3042 = vmatmul.f32.gmra.mxu0 %v300
        %v3043 = vpop.f32.mrf.mxu0
        %v3044 = vadd.f32 0.0, %v3043
        %3045 = vmatmul.f32.gmra.mxu0 %v301
        %v3046 = vpop.f32.mrf.mxu0
        %v3047 = vadd.f32 0.0, %v3046
        %3048 = vmatmul.f32.gmra.mxu0 %v302
        %v3049 = vpop.f32.mrf.mxu0
        %v3050 = vadd.f32 0.0, %v3049
        %3051 = vmatmul.f32.gmra.mxu0 %v303
        %v3052 = vpop.f32.mrf.mxu0
        %v3053 = vadd.f32 0.0, %v3052
        %3054 = vmatmul.f32.gmra.mxu0 %v304
        %v3055 = vpop.f32.mrf.mxu0
        %v3056 = vadd.f32 0.0, %v3055
        %3057 = vmatmul.f32.gmra.mxu0 %v305
        %v3058 = vpop.f32.mrf.mxu0
        %v3059 = vadd.f32 0.0, %v3058
        %3060 = vmatmul.f32.gmra.mxu0 %v306
        %v3061 = vpop.f32.mrf.mxu0
        %v3062 = vadd.f32 0.0, %v3061
        %3063 = vmatmul.f32.gmra.mxu0 %v307
        %v3064 = vpop.f32.mrf.mxu0
        %v3065 = vadd.f32 0.0, %v3064
        %3066 = vmatmul.f32.gmra.mxu0 %v308
        %v3067 = vpop.f32.mrf.mxu0
        %v3068 = vadd.f32 0.0, %v3067
        %3069 = vmatmul.f32.gmra.mxu0 %v309
        %v3070 = vpop.f32.mrf.mxu0
        %v3071 = vadd.f32 0.0, %v3070
        %3072 = vmatmul.f32.gmra.mxu0 %v310
        %v3073 = vpop.f32.mrf.mxu0
        %v3074 = vadd.f32 0.0, %v3073
        %3075 = vmatmul.f32.gmra.mxu0 %v311
        %v3076 = vpop.f32.mrf.mxu0
        %v3077 = vadd.f32 0.0, %v3076
        %3078 = vmatmul.f32.gmra.mxu0 %v312
        %v3079 = vpop.f32.mrf.mxu0
        %v3080 = vadd.f32 0.0, %v3079
        %3081 = vmatmul.f32.gmra.mxu0 %v313
        %v3082 = vpop.f32.mrf.mxu0
        %v3083 = vadd.f32 0.0, %v3082
        %3084 = vmatmul.f32.gmra.mxu0 %v314
        %v3085 = vpop.f32.mrf.mxu0
        %v3086 = vadd.f32 0.0, %v3085
        %3087 = vmatmul.f32.gmra.mxu0 %v315
        %v3088 = vpop.f32.mrf.mxu0
        %v3089 = vadd.f32 0.0, %v3088
        %3090 = vmatmul.f32.gmra.mxu0 %v316
        %v3091 = vpop.f32.mrf.mxu0
        %v3092 = vadd.f32 0.0, %v3091
        %3093 = vmatmul.f32.gmra.mxu0 %v317
        %v3094 = vpop.f32.mrf.mxu0
        %v3095 = vadd.f32 0.0, %v3094
        %3096 = vmatmul.f32.gmra.mxu0 %v318
        %v3097 = vpop.f32.mrf.mxu0
        %v3098 = vadd.f32 0.0, %v3097
        %3099 = vmatmul.f32.gmra.mxu0 %v319
        %v3100 = vpop.f32.mrf.mxu0
        %v3101 = vadd.f32 0.0, %v3100
        %3102 = vmatmul.f32.gmra.mxu0 %v320
        %v3103 = vpop.f32.mrf.mxu0
        %v3104 = vadd.f32 0.0, %v3103
        %3105 = vmatmul.f32.gmra.mxu0 %v321
        %v3106 = vpop.f32.mrf.mxu0
        %v3107 = vadd.f32 0.0, %v3106
        %3108 = vmatmul.f32.gmra.mxu0 %v322
        %v3109 = vpop.f32.mrf.mxu0
        %v3110 = vadd.f32 0.0, %v3109
        %3111 = vmatmul.f32.gmra.mxu0 %v323
        %v3112 = vpop.f32.mrf.mxu0
        %v3113 = vadd.f32 0.0, %v3112
        %3114 = vmatmul.f32.gmra.mxu0 %v324
        %v3115 = vpop.f32.mrf.mxu0
        %v3116 = vadd.f32 0.0, %v3115
        %3117 = vmatmul.f32.gmra.mxu0 %v325
        %v3118 = vpop.f32.mrf.mxu0
        %v3119 = vadd.f32 0.0, %v3118
        %3120 = vmatmul.f32.gmra.mxu0 %v326
        %v3121 = vpop.f32.mrf.mxu0
        %v3122 = vadd.f32 0.0, %v3121
        %3123 = vmatmul.f32.gmra.mxu0 %v327
        %v3124 = vpop.f32.mrf.mxu0
        %v3125 = vadd.f32 0.0, %v3124
        %3126 = vmatmul.f32.gmra.mxu0 %v328
        %v3127 = vpop.f32.mrf.mxu0
        %v3128 = vadd.f32 0.0, %v3127
        %3129 = vmatmul.f32.gmra.mxu0 %v329
        %v3130 = vpop.f32.mrf.mxu0
        %v3131 = vadd.f32 0.0, %v3130
        %3132 = vmatmul.f32.gmra.mxu0 %v330
        %v3133 = vpop.f32.mrf.mxu0
        %v3134 = vadd.f32 0.0, %v3133
        %3135 = vmatmul.f32.gmra.mxu0 %v331
        %v3136 = vpop.f32.mrf.mxu0
        %v3137 = vadd.f32 0.0, %v3136
        %3138 = vmatmul.f32.gmra.mxu0 %v332
        %v3139 = vpop.f32.mrf.mxu0
        %v3140 = vadd.f32 0.0, %v3139
        %3141 = vmatmul.f32.gmra.mxu0 %v333
        %v3142 = vpop.f32.mrf.mxu0
        %v3143 = vadd.f32 0.0, %v3142
        %3144 = vdwg.mxu0
        %3145 = vmatpush.msra.mxu0 %v2935
        %3146 = vmatpush.msra.mxu0 %v2933
        %3147 = vmatpush.msra.mxu0 %v2931
        %3148 = vmatpush.msra.mxu0 %v2929
        %3149 = vmatpush.msra.mxu0 %v2927
        %3150 = vmatpush.msra.mxu0 %v2925
        %3151 = vmatpush.msra.mxu0 %v2923
        %3152 = vmatpush.msra.mxu0 %v2921
        %3153 = vmatpush.msra.mxu0 %v2919
        %3154 = vmatpush.msra.mxu0 %v2917
        %3155 = vmatpush.msra.mxu0 %v2915
        %3156 = vmatpush.msra.mxu0 %v2913
        %3157 = vmatpush.msra.mxu0 %v2911
        %3158 = vmatpush.msra.mxu0 %v2909
        %3159 = vmatpush.msra.mxu0 %v2907
        %3160 = vmatpush.msra.mxu0 %v2905
        %3161 = vmatmul.f32.gmra.mxu0 %v270
        %v3162 = vpop.f32.mrf.mxu0
        %v3163 = vadd.f32 0.0, %v3162
        %3164 = vmatmul.f32.gmra.mxu0 %v271
        %v3165 = vpop.f32.mrf.mxu0
        %v3166 = vadd.f32 0.0, %v3165
        %3167 = vmatmul.f32.gmra.mxu0 %v272
        %v3168 = vpop.f32.mrf.mxu0
        %v3169 = vadd.f32 0.0, %v3168
        %3170 = vmatmul.f32.gmra.mxu0 %v273
        %v3171 = vpop.f32.mrf.mxu0
        %v3172 = vadd.f32 0.0, %v3171
        %3173 = vmatmul.f32.gmra.mxu0 %v274
        %v3174 = vpop.f32.mrf.mxu0
        %v3175 = vadd.f32 0.0, %v3174
        %3176 = vmatmul.f32.gmra.mxu0 %v275
        %v3177 = vpop.f32.mrf.mxu0
        %v3178 = vadd.f32 0.0, %v3177
        %3179 = vmatmul.f32.gmra.mxu0 %v276
        %v3180 = vpop.f32.mrf.mxu0
        %v3181 = vadd.f32 0.0, %v3180
        %3182 = vmatmul.f32.gmra.mxu0 %v277
        %v3183 = vpop.f32.mrf.mxu0
        %v3184 = vadd.f32 0.0, %v3183
        %3185 = vmatmul.f32.gmra.mxu0 %v278
        %v3186 = vpop.f32.mrf.mxu0
        %v3187 = vadd.f32 0.0, %v3186
        %3188 = vmatmul.f32.gmra.mxu0 %v279
        %v3189 = vpop.f32.mrf.mxu0
        %v3190 = vadd.f32 0.0, %v3189
        %3191 = vmatmul.f32.gmra.mxu0 %v280
        %v3192 = vpop.f32.mrf.mxu0
        %v3193 = vadd.f32 0.0, %v3192
        %3194 = vmatmul.f32.gmra.mxu0 %v281
        %v3195 = vpop.f32.mrf.mxu0
        %v3196 = vadd.f32 0.0, %v3195
        %3197 = vmatmul.f32.gmra.mxu0 %v282
        %v3198 = vpop.f32.mrf.mxu0
        %v3199 = vadd.f32 0.0, %v3198
        %3200 = vmatmul.f32.gmra.mxu0 %v283
        %v3201 = vpop.f32.mrf.mxu0
        %v3202 = vadd.f32 0.0, %v3201
        %3203 = vmatmul.f32.gmra.mxu0 %v284
        %v3204 = vpop.f32.mrf.mxu0
        %v3205 = vadd.f32 0.0, %v3204
        %3206 = vmatmul.f32.gmra.mxu0 %v285
        %v3207 = vpop.f32.mrf.mxu0
        %v3208 = vadd.f32 0.0, %v3207
        %3209 = vmatmul.f32.gmra.mxu0 %v286
        %v3210 = vpop.f32.mrf.mxu0
        %v3211 = vadd.f32 0.0, %v3210
        %3212 = vmatmul.f32.gmra.mxu0 %v287
        %v3213 = vpop.f32.mrf.mxu0
        %v3214 = vadd.f32 0.0, %v3213
        %3215 = vmatmul.f32.gmra.mxu0 %v288
        %v3216 = vpop.f32.mrf.mxu0
        %v3217 = vadd.f32 0.0, %v3216
        %3218 = vmatmul.f32.gmra.mxu0 %v289
        %v3219 = vpop.f32.mrf.mxu0
        %v3220 = vadd.f32 0.0, %v3219
        %3221 = vmatmul.f32.gmra.mxu0 %v290
        %v3222 = vpop.f32.mrf.mxu0
        %v3223 = vadd.f32 0.0, %v3222
        %3224 = vmatmul.f32.gmra.mxu0 %v291
        %v3225 = vpop.f32.mrf.mxu0
        %v3226 = vadd.f32 0.0, %v3225
        %3227 = vmatmul.f32.gmra.mxu0 %v292
        %v3228 = vpop.f32.mrf.mxu0
        %v3229 = vadd.f32 0.0, %v3228
        %3230 = vmatmul.f32.gmra.mxu0 %v293
        %v3231 = vpop.f32.mrf.mxu0
        %v3232 = vadd.f32 0.0, %v3231
        %3233 = vmatmul.f32.gmra.mxu0 %v294
        %v3234 = vpop.f32.mrf.mxu0
        %v3235 = vadd.f32 0.0, %v3234
        %3236 = vmatmul.f32.gmra.mxu0 %v295
        %v3237 = vpop.f32.mrf.mxu0
        %v3238 = vadd.f32 0.0, %v3237
        %3239 = vmatmul.f32.gmra.mxu0 %v296
        %v3240 = vpop.f32.mrf.mxu0
        %v3241 = vadd.f32 0.0, %v3240
        %3242 = vmatmul.f32.gmra.mxu0 %v297
        %v3243 = vpop.f32.mrf.mxu0
        %v3244 = vadd.f32 0.0, %v3243
        %3245 = vmatmul.f32.gmra.mxu0 %v298
        %v3246 = vpop.f32.mrf.mxu0
        %v3247 = vadd.f32 0.0, %v3246
        %3248 = vmatmul.f32.gmra.mxu0 %v299
        %v3249 = vpop.f32.mrf.mxu0
        %v3250 = vadd.f32 0.0, %v3249
        %3251 = vmatmul.f32.gmra.mxu0 %v300
        %v3252 = vpop.f32.mrf.mxu0
        %v3253 = vadd.f32 0.0, %v3252
        %3254 = vmatmul.f32.gmra.mxu0 %v301
        %v3255 = vpop.f32.mrf.mxu0
        %v3256 = vadd.f32 0.0, %v3255
        %3257 = vmatmul.f32.gmra.mxu0 %v302
        %v3258 = vpop.f32.mrf.mxu0
        %v3259 = vadd.f32 0.0, %v3258
        %3260 = vmatmul.f32.gmra.mxu0 %v303
        %v3261 = vpop.f32.mrf.mxu0
        %v3262 = vadd.f32 0.0, %v3261
        %3263 = vmatmul.f32.gmra.mxu0 %v304
        %v3264 = vpop.f32.mrf.mxu0
        %v3265 = vadd.f32 0.0, %v3264
        %3266 = vmatmul.f32.gmra.mxu0 %v305
        %v3267 = vpop.f32.mrf.mxu0
        %v3268 = vadd.f32 0.0, %v3267
        %3269 = vmatmul.f32.gmra.mxu0 %v306
        %v3270 = vpop.f32.mrf.mxu0
        %v3271 = vadd.f32 0.0, %v3270
        %3272 = vmatmul.f32.gmra.mxu0 %v307
        %v3273 = vpop.f32.mrf.mxu0
        %v3274 = vadd.f32 0.0, %v3273
        %3275 = vmatmul.f32.gmra.mxu0 %v308
        %v3276 = vpop.f32.mrf.mxu0
        %v3277 = vadd.f32 0.0, %v3276
        %3278 = vmatmul.f32.gmra.mxu0 %v309
        %v3279 = vpop.f32.mrf.mxu0
        %v3280 = vadd.f32 0.0, %v3279
        %3281 = vmatmul.f32.gmra.mxu0 %v310
        %v3282 = vpop.f32.mrf.mxu0
        %v3283 = vadd.f32 0.0, %v3282
        %3284 = vmatmul.f32.gmra.mxu0 %v311
        %v3285 = vpop.f32.mrf.mxu0
        %v3286 = vadd.f32 0.0, %v3285
        %3287 = vmatmul.f32.gmra.mxu0 %v312
        %v3288 = vpop.f32.mrf.mxu0
        %v3289 = vadd.f32 0.0, %v3288
        %3290 = vmatmul.f32.gmra.mxu0 %v313
        %v3291 = vpop.f32.mrf.mxu0
        %v3292 = vadd.f32 0.0, %v3291
        %3293 = vmatmul.f32.gmra.mxu0 %v314
        %v3294 = vpop.f32.mrf.mxu0
        %v3295 = vadd.f32 0.0, %v3294
        %3296 = vmatmul.f32.gmra.mxu0 %v315
        %v3297 = vpop.f32.mrf.mxu0
        %v3298 = vadd.f32 0.0, %v3297
        %3299 = vmatmul.f32.gmra.mxu0 %v316
        %v3300 = vpop.f32.mrf.mxu0
        %v3301 = vadd.f32 0.0, %v3300
        %3302 = vmatmul.f32.gmra.mxu0 %v317
        %v3303 = vpop.f32.mrf.mxu0
        %v3304 = vadd.f32 0.0, %v3303
        %3305 = vmatmul.f32.gmra.mxu0 %v318
        %v3306 = vpop.f32.mrf.mxu0
        %v3307 = vadd.f32 0.0, %v3306
        %3308 = vmatmul.f32.gmra.mxu0 %v319
        %v3309 = vpop.f32.mrf.mxu0
        %v3310 = vadd.f32 0.0, %v3309
        %3311 = vmatmul.f32.gmra.mxu0 %v320
        %v3312 = vpop.f32.mrf.mxu0
        %v3313 = vadd.f32 0.0, %v3312
        %3314 = vmatmul.f32.gmra.mxu0 %v321
        %v3315 = vpop.f32.mrf.mxu0
        %v3316 = vadd.f32 0.0, %v3315
        %3317 = vmatmul.f32.gmra.mxu0 %v322
        %v3318 = vpop.f32.mrf.mxu0
        %v3319 = vadd.f32 0.0, %v3318
        %3320 = vmatmul.f32.gmra.mxu0 %v323
        %v3321 = vpop.f32.mrf.mxu0
        %v3322 = vadd.f32 0.0, %v3321
        %3323 = vmatmul.f32.gmra.mxu0 %v324
        %v3324 = vpop.f32.mrf.mxu0
        %v3325 = vadd.f32 0.0, %v3324
        %3326 = vmatmul.f32.gmra.mxu0 %v325
        %v3327 = vpop.f32.mrf.mxu0
        %v3328 = vadd.f32 0.0, %v3327
        %3329 = vmatmul.f32.gmra.mxu0 %v326
        %v3330 = vpop.f32.mrf.mxu0
        %v3331 = vadd.f32 0.0, %v3330
        %3332 = vmatmul.f32.gmra.mxu0 %v327
        %v3333 = vpop.f32.mrf.mxu0
        %v3334 = vadd.f32 0.0, %v3333
        %3335 = vmatmul.f32.gmra.mxu0 %v328
        %v3336 = vpop.f32.mrf.mxu0
        %v3337 = vadd.f32 0.0, %v3336
        %3338 = vmatmul.f32.gmra.mxu0 %v329
        %v3339 = vpop.f32.mrf.mxu0
        %v3340 = vadd.f32 0.0, %v3339
        %3341 = vmatmul.f32.gmra.mxu0 %v330
        %v3342 = vpop.f32.mrf.mxu0
        %v3343 = vadd.f32 0.0, %v3342
        %3344 = vmatmul.f32.gmra.mxu0 %v331
        %v3345 = vpop.f32.mrf.mxu0
        %v3346 = vadd.f32 0.0, %v3345
        %3347 = vmatmul.f32.gmra.mxu0 %v332
        %v3348 = vpop.f32.mrf.mxu0
        %v3349 = vadd.f32 0.0, %v3348
        %3350 = vmatmul.f32.gmra.mxu0 %v333
        %v3351 = vpop.f32.mrf.mxu0
        %v3352 = vadd.f32 0.0, %v3351
        %3353 = vdwg.mxu0
        %v3354 = vmul.f32 %v2954, %v3163
        %v3355 = vmul.f32 %v2957, %v3166
        %v3356 = vmul.f32 %v2960, %v3169
        %v3357 = vmul.f32 %v2963, %v3172
        %v3358 = vmul.f32 %v2966, %v3175
        %v3359 = vmul.f32 %v2969, %v3178
        %v3360 = vmul.f32 %v2972, %v3181
        %v3361 = vmul.f32 %v2975, %v3184
        %v3362 = vmul.f32 %v2978, %v3187
        %v3363 = vmul.f32 %v2981, %v3190
        %v3364 = vmul.f32 %v2984, %v3193
        %v3365 = vmul.f32 %v2987, %v3196
        %v3366 = vmul.f32 %v2990, %v3199
        %v3367 = vmul.f32 %v2993, %v3202
        %v3368 = vmul.f32 %v2996, %v3205
        %v3369 = vmul.f32 %v2999, %v3208
        %v3370 = vmul.f32 %v3002, %v3211
        %v3371 = vmul.f32 %v3005, %v3214
        %v3372 = vmul.f32 %v3008, %v3217
        %v3373 = vmul.f32 %v3011, %v3220
        %v3374 = vmul.f32 %v3014, %v3223
        %v3375 = vmul.f32 %v3017, %v3226
        %v3376 = vmul.f32 %v3020, %v3229
        %v3377 = vmul.f32 %v3023, %v3232
        %v3378 = vmul.f32 %v3026, %v3235
        %v3379 = vmul.f32 %v3029, %v3238
        %v3380 = vmul.f32 %v3032, %v3241
        %v3381 = vmul.f32 %v3035, %v3244
        %v3382 = vmul.f32 %v3038, %v3247
        %v3383 = vmul.f32 %v3041, %v3250
        %v3384 = vmul.f32 %v3044, %v3253
        %v3385 = vmul.f32 %v3047, %v3256
        %v3386 = vmul.f32 %v3050, %v3259
        %v3387 = vmul.f32 %v3053, %v3262
        %v3388 = vmul.f32 %v3056, %v3265
        %v3389 = vmul.f32 %v3059, %v3268
        %v3390 = vmul.f32 %v3062, %v3271
        %v3391 = vmul.f32 %v3065, %v3274
        %v3392 = vmul.f32 %v3068, %v3277
        %v3393 = vmul.f32 %v3071, %v3280
        %v3394 = vmul.f32 %v3074, %v3283
        %v3395 = vmul.f32 %v3077, %v3286
        %v3396 = vmul.f32 %v3080, %v3289
        %v3397 = vmul.f32 %v3083, %v3292
        %v3398 = vmul.f32 %v3086, %v3295
        %v3399 = vmul.f32 %v3089, %v3298
        %v3400 = vmul.f32 %v3092, %v3301
        %v3401 = vmul.f32 %v3095, %v3304
        %v3402 = vmul.f32 %v3098, %v3307
        %v3403 = vmul.f32 %v3101, %v3310
        %v3404 = vmul.f32 %v3104, %v3313
        %v3405 = vmul.f32 %v3107, %v3316
        %v3406 = vmul.f32 %v3110, %v3319
        %v3407 = vmul.f32 %v3113, %v3322
        %v3408 = vmul.f32 %v3116, %v3325
        %v3409 = vmul.f32 %v3119, %v3328
        %v3410 = vmul.f32 %v3122, %v3331
        %v3411 = vmul.f32 %v3125, %v3334
        %v3412 = vmul.f32 %v3128, %v3337
        %v3413 = vmul.f32 %v3131, %v3340
        %v3414 = vmul.f32 %v3134, %v3343
        %v3415 = vmul.f32 %v3137, %v3346
        %v3416 = vmul.f32 %v3140, %v3349
        %v3417 = vmul.f32 %v3143, %v3352
        %v3418 = vld [vmem:[#allocation7 + $0x180] sm:$0xff]
        %v3419 = vld [vmem:[#allocation7 + $0x188] sm:$0xff]
        %v3420 = vld [vmem:[#allocation7 + $0x190] sm:$0xff]
        %v3421 = vld [vmem:[#allocation7 + $0x198] sm:$0xff]
        %v3422 = vld [vmem:[#allocation7 + $0x1a0] sm:$0xff]
        %v3423 = vld [vmem:[#allocation7 + $0x1a8] sm:$0xff]
        %v3424 = vld [vmem:[#allocation7 + $0x1b0] sm:$0xff]
        %v3425 = vld [vmem:[#allocation7 + $0x1b8] sm:$0xff]
        %v3426 = vld [vmem:[#allocation7 + $0x1c0] sm:$0xff]
        %v3427 = vld [vmem:[#allocation7 + $0x1c8] sm:$0xff]
        %v3428 = vld [vmem:[#allocation7 + $0x1d0] sm:$0xff]
        %v3429 = vld [vmem:[#allocation7 + $0x1d8] sm:$0xff]
        %v3430 = vld [vmem:[#allocation7 + $0x1e0] sm:$0xff]
        %v3431 = vld [vmem:[#allocation7 + $0x1e8] sm:$0xff]
        %v3432 = vld [vmem:[#allocation7 + $0x1f0] sm:$0xff]
        %v3433 = vld [vmem:[#allocation7 + $0x1f8] sm:$0xff]
        %3434 = vmatpush.msra.mxu0 %v3433
        %3435 = vmatpush.msra.mxu0 %v3432
        %3436 = vmatpush.msra.mxu0 %v3431
        %3437 = vmatpush.msra.mxu0 %v3430
        %3438 = vmatpush.msra.mxu0 %v3429
        %3439 = vmatpush.msra.mxu0 %v3428
        %3440 = vmatpush.msra.mxu0 %v3427
        %3441 = vmatpush.msra.mxu0 %v3426
        %3442 = vmatpush.msra.mxu0 %v3425
        %3443 = vmatpush.msra.mxu0 %v3424
        %3444 = vmatpush.msra.mxu0 %v3423
        %3445 = vmatpush.msra.mxu0 %v3422
        %3446 = vmatpush.msra.mxu0 %v3421
        %3447 = vmatpush.msra.mxu0 %v3420
        %3448 = vmatpush.msra.mxu0 %v3419
        %3449 = vmatpush.msra.mxu0 %v3418
        %3450 = vmatmul.f32.gmra.mxu0 %v3354
        %v3451 = vpop.f32.mrf.mxu0
        %v3452 = vadd.f32 0.0, %v3451
        %3453 = vmatmul.f32.gmra.mxu0 %v3355
        %v3454 = vpop.f32.mrf.mxu0
        %v3455 = vadd.f32 0.0, %v3454
        %3456 = vmatmul.f32.gmra.mxu0 %v3356
        %v3457 = vpop.f32.mrf.mxu0
        %v3458 = vadd.f32 0.0, %v3457
        %3459 = vmatmul.f32.gmra.mxu0 %v3357
        %v3460 = vpop.f32.mrf.mxu0
        %v3461 = vadd.f32 0.0, %v3460
        %3462 = vmatmul.f32.gmra.mxu0 %v3358
        %v3463 = vpop.f32.mrf.mxu0
        %v3464 = vadd.f32 0.0, %v3463
        %3465 = vmatmul.f32.gmra.mxu0 %v3359
        %v3466 = vpop.f32.mrf.mxu0
        %v3467 = vadd.f32 0.0, %v3466
        %3468 = vmatmul.f32.gmra.mxu0 %v3360
        %v3469 = vpop.f32.mrf.mxu0
        %v3470 = vadd.f32 0.0, %v3469
        %3471 = vmatmul.f32.gmra.mxu0 %v3361
        %v3472 = vpop.f32.mrf.mxu0
        %v3473 = vadd.f32 0.0, %v3472
        %3474 = vmatmul.f32.gmra.mxu0 %v3362
        %v3475 = vpop.f32.mrf.mxu0
        %v3476 = vadd.f32 0.0, %v3475
        %3477 = vmatmul.f32.gmra.mxu0 %v3363
        %v3478 = vpop.f32.mrf.mxu0
        %v3479 = vadd.f32 0.0, %v3478
        %3480 = vmatmul.f32.gmra.mxu0 %v3364
        %v3481 = vpop.f32.mrf.mxu0
        %v3482 = vadd.f32 0.0, %v3481
        %3483 = vmatmul.f32.gmra.mxu0 %v3365
        %v3484 = vpop.f32.mrf.mxu0
        %v3485 = vadd.f32 0.0, %v3484
        %3486 = vmatmul.f32.gmra.mxu0 %v3366
        %v3487 = vpop.f32.mrf.mxu0
        %v3488 = vadd.f32 0.0, %v3487
        %3489 = vmatmul.f32.gmra.mxu0 %v3367
        %v3490 = vpop.f32.mrf.mxu0
        %v3491 = vadd.f32 0.0, %v3490
        %3492 = vmatmul.f32.gmra.mxu0 %v3368
        %v3493 = vpop.f32.mrf.mxu0
        %v3494 = vadd.f32 0.0, %v3493
        %3495 = vmatmul.f32.gmra.mxu0 %v3369
        %v3496 = vpop.f32.mrf.mxu0
        %v3497 = vadd.f32 0.0, %v3496
        %3498 = vmatmul.f32.gmra.mxu0 %v3370
        %v3499 = vpop.f32.mrf.mxu0
        %v3500 = vadd.f32 0.0, %v3499
        %3501 = vmatmul.f32.gmra.mxu0 %v3371
        %v3502 = vpop.f32.mrf.mxu0
        %v3503 = vadd.f32 0.0, %v3502
        %3504 = vmatmul.f32.gmra.mxu0 %v3372
        %v3505 = vpop.f32.mrf.mxu0
        %v3506 = vadd.f32 0.0, %v3505
        %3507 = vmatmul.f32.gmra.mxu0 %v3373
        %v3508 = vpop.f32.mrf.mxu0
        %v3509 = vadd.f32 0.0, %v3508
        %3510 = vmatmul.f32.gmra.mxu0 %v3374
        %v3511 = vpop.f32.mrf.mxu0
        %v3512 = vadd.f32 0.0, %v3511
        %3513 = vmatmul.f32.gmra.mxu0 %v3375
        %v3514 = vpop.f32.mrf.mxu0
        %v3515 = vadd.f32 0.0, %v3514
        %3516 = vmatmul.f32.gmra.mxu0 %v3376
        %v3517 = vpop.f32.mrf.mxu0
        %v3518 = vadd.f32 0.0, %v3517
        %3519 = vmatmul.f32.gmra.mxu0 %v3377
        %v3520 = vpop.f32.mrf.mxu0
        %v3521 = vadd.f32 0.0, %v3520
        %3522 = vmatmul.f32.gmra.mxu0 %v3378
        %v3523 = vpop.f32.mrf.mxu0
        %v3524 = vadd.f32 0.0, %v3523
        %3525 = vmatmul.f32.gmra.mxu0 %v3379
        %v3526 = vpop.f32.mrf.mxu0
        %v3527 = vadd.f32 0.0, %v3526
        %3528 = vmatmul.f32.gmra.mxu0 %v3380
        %v3529 = vpop.f32.mrf.mxu0
        %v3530 = vadd.f32 0.0, %v3529
        %3531 = vmatmul.f32.gmra.mxu0 %v3381
        %v3532 = vpop.f32.mrf.mxu0
        %v3533 = vadd.f32 0.0, %v3532
        %3534 = vmatmul.f32.gmra.mxu0 %v3382
        %v3535 = vpop.f32.mrf.mxu0
        %v3536 = vadd.f32 0.0, %v3535
        %3537 = vmatmul.f32.gmra.mxu0 %v3383
        %v3538 = vpop.f32.mrf.mxu0
        %v3539 = vadd.f32 0.0, %v3538
        %3540 = vmatmul.f32.gmra.mxu0 %v3384
        %v3541 = vpop.f32.mrf.mxu0
        %v3542 = vadd.f32 0.0, %v3541
        %3543 = vmatmul.f32.gmra.mxu0 %v3385
        %v3544 = vpop.f32.mrf.mxu0
        %v3545 = vadd.f32 0.0, %v3544
        %3546 = vmatmul.f32.gmra.mxu0 %v3386
        %v3547 = vpop.f32.mrf.mxu0
        %v3548 = vadd.f32 0.0, %v3547
        %3549 = vmatmul.f32.gmra.mxu0 %v3387
        %v3550 = vpop.f32.mrf.mxu0
        %v3551 = vadd.f32 0.0, %v3550
        %3552 = vmatmul.f32.gmra.mxu0 %v3388
        %v3553 = vpop.f32.mrf.mxu0
        %v3554 = vadd.f32 0.0, %v3553
        %3555 = vmatmul.f32.gmra.mxu0 %v3389
        %v3556 = vpop.f32.mrf.mxu0
        %v3557 = vadd.f32 0.0, %v3556
        %3558 = vmatmul.f32.gmra.mxu0 %v3390
        %v3559 = vpop.f32.mrf.mxu0
        %v3560 = vadd.f32 0.0, %v3559
        %3561 = vmatmul.f32.gmra.mxu0 %v3391
        %v3562 = vpop.f32.mrf.mxu0
        %v3563 = vadd.f32 0.0, %v3562
        %3564 = vmatmul.f32.gmra.mxu0 %v3392
        %v3565 = vpop.f32.mrf.mxu0
        %v3566 = vadd.f32 0.0, %v3565
        %3567 = vmatmul.f32.gmra.mxu0 %v3393
        %v3568 = vpop.f32.mrf.mxu0
        %v3569 = vadd.f32 0.0, %v3568
        %3570 = vmatmul.f32.gmra.mxu0 %v3394
        %v3571 = vpop.f32.mrf.mxu0
        %v3572 = vadd.f32 0.0, %v3571
        %3573 = vmatmul.f32.gmra.mxu0 %v3395
        %v3574 = vpop.f32.mrf.mxu0
        %v3575 = vadd.f32 0.0, %v3574
        %3576 = vmatmul.f32.gmra.mxu0 %v3396
        %v3577 = vpop.f32.mrf.mxu0
        %v3578 = vadd.f32 0.0, %v3577
        %3579 = vmatmul.f32.gmra.mxu0 %v3397
        %v3580 = vpop.f32.mrf.mxu0
        %v3581 = vadd.f32 0.0, %v3580
        %3582 = vmatmul.f32.gmra.mxu0 %v3398
        %v3583 = vpop.f32.mrf.mxu0
        %v3584 = vadd.f32 0.0, %v3583
        %3585 = vmatmul.f32.gmra.mxu0 %v3399
        %v3586 = vpop.f32.mrf.mxu0
        %v3587 = vadd.f32 0.0, %v3586
        %3588 = vmatmul.f32.gmra.mxu0 %v3400
        %v3589 = vpop.f32.mrf.mxu0
        %v3590 = vadd.f32 0.0, %v3589
        %3591 = vmatmul.f32.gmra.mxu0 %v3401
        %v3592 = vpop.f32.mrf.mxu0
        %v3593 = vadd.f32 0.0, %v3592
        %3594 = vmatmul.f32.gmra.mxu0 %v3402
        %v3595 = vpop.f32.mrf.mxu0
        %v3596 = vadd.f32 0.0, %v3595
        %3597 = vmatmul.f32.gmra.mxu0 %v3403
        %v3598 = vpop.f32.mrf.mxu0
        %v3599 = vadd.f32 0.0, %v3598
        %3600 = vmatmul.f32.gmra.mxu0 %v3404
        %v3601 = vpop.f32.mrf.mxu0
        %v3602 = vadd.f32 0.0, %v3601
        %3603 = vmatmul.f32.gmra.mxu0 %v3405
        %v3604 = vpop.f32.mrf.mxu0
        %v3605 = vadd.f32 0.0, %v3604
        %3606 = vmatmul.f32.gmra.mxu0 %v3406
        %v3607 = vpop.f32.mrf.mxu0
        %v3608 = vadd.f32 0.0, %v3607
        %3609 = vmatmul.f32.gmra.mxu0 %v3407
        %v3610 = vpop.f32.mrf.mxu0
        %v3611 = vadd.f32 0.0, %v3610
        %3612 = vmatmul.f32.gmra.mxu0 %v3408
        %v3613 = vpop.f32.mrf.mxu0
        %v3614 = vadd.f32 0.0, %v3613
        %3615 = vmatmul.f32.gmra.mxu0 %v3409
        %v3616 = vpop.f32.mrf.mxu0
        %v3617 = vadd.f32 0.0, %v3616
        %3618 = vmatmul.f32.gmra.mxu0 %v3410
        %v3619 = vpop.f32.mrf.mxu0
        %v3620 = vadd.f32 0.0, %v3619
        %3621 = vmatmul.f32.gmra.mxu0 %v3411
        %v3622 = vpop.f32.mrf.mxu0
        %v3623 = vadd.f32 0.0, %v3622
        %3624 = vmatmul.f32.gmra.mxu0 %v3412
        %v3625 = vpop.f32.mrf.mxu0
        %v3626 = vadd.f32 0.0, %v3625
        %3627 = vmatmul.f32.gmra.mxu0 %v3413
        %v3628 = vpop.f32.mrf.mxu0
        %v3629 = vadd.f32 0.0, %v3628
        %3630 = vmatmul.f32.gmra.mxu0 %v3414
        %v3631 = vpop.f32.mrf.mxu0
        %v3632 = vadd.f32 0.0, %v3631
        %3633 = vmatmul.f32.gmra.mxu0 %v3415
        %v3634 = vpop.f32.mrf.mxu0
        %v3635 = vadd.f32 0.0, %v3634
        %3636 = vmatmul.f32.gmra.mxu0 %v3416
        %v3637 = vpop.f32.mrf.mxu0
        %v3638 = vadd.f32 0.0, %v3637
        %3639 = vmatmul.f32.gmra.mxu0 %v3417
        %v3640 = vpop.f32.mrf.mxu0
        %v3641 = vadd.f32 0.0, %v3640
        %3642 = vdwg.mxu0
        %v3643 = vadd.f32 %v2840, %v3452
        %v3644 = vadd.f32 %v2841, %v3455
        %v3645 = vadd.f32 %v2842, %v3458
        %v3646 = vadd.f32 %v2843, %v3461
        %v3647 = vadd.f32 %v2844, %v3464
        %v3648 = vadd.f32 %v2845, %v3467
        %v3649 = vadd.f32 %v2846, %v3470
        %v3650 = vadd.f32 %v2847, %v3473
        %v3651 = vadd.f32 %v2848, %v3476
        %v3652 = vadd.f32 %v2849, %v3479
        %v3653 = vadd.f32 %v2850, %v3482
        %v3654 = vadd.f32 %v2851, %v3485
        %v3655 = vadd.f32 %v2852, %v3488
        %v3656 = vadd.f32 %v2853, %v3491
        %v3657 = vadd.f32 %v2854, %v3494
        %v3658 = vadd.f32 %v2855, %v3497
        %v3659 = vadd.f32 %v2856, %v3500
        %v3660 = vadd.f32 %v2857, %v3503
        %v3661 = vadd.f32 %v2858, %v3506
        %v3662 = vadd.f32 %v2859, %v3509
        %v3663 = vadd.f32 %v2860, %v3512
        %v3664 = vadd.f32 %v2861, %v3515
        %v3665 = vadd.f32 %v2862, %v3518
        %v3666 = vadd.f32 %v2863, %v3521
        %v3667 = vadd.f32 %v2864, %v3524
        %v3668 = vadd.f32 %v2865, %v3527
        %v3669 = vadd.f32 %v2866, %v3530
        %v3670 = vadd.f32 %v2867, %v3533
        %v3671 = vadd.f32 %v2868, %v3536
        %v3672 = vadd.f32 %v2869, %v3539
        %v3673 = vadd.f32 %v2870, %v3542
        %v3674 = vadd.f32 %v2871, %v3545
        %v3675 = vadd.f32 %v2872, %v3548
        %v3676 = vadd.f32 %v2873, %v3551
        %v3677 = vadd.f32 %v2874, %v3554
        %v3678 = vadd.f32 %v2875, %v3557
        %v3679 = vadd.f32 %v2876, %v3560
        %v3680 = vadd.f32 %v2877, %v3563
        %v3681 = vadd.f32 %v2878, %v3566
        %v3682 = vadd.f32 %v2879, %v3569
        %v3683 = vadd.f32 %v2880, %v3572
        %v3684 = vadd.f32 %v2881, %v3575
        %v3685 = vadd.f32 %v2882, %v3578
        %v3686 = vadd.f32 %v2883, %v3581
        %v3687 = vadd.f32 %v2884, %v3584
        %v3688 = vadd.f32 %v2885, %v3587
        %v3689 = vadd.f32 %v2886, %v3590
        %v3690 = vadd.f32 %v2887, %v3593
        %v3691 = vadd.f32 %v2888, %v3596
        %v3692 = vadd.f32 %v2889, %v3599
        %v3693 = vadd.f32 %v2890, %v3602
        %v3694 = vadd.f32 %v2891, %v3605
        %v3695 = vadd.f32 %v2892, %v3608
        %v3696 = vadd.f32 %v2893, %v3611
        %v3697 = vadd.f32 %v2894, %v3614
        %v3698 = vadd.f32 %v2895, %v3617
        %v3699 = vadd.f32 %v2896, %v3620
        %v3700 = vadd.f32 %v2897, %v3623
        %v3701 = vadd.f32 %v2898, %v3626
        %v3702 = vadd.f32 %v2899, %v3629
        %v3703 = vadd.f32 %v2900, %v3632
        %v3704 = vadd.f32 %v2901, %v3635
        %v3705 = vadd.f32 %v2902, %v3638
        %v3706 = vadd.f32 %v2903, %v3641
        %v3707 = vmax.f32 %v3643, 0.0
        %v3708 = vmax.f32 %v3644, 0.0
        %v3709 = vmax.f32 %v3645, 0.0
        %v3710 = vmax.f32 %v3646, 0.0
        %v3711 = vmax.f32 %v3647, 0.0
        %v3712 = vmax.f32 %v3648, 0.0
        %v3713 = vmax.f32 %v3649, 0.0
        %v3714 = vmax.f32 %v3650, 0.0
        %v3715 = vmax.f32 %v3651, 0.0
        %v3716 = vmax.f32 %v3652, 0.0
        %v3717 = vmax.f32 %v3653, 0.0
        %v3718 = vmax.f32 %v3654, 0.0
        %v3719 = vmax.f32 %v3655, 0.0
        %v3720 = vmax.f32 %v3656, 0.0
        %v3721 = vmax.f32 %v3657, 0.0
        %v3722 = vmax.f32 %v3658, 0.0
        %v3723 = vmax.f32 %v3659, 0.0
        %v3724 = vmax.f32 %v3660, 0.0
        %v3725 = vmax.f32 %v3661, 0.0
        %v3726 = vmax.f32 %v3662, 0.0
        %v3727 = vmax.f32 %v3663, 0.0
        %v3728 = vmax.f32 %v3664, 0.0
        %v3729 = vmax.f32 %v3665, 0.0
        %v3730 = vmax.f32 %v3666, 0.0
        %v3731 = vmax.f32 %v3667, 0.0
        %v3732 = vmax.f32 %v3668, 0.0
        %v3733 = vmax.f32 %v3669, 0.0
        %v3734 = vmax.f32 %v3670, 0.0
        %v3735 = vmax.f32 %v3671, 0.0
        %v3736 = vmax.f32 %v3672, 0.0
        %v3737 = vmax.f32 %v3673, 0.0
        %v3738 = vmax.f32 %v3674, 0.0
        %v3739 = vmax.f32 %v3675, 0.0
        %v3740 = vmax.f32 %v3676, 0.0
        %v3741 = vmax.f32 %v3677, 0.0
        %v3742 = vmax.f32 %v3678, 0.0
        %v3743 = vmax.f32 %v3679, 0.0
        %v3744 = vmax.f32 %v3680, 0.0
        %v3745 = vmax.f32 %v3681, 0.0
        %v3746 = vmax.f32 %v3682, 0.0
        %v3747 = vmax.f32 %v3683, 0.0
        %v3748 = vmax.f32 %v3684, 0.0
        %v3749 = vmax.f32 %v3685, 0.0
        %v3750 = vmax.f32 %v3686, 0.0
        %v3751 = vmax.f32 %v3687, 0.0
        %v3752 = vmax.f32 %v3688, 0.0
        %v3753 = vmax.f32 %v3689, 0.0
        %v3754 = vmax.f32 %v3690, 0.0
        %v3755 = vmax.f32 %v3691, 0.0
        %v3756 = vmax.f32 %v3692, 0.0
        %v3757 = vmax.f32 %v3693, 0.0
        %v3758 = vmax.f32 %v3694, 0.0
        %v3759 = vmax.f32 %v3695, 0.0
        %v3760 = vmax.f32 %v3696, 0.0
        %v3761 = vmax.f32 %v3697, 0.0
        %v3762 = vmax.f32 %v3698, 0.0
        %v3763 = vmax.f32 %v3699, 0.0
        %v3764 = vmax.f32 %v3700, 0.0
        %v3765 = vmax.f32 %v3701, 0.0
        %v3766 = vmax.f32 %v3702, 0.0
        %v3767 = vmax.f32 %v3703, 0.0
        %v3768 = vmax.f32 %v3704, 0.0
        %v3769 = vmax.f32 %v3705, 0.0
        %v3770 = vmax.f32 %v3706, 0.0
        %3771 = vst [vmem:[%s267] sm:$0xff] %v3707
        %3772 = vst [vmem:[%s267 + $0x8] sm:$0xff] %v3708
        %3773 = vst [vmem:[%s267 + $0x10] sm:$0xff] %v3709
        %3774 = vst [vmem:[%s267 + $0x18] sm:$0xff] %v3710
        %3775 = vst [vmem:[%s267 + $0x20] sm:$0xff] %v3711
        %3776 = vst [vmem:[%s267 + $0x28] sm:$0xff] %v3712
        %3777 = vst [vmem:[%s267 + $0x30] sm:$0xff] %v3713
        %3778 = vst [vmem:[%s267 + $0x38] sm:$0xff] %v3714
        %3779 = vst [vmem:[%s267 + $0x40] sm:$0xff] %v3715
        %3780 = vst [vmem:[%s267 + $0x48] sm:$0xff] %v3716
        %3781 = vst [vmem:[%s267 + $0x50] sm:$0xff] %v3717
        %3782 = vst [vmem:[%s267 + $0x58] sm:$0xff] %v3718
        %3783 = vst [vmem:[%s267 + $0x60] sm:$0xff] %v3719
        %3784 = vst [vmem:[%s267 + $0x68] sm:$0xff] %v3720
        %3785 = vst [vmem:[%s267 + $0x70] sm:$0xff] %v3721
        %3786 = vst [vmem:[%s267 + $0x78] sm:$0xff] %v3722
        %3787 = vst [vmem:[%s267 + $0x80] sm:$0xff] %v3723
        %3788 = vst [vmem:[%s267 + $0x88] sm:$0xff] %v3724
        %3789 = vst [vmem:[%s267 + $0x90] sm:$0xff] %v3725
        %3790 = vst [vmem:[%s267 + $0x98] sm:$0xff] %v3726
        %3791 = vst [vmem:[%s267 + $0xa0] sm:$0xff] %v3727
        %3792 = vst [vmem:[%s267 + $0xa8] sm:$0xff] %v3728
        %3793 = vst [vmem:[%s267 + $0xb0] sm:$0xff] %v3729
        %3794 = vst [vmem:[%s267 + $0xb8] sm:$0xff] %v3730
        %3795 = vst [vmem:[%s267 + $0xc0] sm:$0xff] %v3731
        %3796 = vst [vmem:[%s267 + $0xc8] sm:$0xff] %v3732
        %3797 = vst [vmem:[%s267 + $0xd0] sm:$0xff] %v3733
        %3798 = vst [vmem:[%s267 + $0xd8] sm:$0xff] %v3734
        %3799 = vst [vmem:[%s267 + $0xe0] sm:$0xff] %v3735
        %3800 = vst [vmem:[%s267 + $0xe8] sm:$0xff] %v3736
        %3801 = vst [vmem:[%s267 + $0xf0] sm:$0xff] %v3737
        %3802 = vst [vmem:[%s267 + $0xf8] sm:$0xff] %v3738
        %3803 = vst [vmem:[%s267 + $0x100] sm:$0xff] %v3739
        %3804 = vst [vmem:[%s267 + $0x108] sm:$0xff] %v3740
        %3805 = vst [vmem:[%s267 + $0x110] sm:$0xff] %v3741
        %3806 = vst [vmem:[%s267 + $0x118] sm:$0xff] %v3742
        %3807 = vst [vmem:[%s267 + $0x120] sm:$0xff] %v3743
        %3808 = vst [vmem:[%s267 + $0x128] sm:$0xff] %v3744
        %3809 = vst [vmem:[%s267 + $0x130] sm:$0xff] %v3745
        %3810 = vst [vmem:[%s267 + $0x138] sm:$0xff] %v3746
        %3811 = vst [vmem:[%s267 + $0x140] sm:$0xff] %v3747
        %3812 = vst [vmem:[%s267 + $0x148] sm:$0xff] %v3748
        %3813 = vst [vmem:[%s267 + $0x150] sm:$0xff] %v3749
        %3814 = vst [vmem:[%s267 + $0x158] sm:$0xff] %v3750
        %3815 = vst [vmem:[%s267 + $0x160] sm:$0xff] %v3751
        %3816 = vst [vmem:[%s267 + $0x168] sm:$0xff] %v3752
        %3817 = vst [vmem:[%s267 + $0x170] sm:$0xff] %v3753
        %3818 = vst [vmem:[%s267 + $0x178] sm:$0xff] %v3754
        %3819 = vst [vmem:[%s267 + $0x180] sm:$0xff] %v3755
        %3820 = vst [vmem:[%s267 + $0x188] sm:$0xff] %v3756
        %3821 = vst [vmem:[%s267 + $0x190] sm:$0xff] %v3757
        %3822 = vst [vmem:[%s267 + $0x198] sm:$0xff] %v3758
        %3823 = vst [vmem:[%s267 + $0x1a0] sm:$0xff] %v3759
        %3824 = vst [vmem:[%s267 + $0x1a8] sm:$0xff] %v3760
        %3825 = vst [vmem:[%s267 + $0x1b0] sm:$0xff] %v3761
        %3826 = vst [vmem:[%s267 + $0x1b8] sm:$0xff] %v3762
        %3827 = vst [vmem:[%s267 + $0x1c0] sm:$0xff] %v3763
        %3828 = vst [vmem:[%s267 + $0x1c8] sm:$0xff] %v3764
        %3829 = vst [vmem:[%s267 + $0x1d0] sm:$0xff] %v3765
        %3830 = vst [vmem:[%s267 + $0x1d8] sm:$0xff] %v3766
        %3831 = vst [vmem:[%s267 + $0x1e0] sm:$0xff] %v3767
        %3832 = vst [vmem:[%s267 + $0x1e8] sm:$0xff] %v3768
        %3833 = vst [vmem:[%s267 + $0x1f0] sm:$0xff] %v3769
        %3834 = vst [vmem:[%s267 + $0x1f8] sm:$0xff] %v3770
        %s3835 = sand.u32 %s120, 1
        %s3836 = scalar_lea.sflag [#allocation4], %s3835
        %s3837 = sand.u32 %s120, 1
        %s3838 = smul.addr %s3837, 512
        %s3839 = scalar_lea.vmem [#allocation10], %s3838
        // Predicated region
        $region53: #{tpu_custom_call.1} parent=35 // pred_check
          %p3840 = pneg %p130
        $region54: #{tpu_custom_call.1} parent=35 // pred_check_branch
          %3842 = sbr.rel (%p3840) target = $region56
        $region55: #{tpu_custom_call.1} parent=35 // pred_region
          %s3843 = smul.u32 64, %s23
          %3845 = vsyncadd %s3836, 0
          %s3846 = smul.addr %s3843, 8
          %s3847 = scalar_lea.hbm %s4, %s3846
          %s3848 = sshll.u32 %s3839, 4
          %s3849 = int_to_ptr.vmem [resolvable:$true] %s3848
          %s3850 = sshll.u32 %s3847, 4
          %s3851 = int_to_ptr.hbm [resolvable:$true] %s3850
          %3856 = dma.vmem_to_hbm [thread:$0]  %s3849, 8192, %s3851, %s3836, 128, 128, 8
        $region56: #{tpu_custom_call.1} parent=35 // pred_fallthru
          _
      $region36: #{tpu_custom_call.1} parent=5 // pred_fallthru
        _
      %p3857 = scmp.le.s32.totalorder 2, %s18
      // Predicated region
      $region57: #{tpu_custom_call.1} parent=5 // pred_check
        %p3858 = pneg %p3857
      $region58: #{tpu_custom_call.1} parent=5 // pred_check_branch
        %3860 = sbr.rel (%p3858) target = $region60
      $region59: #{tpu_custom_call.1} parent=5 // pred_region
        %s3861 = ssub.s32 %s18, 2
        // Predicated region
        $region61: #{tpu_custom_call.1} parent=59 // pred_check
          %p3862 = pneg %p136
        $region62: #{tpu_custom_call.1} parent=59 // pred_check_branch
          %3864 = sbr.rel (%p3862) target = $region64
        $region63: #{tpu_custom_call.1} parent=59 // pred_region
          %s3865 = sand.u32 %s121, 1
          %s3866 = scalar_lea.sflag [#allocation4], %s3865
          %s3867 = sand.u32 %s121, 1
          %s3868 = smul.addr %s3867, 512
          %s3869 = scalar_lea.vmem [#allocation10], %s3868
          %3871 = dma.done %s3866, 8192
        $region64: #{tpu_custom_call.1} parent=59 // pred_fallthru
          _
      $region60: #{tpu_custom_call.1} parent=5 // pred_fallthru
        _
    $region6: #{tpu_custom_call.1} parent=1 // loop_footer
      %s22 = sadd.s32 1, %s18
    $region7: #{tpu_custom_call.1} parent=1 // loop_footer_branch
      %17 = sbr.rel target = $region3
    $region8: #{tpu_custom_call.1} parent=1 // loop_exit
      _
    %3872 = vsyncpa [#allocation3], 1
    %s3873 = scalar_lea.sflag [#allocation3], 1
    %3874 = vsyncpa %s3873, 1
    %3875 = vsyncpa [#allocation6], 1
    %3876 = vsyncpa [#allocation9], 1
    %3877 = vsyncpa [#allocation4], 1
    %s3878 = scalar_lea.sflag [#allocation4], 1
    %3879 = vsyncpa %s3878, 1

</llo_original>
